<compile_context>
chip_gen: v7x
topology: tpu7x:2x2x1
jax: 0.10.0
libtpu: 0.0.40
codegen_flags: <defaults>
</compile_context>

<pallas_src>
import jax
import jax.numpy as jnp
from jax.experimental import pallas as pl
from jax.experimental.pallas import tpu as pltpu


def _round_up(x, m):
    return (x + m - 1) // m * m


# ----------------------------- Pallas kernels ------------------------------ #

def conv_relu_pool_kernel(p_ref, w_ref, o_ref):
    """Fused Conv2d(3x3, pad=1, no bias) + ReLU + MaxPool2d(2,2) on a row tile.

    p_ref: (4, Nt, K)    bf16 im2col patches, grouped by 2x2-pool quadrant
                         (rows ordered (b, i, j); cols ordered (kh, kw, cin)).
    w_ref: (K, Cout_p)   bf16 conv weight (Cout zero-padded to a lane multiple).
    o_ref: (Nt, Cout_p)  bf16 pooled activations for this row tile.
    """
    q, nt, k = p_ref.shape
    # One weight-stationary MXU pass over all 4 pool quadrants (M = 4*Nt).
    p = p_ref[...].reshape(q * nt, k)
    acc = jnp.dot(p, w_ref[...], preferred_element_type=jnp.float32)
    acc = jnp.maximum(acc, 0.0)                       # ReLU (f32)
    acc = acc.reshape(q, nt, acc.shape[-1])
    # 2x2 max pool == elementwise max over the 4 quadrants (f32), cast on store.
    pooled = jnp.maximum(jnp.maximum(acc[0], acc[1]),
                         jnp.maximum(acc[2], acc[3]))
    o_ref[...] = pooled.astype(o_ref.dtype)


def fc_kernel(x_ref, w_ref, b_ref, o_ref):
    """Linear layer tile: (Bt, F) @ (F, Out_p) + (1, Out_p); f32 accumulate."""
    o_ref[...] = (jnp.dot(x_ref[...], w_ref[...],
                          preferred_element_type=jnp.float32) + b_ref[...])


# ------------------------------ JAX glue ----------------------------------- #

def _pool_quadrant_patches(x_nhwc, dtype=jnp.bfloat16):
    """im2col for 3x3/pad=1 conv, rows grouped by 2x2-maxpool quadrant.

    Returns (4, B*Ho*Wo, 9*C) in `dtype` (bf16 for the MXU).
    """
    B, H, W, C = x_nhwc.shape
    Ho, Wo = H // 2, W // 2
    xp = jnp.pad(x_nhwc, ((0, 0), (1, 1), (1, 1), (0, 0)))
    quads = []
    for di in range(2):
        for dj in range(2):
            taps = []
            for kh in range(3):
                for kw in range(3):
                    sl = xp[:, di + kh: di + kh + 2 * Ho: 2,
                            dj + kw: dj + kw + 2 * Wo: 2, :]     # (B,Ho,Wo,C)
                    taps.append(sl)
            qd = jnp.stack(taps, axis=-2)                        # (B,Ho,Wo,9,C)
            quads.append(qd.reshape(B * Ho * Wo, 9 * C))
    return jnp.stack(quads, axis=0).astype(dtype)                # (4,N,9C)


def _pick_row_tile(N, block_n):
    """Row-tile size.

    Multiple of 64 so (a) 4*Nt is a multiple of the 256 MXU pass, (b) the
    bf16 (4,Nt,K)->(4*Nt,K) kernel reshape is layout-preserving.  For small N
    aim for an even 2-step grid (so v7x's 2nd TensorCore gets work)."""
    if N <= 64:
        return 64
    if N <= 2 * block_n:
        return _round_up((N + 1) // 2, 64)
    return block_n


def conv_relu_pool(x_nhwc, w_oihw, *, block_n=1024, lane=128):
    """One `layerN` block.  x: (B,H,W,Cin) live channels only, w: (Cout,Cin,3,3).

    Returns (B, H/2, W/2, Cout_p) bf16 with Cout zero-padded to a lane multiple
    (the pad channels are sliced off by the caller before the next matmul)."""
    B, H, W, Cin = x_nhwc.shape
    Cout, Cin_w, KH, KW = w_oihw.shape
    assert (KH, KW) == (3, 3) and H % 2 == 0 and W % 2 == 0
    assert Cin == Cin_w, (Cin, Cin_w)
    Ho, Wo = H // 2, W // 2
    N = B * Ho * Wo
    K = 9 * Cin

    patches = _pool_quadrant_patches(x_nhwc)                     # (4, N, K) bf16

    # (Cout,Cin,3,3) -> (K, Cout_p): pad Cout to a lane multiple so the kernel's
    # output stores are lane-dense (unmasked vst).
    wmat = jnp.transpose(w_oihw, (2, 3, 1, 0))                   # (3,3,Cin,Cout)
    Cout_p = _round_up(Cout, lane)
    wmat = jnp.pad(wmat, ((0, 0), (0, 0), (0, 0), (0, Cout_p - Cout)))
    wmat = wmat.reshape(K, Cout_p).astype(jnp.bfloat16)

    # Tile the pooled-pixel (row) axis; pad rows so the grid divides evenly.
    Nt = _pick_row_tile(N, block_n)
    Np = _round_up(N, Nt)
    if Np > N:
        patches = jnp.pad(patches, ((0, 0), (0, Np - N), (0, 0)))

    out = pl.pallas_call(
        conv_relu_pool_kernel,
        out_shape=jax.ShapeDtypeStruct((Np, Cout_p), jnp.bfloat16),
        grid=(Np // Nt,),
        in_specs=[
            pl.BlockSpec((4, Nt, K), lambda i: (0, i, 0)),        # patches tile
            pl.BlockSpec((K, Cout_p), lambda i: (0, 0)),          # weight resident
        ],
        out_specs=pl.BlockSpec((Nt, Cout_p), lambda i: (i, 0)),
        compiler_params=pltpu.CompilerParams(
            dimension_semantics=("parallel",)),
    )(patches, wmat)

    return out[:N].reshape(B, Ho, Wo, Cout_p)


def linear(x_feat, w_fo, b, *, block_b=256):
    """x_feat: (B, F) bf16; w_fo: (F, Out_p) bf16; b: (Out_p,) f32.

    Gridded over the batch axis so large B neither blows VMEM nor serializes
    on one core."""
    B, F = x_feat.shape
    Out = w_fo.shape[1]
    Bt = min(block_b, _round_up(B, 8))
    Bp = _round_up(B, Bt)
    if Bp > B:
        x_feat = jnp.pad(x_feat, ((0, Bp - B), (0, 0)))

    out = pl.pallas_call(
        fc_kernel,
        out_shape=jax.ShapeDtypeStruct((Bp, Out), jnp.float32),
        grid=(Bp // Bt,),
        in_specs=[
            pl.BlockSpec((Bt, F), lambda i: (i, 0)),
            pl.BlockSpec((F, Out), lambda i: (0, 0)),
            pl.BlockSpec((1, Out), lambda i: (0, 0)),
        ],
        out_specs=pl.BlockSpec((Bt, Out), lambda i: (i, 0)),
        compiler_params=pltpu.CompilerParams(
            dimension_semantics=("parallel",)),
    )(x_feat, w_fo, b.reshape(1, Out))
    return out[:B]


@jax.jit
def native_cnn_forward(x_nchw, params):
    """Forward pass equivalent to Native_CNN.forward (input NCHW, fp32)."""
    w1, w2, fcw, fcb = params
    B = x_nchw.shape[0]
    x = jnp.transpose(x_nchw, (0, 2, 3, 1))                 # NCHW -> NHWC

    h = conv_relu_pool(x, w1)                               # (B,14,14,128) bf16, 32 live
    # Slice the live channels so layer-2 K is 9*32=288, not 9*128.
    h = conv_relu_pool(h[..., :w1.shape[0]], w2)            # (B, 7, 7,128) bf16, 64 live

    # FC: PyTorch stores (Out, C*H*W) flattened in (c,h,w) order.  Permute its
    # columns to the kernel's (h,w,c) feature order (live channels only) and
    # pre-transpose to (F, Out_p) with the output dim padded to a lane multiple.
    Cout2 = w2.shape[0]
    Ho, Wo = h.shape[1], h.shape[2]
    F = Ho * Wo * Cout2
    Out = fcw.shape[0]
    Out_p = _round_up(Out, 128)
    w_fc = fcw.reshape(Out, Cout2, Ho, Wo)                  # (Out, C, H, W)
    w_fc = jnp.transpose(w_fc, (2, 3, 1, 0)).reshape(F, Out)  # (F, Out)
    w_fc = jnp.pad(w_fc, ((0, 0), (0, Out_p - Out))).astype(jnp.bfloat16)
    b_fc = jnp.pad(fcb, (0, Out_p - Out)).astype(jnp.float32)

    feat = h[..., :Cout2].reshape(B, F)                     # bf16, live channels
    out = linear(feat, w_fc, b_fc)                          # (B, Out_p) f32
    return out[:, :Out]                                     # (B, 10)


# -------------------------- params & reference ------------------------------ #

def init_params(key):
    k1, k2, k3, k4 = jax.random.split(key, 4)
    # Conv weights in PyTorch OIHW layout (bias=False in the module).
    w1 = jax.random.normal(k1, (32, 1, 3, 3), jnp.float32) * (1.0 / 3.0)
    w2 = jax.random.normal(k2, (64, 32, 3, 3), jnp.float32) / jnp.sqrt(32.0 * 9.0)
    fan_in, fan_out = 7 * 7 * 64, 10
    lim = float(jnp.sqrt(6.0 / (fan_in + fan_out)))         # xavier_uniform_
    fcw = jax.random.uniform(k3, (10, fan_in), jnp.float32, -lim, lim)
    bl = float(1.0 / jnp.sqrt(fan_in))
    fcb = jax.random.uniform(k4, (10,), jnp.float32, -bl, bl)
    return (w1, w2, fcw, fcb)


def reference_forward(x, params):
    """Pure-JAX/XLA f32 reference matching the PyTorch semantics."""
    w1, w2, fcw, fcb = params

    def conv(h, w):
        return jax.lax.conv_general_dilated(
            h, w, (1, 1), ((1, 1), (1, 1)),
            dimension_numbers=('NCHW', 'OIHW', 'NCHW'))

    def pool(h):
        return jax.lax.reduce_window(h, -jnp.inf, jax.lax.max,
                                     (1, 1, 2, 2), (1, 1, 2, 2), 'VALID')

    h = pool(jnp.maximum(conv(x, w1), 0.0))
    h = pool(jnp.maximum(conv(h, w2), 0.0))
    h = h.reshape(h.shape[0], -1)
    return h @ fcw.T + fcb


if __name__ == "__main__":
    key = jax.random.PRNGKey(0)
    kx, kp = jax.random.split(key)
    params = init_params(kp)
    # Spatial size is forced to 28x28 by fc = Linear(7*7*64, 10); batch=2.
    x = jax.random.normal(kx, (2, 1, 28, 28), jnp.float32)

    out = native_cnn_forward(x, params)
    out = jax.block_until_ready(out)

    ref = reference_forward(x, params)
    err = float(jnp.max(jnp.abs(out - ref)))
    assert out.shape == (2, 10), out.shape
    # bf16 matmul inputs + bf16 activation stores (f32 accumulate) vs f32 ref.
    assert jnp.allclose(out, ref, atol=5e-2, rtol=5e-2), err
    print("KERNEL_OK")
</pallas_src>

<mosaic_0001>
module attributes {stable_mosaic.version = 11 : i64} {
  func.func @conv_relu_pool_kernel(%arg0: i32, %arg1: memref<4x256x9xbf16, #tpu.memory_space<vmem>>, %arg2: memref<9x128xbf16, #tpu.memory_space<vmem>>, %arg3: memref<256x128xbf16, #tpu.memory_space<vmem>>) attributes {dimension_semantics = [#tpu.dimension_semantics<parallel>], iteration_bounds = array<i64: 2>, scalar_prefetch = 0 : i64, scratch_operands = 0 : i64, tpu.core_type = #tpu.core_type<tc>, window_params = [{transform_indices = @transform_0, window_bounds = array<i64: 4, 256, 9>}, {pipeline_mode = #tpu.pipeline_mode<synchronous>, transform_indices = @transform_1, window_bounds = array<i64: 9, 128>}, {transform_indices = @transform_2, window_bounds = array<i64: 256, 128>}]} {
    %c0 = arith.constant 0 : index
    %c0_0 = arith.constant 0 : index
    %c0_1 = arith.constant 0 : index
    %0 = vector.load %arg1[%c0, %c0_0, %c0_1] : memref<4x256x9xbf16, #tpu.memory_space<vmem>>, vector<4x256x9xbf16>
    %1 = vector.shape_cast %0 : vector<4x256x9xbf16> to vector<1024x9xbf16>
    %c0_2 = arith.constant 0 : index
    %c0_3 = arith.constant 0 : index
    %2 = vector.load %arg2[%c0_2, %c0_3] : memref<9x128xbf16, #tpu.memory_space<vmem>>, vector<9x128xbf16>
    %cst = arith.constant dense<0.000000e+00> : vector<1024x128xf32>
    %3 = tpu.matmul %1, %2, %cst {dimension_numbers = #tpu.dot_dimension_numbers<[1], [0], [0], [1], [0, 0, 1, 1], [], []>} : vector<1024x9xbf16>, vector<9x128xbf16>, vector<1024x128xf32> -> vector<1024x128xf32>
    %cst_4 = arith.constant 0.000000e+00 : f32
    %4 = vector.broadcast %cst_4 : f32 to vector<1024x128xf32>
    %5 = arith.maximumf %3, %4 : vector<1024x128xf32>
    %6 = vector.shape_cast %5 : vector<1024x128xf32> to vector<4x256x128xf32>
    %7 = vector.extract_strided_slice %6 {offsets = [0, 0, 0], sizes = [1, 256, 128], strides = [1, 1, 1]} : vector<4x256x128xf32> to vector<1x256x128xf32>
    %8 = vector.shape_cast %7 : vector<1x256x128xf32> to vector<256x128xf32>
    %9 = vector.extract_strided_slice %6 {offsets = [1, 0, 0], sizes = [1, 256, 128], strides = [1, 1, 1]} : vector<4x256x128xf32> to vector<1x256x128xf32>
    %10 = vector.shape_cast %9 : vector<1x256x128xf32> to vector<256x128xf32>
    %11 = arith.maximumf %8, %10 : vector<256x128xf32>
    %12 = vector.extract_strided_slice %6 {offsets = [2, 0, 0], sizes = [1, 256, 128], strides = [1, 1, 1]} : vector<4x256x128xf32> to vector<1x256x128xf32>
    %13 = vector.shape_cast %12 : vector<1x256x128xf32> to vector<256x128xf32>
    %14 = vector.extract_strided_slice %6 {offsets = [3, 0, 0], sizes = [1, 256, 128], strides = [1, 1, 1]} : vector<4x256x128xf32> to vector<1x256x128xf32>
    %15 = vector.shape_cast %14 : vector<1x256x128xf32> to vector<256x128xf32>
    %16 = arith.maximumf %13, %15 : vector<256x128xf32>
    %17 = arith.maximumf %11, %16 : vector<256x128xf32>
    %18 = arith.truncf %17 : vector<256x128xf32> to vector<256x128xbf16>
    %c0_5 = arith.constant 0 : index
    %c0_6 = arith.constant 0 : index
    %19 = vector.load %arg3[%c0_5, %c0_6] : memref<256x128xbf16, #tpu.memory_space<vmem>>, vector<256x128xbf16>
    tpu.vector_store %arg3[%c0_5, %c0_6], %18 {strides = array<i32>} : memref<256x128xbf16, #tpu.memory_space<vmem>>, vector<256x128xbf16>,
    return
  }
  func.func @transform_0(%arg0: i32) -> (i32, i32, i32) {
    %c0_i32 = arith.constant 0 : i32
    %c0_i32_0 = arith.constant 0 : i32
    %c0_i32_1 = arith.constant 0 : i32
    return %c0_i32, %arg0, %c0_i32_0 : i32, i32, i32
  }
  func.func @transform_1(%arg0: i32) -> (i32, i32) {
    %c0_i32 = arith.constant 0 : i32
    %c0_i32_0 = arith.constant 0 : i32
    %c0_i32_1 = arith.constant 0 : i32
    return %c0_i32, %c0_i32_0 : i32, i32
  }
  func.func @transform_2(%arg0: i32) -> (i32, i32) {
    %c0_i32 = arith.constant 0 : i32
    %c0_i32_0 = arith.constant 0 : i32
    return %arg0, %c0_i32 : i32, i32
  }
}

module attributes {stable_mosaic.version = 11 : i64} {
  func.func @conv_relu_pool_kernel(%arg0: i32, %arg1: memref<4x64x288xbf16, #tpu.memory_space<vmem>>, %arg2: memref<288x128xbf16, #tpu.memory_space<vmem>>, %arg3: memref<64x128xbf16, #tpu.memory_space<vmem>>) attributes {dimension_semantics = [#tpu.dimension_semantics<parallel>], iteration_bounds = array<i64: 2>, scalar_prefetch = 0 : i64, scratch_operands = 0 : i64, tpu.core_type = #tpu.core_type<tc>, window_params = [{transform_indices = @transform_0, window_bounds = array<i64: 4, 64, 288>}, {pipeline_mode = #tpu.pipeline_mode<synchronous>, transform_indices = @transform_1, window_bounds = array<i64: 288, 128>}, {transform_indices = @transform_2, window_bounds = array<i64: 64, 128>}]} {
    %c0 = arith.constant 0 : index
    %c0_0 = arith.constant 0 : index
    %c0_1 = arith.constant 0 : index
    %0 = vector.load %arg1[%c0, %c0_0, %c0_1] : memref<4x64x288xbf16, #tpu.memory_space<vmem>>, vector<4x64x288xbf16>
    %1 = vector.shape_cast %0 : vector<4x64x288xbf16> to vector<256x288xbf16>
    %c0_2 = arith.constant 0 : index
    %c0_3 = arith.constant 0 : index
    %2 = vector.load %arg2[%c0_2, %c0_3] : memref<288x128xbf16, #tpu.memory_space<vmem>>, vector<288x128xbf16>
    %cst = arith.constant dense<0.000000e+00> : vector<256x128xf32>
    %3 = tpu.matmul %1, %2, %cst {dimension_numbers = #tpu.dot_dimension_numbers<[1], [0], [0], [1], [0, 0, 1, 1], [], []>} : vector<256x288xbf16>, vector<288x128xbf16>, vector<256x128xf32> -> vector<256x128xf32>
    %cst_4 = arith.constant 0.000000e+00 : f32
    %4 = vector.broadcast %cst_4 : f32 to vector<256x128xf32>
    %5 = arith.maximumf %3, %4 : vector<256x128xf32>
    %6 = vector.shape_cast %5 : vector<256x128xf32> to vector<4x64x128xf32>
    %7 = vector.extract_strided_slice %6 {offsets = [0, 0, 0], sizes = [1, 64, 128], strides = [1, 1, 1]} : vector<4x64x128xf32> to vector<1x64x128xf32>
    %8 = vector.shape_cast %7 : vector<1x64x128xf32> to vector<64x128xf32>
    %9 = vector.extract_strided_slice %6 {offsets = [1, 0, 0], sizes = [1, 64, 128], strides = [1, 1, 1]} : vector<4x64x128xf32> to vector<1x64x128xf32>
    %10 = vector.shape_cast %9 : vector<1x64x128xf32> to vector<64x128xf32>
    %11 = arith.maximumf %8, %10 : vector<64x128xf32>
    %12 = vector.extract_strided_slice %6 {offsets = [2, 0, 0], sizes = [1, 64, 128], strides = [1, 1, 1]} : vector<4x64x128xf32> to vector<1x64x128xf32>
    %13 = vector.shape_cast %12 : vector<1x64x128xf32> to vector<64x128xf32>
    %14 = vector.extract_strided_slice %6 {offsets = [3, 0, 0], sizes = [1, 64, 128], strides = [1, 1, 1]} : vector<4x64x128xf32> to vector<1x64x128xf32>
    %15 = vector.shape_cast %14 : vector<1x64x128xf32> to vector<64x128xf32>
    %16 = arith.maximumf %13, %15 : vector<64x128xf32>
    %17 = arith.maximumf %11, %16 : vector<64x128xf32>
    %18 = arith.truncf %17 : vector<64x128xf32> to vector<64x128xbf16>
    %c0_5 = arith.constant 0 : index
    %c0_6 = arith.constant 0 : index
    %19 = vector.load %arg3[%c0_5, %c0_6] : memref<64x128xbf16, #tpu.memory_space<vmem>>, vector<64x128xbf16>
    tpu.vector_store %arg3[%c0_5, %c0_6], %18 {strides = array<i32>} : memref<64x128xbf16, #tpu.memory_space<vmem>>, vector<64x128xbf16>,
    return
  }
  func.func @transform_0(%arg0: i32) -> (i32, i32, i32) {
    %c0_i32 = arith.constant 0 : i32
    %c0_i32_0 = arith.constant 0 : i32
    %c0_i32_1 = arith.constant 0 : i32
    return %c0_i32, %arg0, %c0_i32_0 : i32, i32, i32
  }
  func.func @transform_1(%arg0: i32) -> (i32, i32) {
    %c0_i32 = arith.constant 0 : i32
    %c0_i32_0 = arith.constant 0 : i32
    %c0_i32_1 = arith.constant 0 : i32
    return %c0_i32, %c0_i32_0 : i32, i32
  }
  func.func @transform_2(%arg0: i32) -> (i32, i32) {
    %c0_i32 = arith.constant 0 : i32
    %c0_i32_0 = arith.constant 0 : i32
    return %arg0, %c0_i32 : i32, i32
  }
}

module attributes {stable_mosaic.version = 11 : i64} {
  func.func @fc_kernel(%arg0: i32, %arg1: memref<8x3136xbf16, #tpu.memory_space<vmem>>, %arg2: memref<3136x128xbf16, #tpu.memory_space<vmem>>, %arg3: memref<1x128xf32, #tpu.memory_space<vmem>>, %arg4: memref<8x128xf32, #tpu.memory_space<vmem>>) attributes {dimension_semantics = [#tpu.dimension_semantics<parallel>], iteration_bounds = array<i64: 1>, scalar_prefetch = 0 : i64, scratch_operands = 0 : i64, tpu.core_type = #tpu.core_type<tc>, window_params = [{transform_indices = @transform_0, window_bounds = array<i64: 8, 3136>}, {pipeline_mode = #tpu.pipeline_mode<synchronous>, transform_indices = @transform_1, window_bounds = array<i64: 3136, 128>}, {pipeline_mode = #tpu.pipeline_mode<synchronous>, transform_indices = @transform_2, window_bounds = array<i64: 1, 128>}, {transform_indices = @transform_3, window_bounds = array<i64: 8, 128>}]} {
    %c0 = arith.constant 0 : index
    %c0_0 = arith.constant 0 : index
    %0 = vector.load %arg1[%c0, %c0_0] : memref<8x3136xbf16, #tpu.memory_space<vmem>>, vector<8x3136xbf16>
    %c0_1 = arith.constant 0 : index
    %c0_2 = arith.constant 0 : index
    %1 = vector.load %arg2[%c0_1, %c0_2] : memref<3136x128xbf16, #tpu.memory_space<vmem>>, vector<3136x128xbf16>
    %cst = arith.constant dense<0.000000e+00> : vector<8x128xf32>
    %2 = tpu.matmul %0, %1, %cst {dimension_numbers = #tpu.dot_dimension_numbers<[1], [0], [0], [1], [0, 0, 1, 1], [], []>} : vector<8x3136xbf16>, vector<3136x128xbf16>, vector<8x128xf32> -> vector<8x128xf32>
    %c0_3 = arith.constant 0 : index
    %c0_4 = arith.constant 0 : index
    %3 = vector.load %arg3[%c0_3, %c0_4] : memref<1x128xf32, #tpu.memory_space<vmem>>, vector<1x128xf32>
    %4 = vector.broadcast %3 : vector<1x128xf32> to vector<8x128xf32>
    %5 = arith.addf %2, %4 : vector<8x128xf32>
    %c0_5 = arith.constant 0 : index
    %c0_6 = arith.constant 0 : index
    %6 = vector.load %arg4[%c0_5, %c0_6] : memref<8x128xf32, #tpu.memory_space<vmem>>, vector<8x128xf32>
    tpu.vector_store %arg4[%c0_5, %c0_6], %5 {strides = array<i32>} : memref<8x128xf32, #tpu.memory_space<vmem>>, vector<8x128xf32>,
    return
  }
  func.func @transform_0(%arg0: i32) -> (i32, i32) {
    %c0_i32 = arith.constant 0 : i32
    %c0_i32_0 = arith.constant 0 : i32
    return %arg0, %c0_i32 : i32, i32
  }
  func.func @transform_1(%arg0: i32) -> (i32, i32) {
    %c0_i32 = arith.constant 0 : i32
    %c0_i32_0 = arith.constant 0 : i32
    %c0_i32_1 = arith.constant 0 : i32
    return %c0_i32, %c0_i32_0 : i32, i32
  }
  func.func @transform_2(%arg0: i32) -> (i32, i32) {
    %c0_i32 = arith.constant 0 : i32
    %c0_i32_0 = arith.constant 0 : i32
    %c0_i32_1 = arith.constant 0 : i32
    return %c0_i32, %c0_i32_0 : i32, i32
  }
  func.func @transform_3(%arg0: i32) -> (i32, i32) {
    %c0_i32 = arith.constant 0 : i32
    %c0_i32_0 = arith.constant 0 : i32
    return %arg0, %c0_i32 : i32, i32
  }
}

</mosaic_0001>

<llo_original>
// kernel: native_cnn_forward.3
$region0: #{native_cnn_forward.3}
  #allocation0 [shape = 'u32[]', space=smem, size = 0x4, offset = 0x4, fixed_abs, tag = 'smem constant byte address 0x4 - core index']
  #allocation1 [shape = 'u32[144,128]{1,0:T(1,128)}', space=vmem, size = 0x12000, scoped, tag = 'internal scratch']
  %s0 = inlined_call_operand.vmem [shape: bf16[4,512,9], index: 0, kind: input, shape index: {}]
  %s1 = inlined_call_operand.vmem [shape: bf16[9,128], index: 1, kind: input, shape index: {}]
  %s2 = inlined_call_operand.vmem [shape: bf16[512,128], index: 2, kind: output, shape index: {}]
  %s3 = sld [smem:[#allocation0]]
  $region82: #{native_cnn_forward.3} parent=0
    _
  %s5 = ssub.s32 1, %s3
  %s6 = scalar_select 0, %s5, %s3
  $region1: #{native_cnn_forward.3} parent=0
    #allocation2 [shape = 'u8[524288]{0}', space=vmem, size = 0x80000, scoped, tag = 'input window, operand 0']
    loop: start=0, step=1, limit=4
    $region2: #{native_cnn_forward.3} parent=1 // loop_pre_header
      _
    $region3: #{native_cnn_forward.3} parent=1 // loop_header
      %s8 = sphi 0, %s12
      %p9 = scmp.ge.s32.totalorder %s8, 4
      %s18 = sphi 0, %s20
      %s21 = sphi 0, %s18
      %s22 = sphi 0, %s21
      %s38 = sphi 0, %s22
      %s42 = sphi 0, %s42
      %s44 = sphi 0, %s42
      %s45 = sphi 0, %s44
      %s59 = sphi 0, %s45
      %s65 = sphi 0, %s67
      %s68 = sphi 0, %s65
      %s69 = sphi 0, %s68
      %s85 = sphi 0, %s69
    $region4: #{native_cnn_forward.3} parent=1 // loop_header_branch
      %11 = sbr.rel (%p9) target = $region8
    $region5: #{native_cnn_forward.3} parent=1 // loop_body
      %s13 = ssub.s32 %s8, 1
      %s14 = ssub.s32 %s8, 2
      %s15 = sadd.s32 %s8, 1
      %s16 = ssub.s32 %s8, %s15
      %p17 = scmp.eq.s32.totalorder %s16, 0
      %s19 = sadd.s32 %s18, 1
      %s20 = scalar_select %p17, %s18, %s19
      %p23 = pneg %p17
      %p24 = scmp.eq.s32.totalorder %s8, 1
      %p25 = por %p23, %p24
      %p26 = scmp.ne.s32.totalorder %s18, %s21
      %p27 = scmp.eq.s32.totalorder %s8, 0
      %p28 = por %p26, %p27
      %p29 = scmp.ne.s32.totalorder %s18, %s21
      %p30 = scmp.eq.s32.totalorder %s13, 1
      %p31 = por %p29, %p30
      %p32 = scmp.ne.s32.totalorder %s21, %s22
      %p33 = scmp.eq.s32.totalorder %s13, 0
      %p34 = por %p32, %p33
      %p35 = scmp.ne.s32.totalorder %s21, %s22
      %p36 = scmp.eq.s32.totalorder %s14, 1
      %p37 = por %p35, %p36
      %p39 = scmp.ne.s32.totalorder %s22, %s38
      %p40 = scmp.eq.s32.totalorder %s14, 0
      %p41 = por %p39, %p40
      %s43 = sadd.s32 %s42, 1
      %p46 = scmp.eq.s32.totalorder %s8, 1
      %p47 = scmp.ne.s32.totalorder %s42, %s44
      %p48 = scmp.eq.s32.totalorder %s8, 0
      %p49 = por %p47, %p48
      %p50 = scmp.ne.s32.totalorder %s42, %s44
      %p51 = scmp.eq.s32.totalorder %s13, 1
      %p52 = por %p50, %p51
      %p53 = scmp.ne.s32.totalorder %s44, %s45
      %p54 = scmp.eq.s32.totalorder %s13, 0
      %p55 = por %p53, %p54
      %p56 = scmp.ne.s32.totalorder %s44, %s45
      %p57 = scmp.eq.s32.totalorder %s14, 1
      %p58 = por %p56, %p57
      %p60 = scmp.ne.s32.totalorder %s45, %s59
      %p61 = scmp.eq.s32.totalorder %s14, 0
      %p62 = por %p60, %p61
      %s63 = ssub.s32 %s8, %s15
      %p64 = scmp.eq.s32.totalorder %s63, 0
      %s66 = sadd.s32 %s65, 1
      %s67 = scalar_select %p64, %s65, %s66
      %p70 = pneg %p64
      %p71 = scmp.eq.s32.totalorder %s8, 1
      %p72 = por %p70, %p71
      %p73 = scmp.ne.s32.totalorder %s65, %s68
      %p74 = scmp.eq.s32.totalorder %s8, 0
      %p75 = por %p73, %p74
      %p76 = scmp.ne.s32.totalorder %s65, %s68
      %p77 = scmp.eq.s32.totalorder %s13, 1
      %p78 = por %p76, %p77
      %p79 = scmp.ne.s32.totalorder %s68, %s69
      %p80 = scmp.eq.s32.totalorder %s13, 0
      %p81 = por %p79, %p80
      %p82 = scmp.ne.s32.totalorder %s68, %s69
      %p83 = scmp.eq.s32.totalorder %s14, 1
      %p84 = por %p82, %p83
      %p86 = scmp.ne.s32.totalorder %s69, %s85
      %p87 = scmp.eq.s32.totalorder %s14, 0
      %p88 = por %p86, %p87
      %p89 = scmp.le.s32.totalorder 1, %s8
      %p90 = scmp.lt.s32.totalorder %s8, 3
      %p91 = pnand %p89, %p90
      %p92 = pneg %p91
      // Predicated region
      $region9: #{native_cnn_forward.3} parent=5 // pred_check
        _
      $region10: #{native_cnn_forward.3} parent=5 // pred_check_branch
        %94 = sbr.rel (%p91) target = $region12
      $region11: #{native_cnn_forward.3} parent=5 // pred_region
        %s95 = ssub.s32 %s8, 1
        // Predicated region
        $region13: #{native_cnn_forward.3} parent=11 // pred_check
          %p96 = pneg %p55
        $region14: #{native_cnn_forward.3} parent=11 // pred_check_branch
          %98 = sbr.rel (%p96) target = $region16
        $region15: #{native_cnn_forward.3} parent=11 // pred_region
          _
        $region16: #{native_cnn_forward.3} parent=11 // pred_fallthru
          _
      $region12: #{native_cnn_forward.3} parent=5 // pred_fallthru
        _
      %p99 = scmp.lt.s32.totalorder %s8, 2
      // Predicated region
      $region17: #{native_cnn_forward.3} parent=5 // pred_check
        %p100 = pneg %p99
      $region18: #{native_cnn_forward.3} parent=5 // pred_check_branch
        %102 = sbr.rel (%p100) target = $region20
      $region19: #{native_cnn_forward.3} parent=5 // pred_region
        // Predicated region
        $region21: #{native_cnn_forward.3} parent=19 // pred_check
          %p103 = pneg %p28
        $region22: #{native_cnn_forward.3} parent=19 // pred_check_branch
          %105 = sbr.rel (%p103) target = $region24
        $region23: #{native_cnn_forward.3} parent=19 // pred_region
          %s106 = sand.u32 %s18, 1
          %s107 = sand.u32 %s18, 1
          %s108 = smul.addr %s107, 512
          %s109 = scalar_lea.vmem [#allocation2], %s108
          %s110 = smul.u32 32, %s8
          %s111 = smul.addr %s110, 4
          %s112 = scalar_lea.vmem %s0, %s111
          // Predicated region
          $region25: #{native_cnn_forward.3} parent=23 // pred_check
            _
          $region26: #{native_cnn_forward.3} parent=23 // pred_check_branch
            %114 = sbr.rel (0) target = $region28
          $region27: #{native_cnn_forward.3} parent=23 // pred_region
            // Predicated region
            $region29: #{native_cnn_forward.3} parent=27 // pred_check
              _
            $region30: #{native_cnn_forward.3} parent=27 // pred_check_branch
              %116 = sbr.rel target = $region32
            $region31: #{native_cnn_forward.3} parent=27 // pred_region
              // Predicated region
              $region44: #{native_cnn_forward.3} parent=31 // pred_check
                _
              $region45: #{native_cnn_forward.3} parent=31 // pred_check_branch
                %385 = sbr.rel (0) target = $region47
              $region46: #{native_cnn_forward.3} parent=31 // pred_region
                loop: start=0, step=1, limit=1
                $region48: #{native_cnn_forward.3} parent=46 // loop_pre_header
                  _
                $region49: #{native_cnn_forward.3} parent=46 // loop_header
                  %s387 = sphi 0, %s391
                  %p388 = scmp.ge.s32.totalorder %s387, 1
                  %s392 = sphi %s112, %s112
                  %s393 = sphi %s109, %s109
                $region50: #{native_cnn_forward.3} parent=46 // loop_header_branch
                  %390 = sbr.rel (%p388) target = $region54
                $region51: #{native_cnn_forward.3} parent=46 // loop_body
                  _
                $region52: #{native_cnn_forward.3} parent=46 // loop_footer
                  %s391 = sadd.s32 1, %s387
                $region53: #{native_cnn_forward.3} parent=46 // loop_footer_branch
                  %386 = sbr.rel target = $region49
                $region54: #{native_cnn_forward.3} parent=46 // loop_exit
                  _
                loop: start=0, step=1, limit=1
                $region55: #{native_cnn_forward.3} parent=46 // loop_pre_header
                  _
                $region56: #{native_cnn_forward.3} parent=46 // loop_header
                  %s396 = sphi 0, %s400
                  %p397 = scmp.ge.s32.totalorder %s396, 1
                  %s401 = sphi %s112, %s112
                  %s402 = sphi %s109, %s109
                $region57: #{native_cnn_forward.3} parent=46 // loop_header_branch
                  %399 = sbr.rel (%p397) target = $region61
                $region58: #{native_cnn_forward.3} parent=46 // loop_body
                  %v403 = vld [vmem:[%s401] sm:$0xf]
                  %404 = vst [vmem:[%s402] sm:$0xf] %v403
                  %v405 = vld [vmem:[%s401 + $0x4] sm:$0xf]
                  %406 = vst [vmem:[%s402 + $0x4] sm:$0xf] %v405
                  %v407 = vld [vmem:[%s401 + $0x8] sm:$0xf]
                  %408 = vst [vmem:[%s402 + $0x8] sm:$0xf] %v407
                  %v409 = vld [vmem:[%s401 + $0xc] sm:$0xf]
                  %410 = vst [vmem:[%s402 + $0xc] sm:$0xf] %v409
                  %v411 = vld [vmem:[%s401 + $0x10] sm:$0xf]
                  %412 = vst [vmem:[%s402 + $0x10] sm:$0xf] %v411
                  %v413 = vld [vmem:[%s401 + $0x14] sm:$0xf]
                  %414 = vst [vmem:[%s402 + $0x14] sm:$0xf] %v413
                  %v415 = vld [vmem:[%s401 + $0x18] sm:$0xf]
                  %416 = vst [vmem:[%s402 + $0x18] sm:$0xf] %v415
                  %v417 = vld [vmem:[%s401 + $0x1c] sm:$0xf]
                  %418 = vst [vmem:[%s402 + $0x1c] sm:$0xf] %v417
                  %v419 = vld [vmem:[%s401 + $0x20] sm:$0xf]
                  %420 = vst [vmem:[%s402 + $0x20] sm:$0xf] %v419
                  %v421 = vld [vmem:[%s401 + $0x24] sm:$0xf]
                  %422 = vst [vmem:[%s402 + $0x24] sm:$0xf] %v421
                  %v423 = vld [vmem:[%s401 + $0x28] sm:$0xf]
                  %424 = vst [vmem:[%s402 + $0x28] sm:$0xf] %v423
                  %v425 = vld [vmem:[%s401 + $0x2c] sm:$0xf]
                  %426 = vst [vmem:[%s402 + $0x2c] sm:$0xf] %v425
                  %v427 = vld [vmem:[%s401 + $0x30] sm:$0xf]
                  %428 = vst [vmem:[%s402 + $0x30] sm:$0xf] %v427
                  %v429 = vld [vmem:[%s401 + $0x34] sm:$0xf]
                  %430 = vst [vmem:[%s402 + $0x34] sm:$0xf] %v429
                  %v431 = vld [vmem:[%s401 + $0x38] sm:$0xf]
                  %432 = vst [vmem:[%s402 + $0x38] sm:$0xf] %v431
                  %v433 = vld [vmem:[%s401 + $0x3c] sm:$0xf]
                  %434 = vst [vmem:[%s402 + $0x3c] sm:$0xf] %v433
                  %v435 = vld [vmem:[%s401 + $0x40] sm:$0xf]
                  %436 = vst [vmem:[%s402 + $0x40] sm:$0xf] %v435
                  %v437 = vld [vmem:[%s401 + $0x44] sm:$0xf]
                  %438 = vst [vmem:[%s402 + $0x44] sm:$0xf] %v437
                  %v439 = vld [vmem:[%s401 + $0x48] sm:$0xf]
                  %440 = vst [vmem:[%s402 + $0x48] sm:$0xf] %v439
                  %v441 = vld [vmem:[%s401 + $0x4c] sm:$0xf]
                  %442 = vst [vmem:[%s402 + $0x4c] sm:$0xf] %v441
                  %v443 = vld [vmem:[%s401 + $0x50] sm:$0xf]
                  %444 = vst [vmem:[%s402 + $0x50] sm:$0xf] %v443
                  %v445 = vld [vmem:[%s401 + $0x54] sm:$0xf]
                  %446 = vst [vmem:[%s402 + $0x54] sm:$0xf] %v445
                  %v447 = vld [vmem:[%s401 + $0x58] sm:$0xf]
                  %448 = vst [vmem:[%s402 + $0x58] sm:$0xf] %v447
                  %v449 = vld [vmem:[%s401 + $0x5c] sm:$0xf]
                  %450 = vst [vmem:[%s402 + $0x5c] sm:$0xf] %v449
                  %v451 = vld [vmem:[%s401 + $0x60] sm:$0xf]
                  %452 = vst [vmem:[%s402 + $0x60] sm:$0xf] %v451
                  %v453 = vld [vmem:[%s401 + $0x64] sm:$0xf]
                  %454 = vst [vmem:[%s402 + $0x64] sm:$0xf] %v453
                  %v455 = vld [vmem:[%s401 + $0x68] sm:$0xf]
                  %456 = vst [vmem:[%s402 + $0x68] sm:$0xf] %v455
                  %v457 = vld [vmem:[%s401 + $0x6c] sm:$0xf]
                  %458 = vst [vmem:[%s402 + $0x6c] sm:$0xf] %v457
                  %v459 = vld [vmem:[%s401 + $0x70] sm:$0xf]
                  %460 = vst [vmem:[%s402 + $0x70] sm:$0xf] %v459
                  %v461 = vld [vmem:[%s401 + $0x74] sm:$0xf]
                  %462 = vst [vmem:[%s402 + $0x74] sm:$0xf] %v461
                  %v463 = vld [vmem:[%s401 + $0x78] sm:$0xf]
                  %464 = vst [vmem:[%s402 + $0x78] sm:$0xf] %v463
                  %v465 = vld [vmem:[%s401 + $0x7c] sm:$0xf]
                  %466 = vst [vmem:[%s402 + $0x7c] sm:$0xf] %v465
                  %v467 = vld [vmem:[%s401 + $0x100] sm:$0xf]
                  %468 = vst [vmem:[%s402 + $0x80] sm:$0xf] %v467
                  %v469 = vld [vmem:[%s401 + $0x104] sm:$0xf]
                  %470 = vst [vmem:[%s402 + $0x84] sm:$0xf] %v469
                  %v471 = vld [vmem:[%s401 + $0x108] sm:$0xf]
                  %472 = vst [vmem:[%s402 + $0x88] sm:$0xf] %v471
                  %v473 = vld [vmem:[%s401 + $0x10c] sm:$0xf]
                  %474 = vst [vmem:[%s402 + $0x8c] sm:$0xf] %v473
                  %v475 = vld [vmem:[%s401 + $0x110] sm:$0xf]
                  %476 = vst [vmem:[%s402 + $0x90] sm:$0xf] %v475
                  %v477 = vld [vmem:[%s401 + $0x114] sm:$0xf]
                  %478 = vst [vmem:[%s402 + $0x94] sm:$0xf] %v477
                  %v479 = vld [vmem:[%s401 + $0x118] sm:$0xf]
                  %480 = vst [vmem:[%s402 + $0x98] sm:$0xf] %v479
                  %v481 = vld [vmem:[%s401 + $0x11c] sm:$0xf]
                  %482 = vst [vmem:[%s402 + $0x9c] sm:$0xf] %v481
                  %v483 = vld [vmem:[%s401 + $0x120] sm:$0xf]
                  %484 = vst [vmem:[%s402 + $0xa0] sm:$0xf] %v483
                  %v485 = vld [vmem:[%s401 + $0x124] sm:$0xf]
                  %486 = vst [vmem:[%s402 + $0xa4] sm:$0xf] %v485
                  %v487 = vld [vmem:[%s401 + $0x128] sm:$0xf]
                  %488 = vst [vmem:[%s402 + $0xa8] sm:$0xf] %v487
                  %v489 = vld [vmem:[%s401 + $0x12c] sm:$0xf]
                  %490 = vst [vmem:[%s402 + $0xac] sm:$0xf] %v489
                  %v491 = vld [vmem:[%s401 + $0x130] sm:$0xf]
                  %492 = vst [vmem:[%s402 + $0xb0] sm:$0xf] %v491
                  %v493 = vld [vmem:[%s401 + $0x134] sm:$0xf]
                  %494 = vst [vmem:[%s402 + $0xb4] sm:$0xf] %v493
                  %v495 = vld [vmem:[%s401 + $0x138] sm:$0xf]
                  %496 = vst [vmem:[%s402 + $0xb8] sm:$0xf] %v495
                  %v497 = vld [vmem:[%s401 + $0x13c] sm:$0xf]
                  %498 = vst [vmem:[%s402 + $0xbc] sm:$0xf] %v497
                  %v499 = vld [vmem:[%s401 + $0x140] sm:$0xf]
                  %500 = vst [vmem:[%s402 + $0xc0] sm:$0xf] %v499
                  %v501 = vld [vmem:[%s401 + $0x144] sm:$0xf]
                  %502 = vst [vmem:[%s402 + $0xc4] sm:$0xf] %v501
                  %v503 = vld [vmem:[%s401 + $0x148] sm:$0xf]
                  %504 = vst [vmem:[%s402 + $0xc8] sm:$0xf] %v503
                  %v505 = vld [vmem:[%s401 + $0x14c] sm:$0xf]
                  %506 = vst [vmem:[%s402 + $0xcc] sm:$0xf] %v505
                  %v507 = vld [vmem:[%s401 + $0x150] sm:$0xf]
                  %508 = vst [vmem:[%s402 + $0xd0] sm:$0xf] %v507
                  %v509 = vld [vmem:[%s401 + $0x154] sm:$0xf]
                  %510 = vst [vmem:[%s402 + $0xd4] sm:$0xf] %v509
                  %v511 = vld [vmem:[%s401 + $0x158] sm:$0xf]
                  %512 = vst [vmem:[%s402 + $0xd8] sm:$0xf] %v511
                  %v513 = vld [vmem:[%s401 + $0x15c] sm:$0xf]
                  %514 = vst [vmem:[%s402 + $0xdc] sm:$0xf] %v513
                  %v515 = vld [vmem:[%s401 + $0x160] sm:$0xf]
                  %516 = vst [vmem:[%s402 + $0xe0] sm:$0xf] %v515
                  %v517 = vld [vmem:[%s401 + $0x164] sm:$0xf]
                  %518 = vst [vmem:[%s402 + $0xe4] sm:$0xf] %v517
                  %v519 = vld [vmem:[%s401 + $0x168] sm:$0xf]
                  %520 = vst [vmem:[%s402 + $0xe8] sm:$0xf] %v519
                  %v521 = vld [vmem:[%s401 + $0x16c] sm:$0xf]
                  %522 = vst [vmem:[%s402 + $0xec] sm:$0xf] %v521
                  %v523 = vld [vmem:[%s401 + $0x170] sm:$0xf]
                  %524 = vst [vmem:[%s402 + $0xf0] sm:$0xf] %v523
                  %v525 = vld [vmem:[%s401 + $0x174] sm:$0xf]
                  %526 = vst [vmem:[%s402 + $0xf4] sm:$0xf] %v525
                  %v527 = vld [vmem:[%s401 + $0x178] sm:$0xf]
                  %528 = vst [vmem:[%s402 + $0xf8] sm:$0xf] %v527
                  %v529 = vld [vmem:[%s401 + $0x17c] sm:$0xf]
                  %530 = vst [vmem:[%s402 + $0xfc] sm:$0xf] %v529
                  %v531 = vld [vmem:[%s401 + $0x200] sm:$0xf]
                  %532 = vst [vmem:[%s402 + $0x100] sm:$0xf] %v531
                  %v533 = vld [vmem:[%s401 + $0x204] sm:$0xf]
                  %534 = vst [vmem:[%s402 + $0x104] sm:$0xf] %v533
                  %v535 = vld [vmem:[%s401 + $0x208] sm:$0xf]
                  %536 = vst [vmem:[%s402 + $0x108] sm:$0xf] %v535
                  %v537 = vld [vmem:[%s401 + $0x20c] sm:$0xf]
                  %538 = vst [vmem:[%s402 + $0x10c] sm:$0xf] %v537
                  %v539 = vld [vmem:[%s401 + $0x210] sm:$0xf]
                  %540 = vst [vmem:[%s402 + $0x110] sm:$0xf] %v539
                  %v541 = vld [vmem:[%s401 + $0x214] sm:$0xf]
                  %542 = vst [vmem:[%s402 + $0x114] sm:$0xf] %v541
                  %v543 = vld [vmem:[%s401 + $0x218] sm:$0xf]
                  %544 = vst [vmem:[%s402 + $0x118] sm:$0xf] %v543
                  %v545 = vld [vmem:[%s401 + $0x21c] sm:$0xf]
                  %546 = vst [vmem:[%s402 + $0x11c] sm:$0xf] %v545
                  %v547 = vld [vmem:[%s401 + $0x220] sm:$0xf]
                  %548 = vst [vmem:[%s402 + $0x120] sm:$0xf] %v547
                  %v549 = vld [vmem:[%s401 + $0x224] sm:$0xf]
                  %550 = vst [vmem:[%s402 + $0x124] sm:$0xf] %v549
                  %v551 = vld [vmem:[%s401 + $0x228] sm:$0xf]
                  %552 = vst [vmem:[%s402 + $0x128] sm:$0xf] %v551
                  %v553 = vld [vmem:[%s401 + $0x22c] sm:$0xf]
                  %554 = vst [vmem:[%s402 + $0x12c] sm:$0xf] %v553
                  %v555 = vld [vmem:[%s401 + $0x230] sm:$0xf]
                  %556 = vst [vmem:[%s402 + $0x130] sm:$0xf] %v555
                  %v557 = vld [vmem:[%s401 + $0x234] sm:$0xf]
                  %558 = vst [vmem:[%s402 + $0x134] sm:$0xf] %v557
                  %v559 = vld [vmem:[%s401 + $0x238] sm:$0xf]
                  %560 = vst [vmem:[%s402 + $0x138] sm:$0xf] %v559
                  %v561 = vld [vmem:[%s401 + $0x23c] sm:$0xf]
                  %562 = vst [vmem:[%s402 + $0x13c] sm:$0xf] %v561
                  %v563 = vld [vmem:[%s401 + $0x240] sm:$0xf]
                  %564 = vst [vmem:[%s402 + $0x140] sm:$0xf] %v563
                  %v565 = vld [vmem:[%s401 + $0x244] sm:$0xf]
                  %566 = vst [vmem:[%s402 + $0x144] sm:$0xf] %v565
                  %v567 = vld [vmem:[%s401 + $0x248] sm:$0xf]
                  %568 = vst [vmem:[%s402 + $0x148] sm:$0xf] %v567
                  %v569 = vld [vmem:[%s401 + $0x24c] sm:$0xf]
                  %570 = vst [vmem:[%s402 + $0x14c] sm:$0xf] %v569
                  %v571 = vld [vmem:[%s401 + $0x250] sm:$0xf]
                  %572 = vst [vmem:[%s402 + $0x150] sm:$0xf] %v571
                  %v573 = vld [vmem:[%s401 + $0x254] sm:$0xf]
                  %574 = vst [vmem:[%s402 + $0x154] sm:$0xf] %v573
                  %v575 = vld [vmem:[%s401 + $0x258] sm:$0xf]
                  %576 = vst [vmem:[%s402 + $0x158] sm:$0xf] %v575
                  %v577 = vld [vmem:[%s401 + $0x25c] sm:$0xf]
                  %578 = vst [vmem:[%s402 + $0x15c] sm:$0xf] %v577
                  %v579 = vld [vmem:[%s401 + $0x260] sm:$0xf]
                  %580 = vst [vmem:[%s402 + $0x160] sm:$0xf] %v579
                  %v581 = vld [vmem:[%s401 + $0x264] sm:$0xf]
                  %582 = vst [vmem:[%s402 + $0x164] sm:$0xf] %v581
                  %v583 = vld [vmem:[%s401 + $0x268] sm:$0xf]
                  %584 = vst [vmem:[%s402 + $0x168] sm:$0xf] %v583
                  %v585 = vld [vmem:[%s401 + $0x26c] sm:$0xf]
                  %586 = vst [vmem:[%s402 + $0x16c] sm:$0xf] %v585
                  %v587 = vld [vmem:[%s401 + $0x270] sm:$0xf]
                  %588 = vst [vmem:[%s402 + $0x170] sm:$0xf] %v587
                  %v589 = vld [vmem:[%s401 + $0x274] sm:$0xf]
                  %590 = vst [vmem:[%s402 + $0x174] sm:$0xf] %v589
                  %v591 = vld [vmem:[%s401 + $0x278] sm:$0xf]
                  %592 = vst [vmem:[%s402 + $0x178] sm:$0xf] %v591
                  %v593 = vld [vmem:[%s401 + $0x27c] sm:$0xf]
                  %594 = vst [vmem:[%s402 + $0x17c] sm:$0xf] %v593
                  %v595 = vld [vmem:[%s401 + $0x300] sm:$0xf]
                  %596 = vst [vmem:[%s402 + $0x180] sm:$0xf] %v595
                  %v597 = vld [vmem:[%s401 + $0x304] sm:$0xf]
                  %598 = vst [vmem:[%s402 + $0x184] sm:$0xf] %v597
                  %v599 = vld [vmem:[%s401 + $0x308] sm:$0xf]
                  %600 = vst [vmem:[%s402 + $0x188] sm:$0xf] %v599
                  %v601 = vld [vmem:[%s401 + $0x30c] sm:$0xf]
                  %602 = vst [vmem:[%s402 + $0x18c] sm:$0xf] %v601
                  %v603 = vld [vmem:[%s401 + $0x310] sm:$0xf]
                  %604 = vst [vmem:[%s402 + $0x190] sm:$0xf] %v603
                  %v605 = vld [vmem:[%s401 + $0x314] sm:$0xf]
                  %606 = vst [vmem:[%s402 + $0x194] sm:$0xf] %v605
                  %v607 = vld [vmem:[%s401 + $0x318] sm:$0xf]
                  %608 = vst [vmem:[%s402 + $0x198] sm:$0xf] %v607
                  %v609 = vld [vmem:[%s401 + $0x31c] sm:$0xf]
                  %610 = vst [vmem:[%s402 + $0x19c] sm:$0xf] %v609
                  %v611 = vld [vmem:[%s401 + $0x320] sm:$0xf]
                  %612 = vst [vmem:[%s402 + $0x1a0] sm:$0xf] %v611
                  %v613 = vld [vmem:[%s401 + $0x324] sm:$0xf]
                  %614 = vst [vmem:[%s402 + $0x1a4] sm:$0xf] %v613
                  %v615 = vld [vmem:[%s401 + $0x328] sm:$0xf]
                  %616 = vst [vmem:[%s402 + $0x1a8] sm:$0xf] %v615
                  %v617 = vld [vmem:[%s401 + $0x32c] sm:$0xf]
                  %618 = vst [vmem:[%s402 + $0x1ac] sm:$0xf] %v617
                  %v619 = vld [vmem:[%s401 + $0x330] sm:$0xf]
                  %620 = vst [vmem:[%s402 + $0x1b0] sm:$0xf] %v619
                  %v621 = vld [vmem:[%s401 + $0x334] sm:$0xf]
                  %622 = vst [vmem:[%s402 + $0x1b4] sm:$0xf] %v621
                  %v623 = vld [vmem:[%s401 + $0x338] sm:$0xf]
                  %624 = vst [vmem:[%s402 + $0x1b8] sm:$0xf] %v623
                  %v625 = vld [vmem:[%s401 + $0x33c] sm:$0xf]
                  %626 = vst [vmem:[%s402 + $0x1bc] sm:$0xf] %v625
                  %v627 = vld [vmem:[%s401 + $0x340] sm:$0xf]
                  %628 = vst [vmem:[%s402 + $0x1c0] sm:$0xf] %v627
                  %v629 = vld [vmem:[%s401 + $0x344] sm:$0xf]
                  %630 = vst [vmem:[%s402 + $0x1c4] sm:$0xf] %v629
                  %v631 = vld [vmem:[%s401 + $0x348] sm:$0xf]
                  %632 = vst [vmem:[%s402 + $0x1c8] sm:$0xf] %v631
                  %v633 = vld [vmem:[%s401 + $0x34c] sm:$0xf]
                  %634 = vst [vmem:[%s402 + $0x1cc] sm:$0xf] %v633
                  %v635 = vld [vmem:[%s401 + $0x350] sm:$0xf]
                  %636 = vst [vmem:[%s402 + $0x1d0] sm:$0xf] %v635
                  %v637 = vld [vmem:[%s401 + $0x354] sm:$0xf]
                  %638 = vst [vmem:[%s402 + $0x1d4] sm:$0xf] %v637
                  %v639 = vld [vmem:[%s401 + $0x358] sm:$0xf]
                  %640 = vst [vmem:[%s402 + $0x1d8] sm:$0xf] %v639
                  %v641 = vld [vmem:[%s401 + $0x35c] sm:$0xf]
                  %642 = vst [vmem:[%s402 + $0x1dc] sm:$0xf] %v641
                  %v643 = vld [vmem:[%s401 + $0x360] sm:$0xf]
                  %644 = vst [vmem:[%s402 + $0x1e0] sm:$0xf] %v643
                  %v645 = vld [vmem:[%s401 + $0x364] sm:$0xf]
                  %646 = vst [vmem:[%s402 + $0x1e4] sm:$0xf] %v645
                  %v647 = vld [vmem:[%s401 + $0x368] sm:$0xf]
                  %648 = vst [vmem:[%s402 + $0x1e8] sm:$0xf] %v647
                  %v649 = vld [vmem:[%s401 + $0x36c] sm:$0xf]
                  %650 = vst [vmem:[%s402 + $0x1ec] sm:$0xf] %v649
                  %v651 = vld [vmem:[%s401 + $0x370] sm:$0xf]
                  %652 = vst [vmem:[%s402 + $0x1f0] sm:$0xf] %v651
                  %v653 = vld [vmem:[%s401 + $0x374] sm:$0xf]
                  %654 = vst [vmem:[%s402 + $0x1f4] sm:$0xf] %v653
                  %v655 = vld [vmem:[%s401 + $0x378] sm:$0xf]
                  %656 = vst [vmem:[%s402 + $0x1f8] sm:$0xf] %v655
                  %v657 = vld [vmem:[%s401 + $0x37c] sm:$0xf]
                  %658 = vst [vmem:[%s402 + $0x1fc] sm:$0xf] %v657
                $region59: #{native_cnn_forward.3} parent=46 // loop_footer
                  %s400 = sadd.s32 1, %s396
                $region60: #{native_cnn_forward.3} parent=46 // loop_footer_branch
                  %395 = sbr.rel target = $region56
                $region61: #{native_cnn_forward.3} parent=46 // loop_exit
                  _
              $region47: #{native_cnn_forward.3} parent=31 // pred_fallthru
                _
            $region32: #{native_cnn_forward.3} parent=27 // pred_fallthru
              _
            // Predicated region
            $region33: #{native_cnn_forward.3} parent=27 // pred_check
              _
            $region34: #{native_cnn_forward.3} parent=27 // pred_check_branch
              %118 = sbr.rel (0) target = $region36
            $region35: #{native_cnn_forward.3} parent=27 // pred_region
              loop: start=0, step=1, limit=1
              $region37: #{native_cnn_forward.3} parent=35 // loop_pre_header
                _
              $region38: #{native_cnn_forward.3} parent=35 // loop_header
                %s121 = sphi 0, %s125
                %p122 = scmp.ge.s32.totalorder %s121, 1
                %s126 = sphi %s112, %s112
                %s127 = sphi %s109, %s109
              $region39: #{native_cnn_forward.3} parent=35 // loop_header_branch
                %124 = sbr.rel (%p122) target = $region43
              $region40: #{native_cnn_forward.3} parent=35 // loop_body
                %v128 = vld [vmem:[%s126] sm:$0xf]
                %129 = vst [vmem:[%s127] sm:$0xf] %v128
                %v130 = vld [vmem:[%s126 + $0x4] sm:$0xf]
                %131 = vst [vmem:[%s127 + $0x4] sm:$0xf] %v130
                %v132 = vld [vmem:[%s126 + $0x8] sm:$0xf]
                %133 = vst [vmem:[%s127 + $0x8] sm:$0xf] %v132
                %v134 = vld [vmem:[%s126 + $0xc] sm:$0xf]
                %135 = vst [vmem:[%s127 + $0xc] sm:$0xf] %v134
                %v136 = vld [vmem:[%s126 + $0x10] sm:$0xf]
                %137 = vst [vmem:[%s127 + $0x10] sm:$0xf] %v136
                %v138 = vld [vmem:[%s126 + $0x14] sm:$0xf]
                %139 = vst [vmem:[%s127 + $0x14] sm:$0xf] %v138
                %v140 = vld [vmem:[%s126 + $0x18] sm:$0xf]
                %141 = vst [vmem:[%s127 + $0x18] sm:$0xf] %v140
                %v142 = vld [vmem:[%s126 + $0x1c] sm:$0xf]
                %143 = vst [vmem:[%s127 + $0x1c] sm:$0xf] %v142
                %v144 = vld [vmem:[%s126 + $0x20] sm:$0xf]
                %145 = vst [vmem:[%s127 + $0x20] sm:$0xf] %v144
                %v146 = vld [vmem:[%s126 + $0x24] sm:$0xf]
                %147 = vst [vmem:[%s127 + $0x24] sm:$0xf] %v146
                %v148 = vld [vmem:[%s126 + $0x28] sm:$0xf]
                %149 = vst [vmem:[%s127 + $0x28] sm:$0xf] %v148
                %v150 = vld [vmem:[%s126 + $0x2c] sm:$0xf]
                %151 = vst [vmem:[%s127 + $0x2c] sm:$0xf] %v150
                %v152 = vld [vmem:[%s126 + $0x30] sm:$0xf]
                %153 = vst [vmem:[%s127 + $0x30] sm:$0xf] %v152
                %v154 = vld [vmem:[%s126 + $0x34] sm:$0xf]
                %155 = vst [vmem:[%s127 + $0x34] sm:$0xf] %v154
                %v156 = vld [vmem:[%s126 + $0x38] sm:$0xf]
                %157 = vst [vmem:[%s127 + $0x38] sm:$0xf] %v156
                %v158 = vld [vmem:[%s126 + $0x3c] sm:$0xf]
                %159 = vst [vmem:[%s127 + $0x3c] sm:$0xf] %v158
                %v160 = vld [vmem:[%s126 + $0x40] sm:$0xf]
                %161 = vst [vmem:[%s127 + $0x40] sm:$0xf] %v160
                %v162 = vld [vmem:[%s126 + $0x44] sm:$0xf]
                %163 = vst [vmem:[%s127 + $0x44] sm:$0xf] %v162
                %v164 = vld [vmem:[%s126 + $0x48] sm:$0xf]
                %165 = vst [vmem:[%s127 + $0x48] sm:$0xf] %v164
                %v166 = vld [vmem:[%s126 + $0x4c] sm:$0xf]
                %167 = vst [vmem:[%s127 + $0x4c] sm:$0xf] %v166
                %v168 = vld [vmem:[%s126 + $0x50] sm:$0xf]
                %169 = vst [vmem:[%s127 + $0x50] sm:$0xf] %v168
                %v170 = vld [vmem:[%s126 + $0x54] sm:$0xf]
                %171 = vst [vmem:[%s127 + $0x54] sm:$0xf] %v170
                %v172 = vld [vmem:[%s126 + $0x58] sm:$0xf]
                %173 = vst [vmem:[%s127 + $0x58] sm:$0xf] %v172
                %v174 = vld [vmem:[%s126 + $0x5c] sm:$0xf]
                %175 = vst [vmem:[%s127 + $0x5c] sm:$0xf] %v174
                %v176 = vld [vmem:[%s126 + $0x60] sm:$0xf]
                %177 = vst [vmem:[%s127 + $0x60] sm:$0xf] %v176
                %v178 = vld [vmem:[%s126 + $0x64] sm:$0xf]
                %179 = vst [vmem:[%s127 + $0x64] sm:$0xf] %v178
                %v180 = vld [vmem:[%s126 + $0x68] sm:$0xf]
                %181 = vst [vmem:[%s127 + $0x68] sm:$0xf] %v180
                %v182 = vld [vmem:[%s126 + $0x6c] sm:$0xf]
                %183 = vst [vmem:[%s127 + $0x6c] sm:$0xf] %v182
                %v184 = vld [vmem:[%s126 + $0x70] sm:$0xf]
                %185 = vst [vmem:[%s127 + $0x70] sm:$0xf] %v184
                %v186 = vld [vmem:[%s126 + $0x74] sm:$0xf]
                %187 = vst [vmem:[%s127 + $0x74] sm:$0xf] %v186
                %v188 = vld [vmem:[%s126 + $0x78] sm:$0xf]
                %189 = vst [vmem:[%s127 + $0x78] sm:$0xf] %v188
                %v190 = vld [vmem:[%s126 + $0x7c] sm:$0xf]
                %191 = vst [vmem:[%s127 + $0x7c] sm:$0xf] %v190
                %v192 = vld [vmem:[%s126 + $0x100] sm:$0xf]
                %193 = vst [vmem:[%s127 + $0x80] sm:$0xf] %v192
                %v194 = vld [vmem:[%s126 + $0x104] sm:$0xf]
                %195 = vst [vmem:[%s127 + $0x84] sm:$0xf] %v194
                %v196 = vld [vmem:[%s126 + $0x108] sm:$0xf]
                %197 = vst [vmem:[%s127 + $0x88] sm:$0xf] %v196
                %v198 = vld [vmem:[%s126 + $0x10c] sm:$0xf]
                %199 = vst [vmem:[%s127 + $0x8c] sm:$0xf] %v198
                %v200 = vld [vmem:[%s126 + $0x110] sm:$0xf]
                %201 = vst [vmem:[%s127 + $0x90] sm:$0xf] %v200
                %v202 = vld [vmem:[%s126 + $0x114] sm:$0xf]
                %203 = vst [vmem:[%s127 + $0x94] sm:$0xf] %v202
                %v204 = vld [vmem:[%s126 + $0x118] sm:$0xf]
                %205 = vst [vmem:[%s127 + $0x98] sm:$0xf] %v204
                %v206 = vld [vmem:[%s126 + $0x11c] sm:$0xf]
                %207 = vst [vmem:[%s127 + $0x9c] sm:$0xf] %v206
                %v208 = vld [vmem:[%s126 + $0x120] sm:$0xf]
                %209 = vst [vmem:[%s127 + $0xa0] sm:$0xf] %v208
                %v210 = vld [vmem:[%s126 + $0x124] sm:$0xf]
                %211 = vst [vmem:[%s127 + $0xa4] sm:$0xf] %v210
                %v212 = vld [vmem:[%s126 + $0x128] sm:$0xf]
                %213 = vst [vmem:[%s127 + $0xa8] sm:$0xf] %v212
                %v214 = vld [vmem:[%s126 + $0x12c] sm:$0xf]
                %215 = vst [vmem:[%s127 + $0xac] sm:$0xf] %v214
                %v216 = vld [vmem:[%s126 + $0x130] sm:$0xf]
                %217 = vst [vmem:[%s127 + $0xb0] sm:$0xf] %v216
                %v218 = vld [vmem:[%s126 + $0x134] sm:$0xf]
                %219 = vst [vmem:[%s127 + $0xb4] sm:$0xf] %v218
                %v220 = vld [vmem:[%s126 + $0x138] sm:$0xf]
                %221 = vst [vmem:[%s127 + $0xb8] sm:$0xf] %v220
                %v222 = vld [vmem:[%s126 + $0x13c] sm:$0xf]
                %223 = vst [vmem:[%s127 + $0xbc] sm:$0xf] %v222
                %v224 = vld [vmem:[%s126 + $0x140] sm:$0xf]
                %225 = vst [vmem:[%s127 + $0xc0] sm:$0xf] %v224
                %v226 = vld [vmem:[%s126 + $0x144] sm:$0xf]
                %227 = vst [vmem:[%s127 + $0xc4] sm:$0xf] %v226
                %v228 = vld [vmem:[%s126 + $0x148] sm:$0xf]
                %229 = vst [vmem:[%s127 + $0xc8] sm:$0xf] %v228
                %v230 = vld [vmem:[%s126 + $0x14c] sm:$0xf]
                %231 = vst [vmem:[%s127 + $0xcc] sm:$0xf] %v230
                %v232 = vld [vmem:[%s126 + $0x150] sm:$0xf]
                %233 = vst [vmem:[%s127 + $0xd0] sm:$0xf] %v232
                %v234 = vld [vmem:[%s126 + $0x154] sm:$0xf]
                %235 = vst [vmem:[%s127 + $0xd4] sm:$0xf] %v234
                %v236 = vld [vmem:[%s126 + $0x158] sm:$0xf]
                %237 = vst [vmem:[%s127 + $0xd8] sm:$0xf] %v236
                %v238 = vld [vmem:[%s126 + $0x15c] sm:$0xf]
                %239 = vst [vmem:[%s127 + $0xdc] sm:$0xf] %v238
                %v240 = vld [vmem:[%s126 + $0x160] sm:$0xf]
                %241 = vst [vmem:[%s127 + $0xe0] sm:$0xf] %v240
                %v242 = vld [vmem:[%s126 + $0x164] sm:$0xf]
                %243 = vst [vmem:[%s127 + $0xe4] sm:$0xf] %v242
                %v244 = vld [vmem:[%s126 + $0x168] sm:$0xf]
                %245 = vst [vmem:[%s127 + $0xe8] sm:$0xf] %v244
                %v246 = vld [vmem:[%s126 + $0x16c] sm:$0xf]
                %247 = vst [vmem:[%s127 + $0xec] sm:$0xf] %v246
                %v248 = vld [vmem:[%s126 + $0x170] sm:$0xf]
                %249 = vst [vmem:[%s127 + $0xf0] sm:$0xf] %v248
                %v250 = vld [vmem:[%s126 + $0x174] sm:$0xf]
                %251 = vst [vmem:[%s127 + $0xf4] sm:$0xf] %v250
                %v252 = vld [vmem:[%s126 + $0x178] sm:$0xf]
                %253 = vst [vmem:[%s127 + $0xf8] sm:$0xf] %v252
                %v254 = vld [vmem:[%s126 + $0x17c] sm:$0xf]
                %255 = vst [vmem:[%s127 + $0xfc] sm:$0xf] %v254
                %v256 = vld [vmem:[%s126 + $0x200] sm:$0xf]
                %257 = vst [vmem:[%s127 + $0x100] sm:$0xf] %v256
                %v258 = vld [vmem:[%s126 + $0x204] sm:$0xf]
                %259 = vst [vmem:[%s127 + $0x104] sm:$0xf] %v258
                %v260 = vld [vmem:[%s126 + $0x208] sm:$0xf]
                %261 = vst [vmem:[%s127 + $0x108] sm:$0xf] %v260
                %v262 = vld [vmem:[%s126 + $0x20c] sm:$0xf]
                %263 = vst [vmem:[%s127 + $0x10c] sm:$0xf] %v262
                %v264 = vld [vmem:[%s126 + $0x210] sm:$0xf]
                %265 = vst [vmem:[%s127 + $0x110] sm:$0xf] %v264
                %v266 = vld [vmem:[%s126 + $0x214] sm:$0xf]
                %267 = vst [vmem:[%s127 + $0x114] sm:$0xf] %v266
                %v268 = vld [vmem:[%s126 + $0x218] sm:$0xf]
                %269 = vst [vmem:[%s127 + $0x118] sm:$0xf] %v268
                %v270 = vld [vmem:[%s126 + $0x21c] sm:$0xf]
                %271 = vst [vmem:[%s127 + $0x11c] sm:$0xf] %v270
                %v272 = vld [vmem:[%s126 + $0x220] sm:$0xf]
                %273 = vst [vmem:[%s127 + $0x120] sm:$0xf] %v272
                %v274 = vld [vmem:[%s126 + $0x224] sm:$0xf]
                %275 = vst [vmem:[%s127 + $0x124] sm:$0xf] %v274
                %v276 = vld [vmem:[%s126 + $0x228] sm:$0xf]
                %277 = vst [vmem:[%s127 + $0x128] sm:$0xf] %v276
                %v278 = vld [vmem:[%s126 + $0x22c] sm:$0xf]
                %279 = vst [vmem:[%s127 + $0x12c] sm:$0xf] %v278
                %v280 = vld [vmem:[%s126 + $0x230] sm:$0xf]
                %281 = vst [vmem:[%s127 + $0x130] sm:$0xf] %v280
                %v282 = vld [vmem:[%s126 + $0x234] sm:$0xf]
                %283 = vst [vmem:[%s127 + $0x134] sm:$0xf] %v282
                %v284 = vld [vmem:[%s126 + $0x238] sm:$0xf]
                %285 = vst [vmem:[%s127 + $0x138] sm:$0xf] %v284
                %v286 = vld [vmem:[%s126 + $0x23c] sm:$0xf]
                %287 = vst [vmem:[%s127 + $0x13c] sm:$0xf] %v286
                %v288 = vld [vmem:[%s126 + $0x240] sm:$0xf]
                %289 = vst [vmem:[%s127 + $0x140] sm:$0xf] %v288
                %v290 = vld [vmem:[%s126 + $0x244] sm:$0xf]
                %291 = vst [vmem:[%s127 + $0x144] sm:$0xf] %v290
                %v292 = vld [vmem:[%s126 + $0x248] sm:$0xf]
                %293 = vst [vmem:[%s127 + $0x148] sm:$0xf] %v292
                %v294 = vld [vmem:[%s126 + $0x24c] sm:$0xf]
                %295 = vst [vmem:[%s127 + $0x14c] sm:$0xf] %v294
                %v296 = vld [vmem:[%s126 + $0x250] sm:$0xf]
                %297 = vst [vmem:[%s127 + $0x150] sm:$0xf] %v296
                %v298 = vld [vmem:[%s126 + $0x254] sm:$0xf]
                %299 = vst [vmem:[%s127 + $0x154] sm:$0xf] %v298
                %v300 = vld [vmem:[%s126 + $0x258] sm:$0xf]
                %301 = vst [vmem:[%s127 + $0x158] sm:$0xf] %v300
                %v302 = vld [vmem:[%s126 + $0x25c] sm:$0xf]
                %303 = vst [vmem:[%s127 + $0x15c] sm:$0xf] %v302
                %v304 = vld [vmem:[%s126 + $0x260] sm:$0xf]
                %305 = vst [vmem:[%s127 + $0x160] sm:$0xf] %v304
                %v306 = vld [vmem:[%s126 + $0x264] sm:$0xf]
                %307 = vst [vmem:[%s127 + $0x164] sm:$0xf] %v306
                %v308 = vld [vmem:[%s126 + $0x268] sm:$0xf]
                %309 = vst [vmem:[%s127 + $0x168] sm:$0xf] %v308
                %v310 = vld [vmem:[%s126 + $0x26c] sm:$0xf]
                %311 = vst [vmem:[%s127 + $0x16c] sm:$0xf] %v310
                %v312 = vld [vmem:[%s126 + $0x270] sm:$0xf]
                %313 = vst [vmem:[%s127 + $0x170] sm:$0xf] %v312
                %v314 = vld [vmem:[%s126 + $0x274] sm:$0xf]
                %315 = vst [vmem:[%s127 + $0x174] sm:$0xf] %v314
                %v316 = vld [vmem:[%s126 + $0x278] sm:$0xf]
                %317 = vst [vmem:[%s127 + $0x178] sm:$0xf] %v316
                %v318 = vld [vmem:[%s126 + $0x27c] sm:$0xf]
                %319 = vst [vmem:[%s127 + $0x17c] sm:$0xf] %v318
                %v320 = vld [vmem:[%s126 + $0x300] sm:$0xf]
                %321 = vst [vmem:[%s127 + $0x180] sm:$0xf] %v320
                %v322 = vld [vmem:[%s126 + $0x304] sm:$0xf]
                %323 = vst [vmem:[%s127 + $0x184] sm:$0xf] %v322
                %v324 = vld [vmem:[%s126 + $0x308] sm:$0xf]
                %325 = vst [vmem:[%s127 + $0x188] sm:$0xf] %v324
                %v326 = vld [vmem:[%s126 + $0x30c] sm:$0xf]
                %327 = vst [vmem:[%s127 + $0x18c] sm:$0xf] %v326
                %v328 = vld [vmem:[%s126 + $0x310] sm:$0xf]
                %329 = vst [vmem:[%s127 + $0x190] sm:$0xf] %v328
                %v330 = vld [vmem:[%s126 + $0x314] sm:$0xf]
                %331 = vst [vmem:[%s127 + $0x194] sm:$0xf] %v330
                %v332 = vld [vmem:[%s126 + $0x318] sm:$0xf]
                %333 = vst [vmem:[%s127 + $0x198] sm:$0xf] %v332
                %v334 = vld [vmem:[%s126 + $0x31c] sm:$0xf]
                %335 = vst [vmem:[%s127 + $0x19c] sm:$0xf] %v334
                %v336 = vld [vmem:[%s126 + $0x320] sm:$0xf]
                %337 = vst [vmem:[%s127 + $0x1a0] sm:$0xf] %v336
                %v338 = vld [vmem:[%s126 + $0x324] sm:$0xf]
                %339 = vst [vmem:[%s127 + $0x1a4] sm:$0xf] %v338
                %v340 = vld [vmem:[%s126 + $0x328] sm:$0xf]
                %341 = vst [vmem:[%s127 + $0x1a8] sm:$0xf] %v340
                %v342 = vld [vmem:[%s126 + $0x32c] sm:$0xf]
                %343 = vst [vmem:[%s127 + $0x1ac] sm:$0xf] %v342
                %v344 = vld [vmem:[%s126 + $0x330] sm:$0xf]
                %345 = vst [vmem:[%s127 + $0x1b0] sm:$0xf] %v344
                %v346 = vld [vmem:[%s126 + $0x334] sm:$0xf]
                %347 = vst [vmem:[%s127 + $0x1b4] sm:$0xf] %v346
                %v348 = vld [vmem:[%s126 + $0x338] sm:$0xf]
                %349 = vst [vmem:[%s127 + $0x1b8] sm:$0xf] %v348
                %v350 = vld [vmem:[%s126 + $0x33c] sm:$0xf]
                %351 = vst [vmem:[%s127 + $0x1bc] sm:$0xf] %v350
                %v352 = vld [vmem:[%s126 + $0x340] sm:$0xf]
                %353 = vst [vmem:[%s127 + $0x1c0] sm:$0xf] %v352
                %v354 = vld [vmem:[%s126 + $0x344] sm:$0xf]
                %355 = vst [vmem:[%s127 + $0x1c4] sm:$0xf] %v354
                %v356 = vld [vmem:[%s126 + $0x348] sm:$0xf]
                %357 = vst [vmem:[%s127 + $0x1c8] sm:$0xf] %v356
                %v358 = vld [vmem:[%s126 + $0x34c] sm:$0xf]
                %359 = vst [vmem:[%s127 + $0x1cc] sm:$0xf] %v358
                %v360 = vld [vmem:[%s126 + $0x350] sm:$0xf]
                %361 = vst [vmem:[%s127 + $0x1d0] sm:$0xf] %v360
                %v362 = vld [vmem:[%s126 + $0x354] sm:$0xf]
                %363 = vst [vmem:[%s127 + $0x1d4] sm:$0xf] %v362
                %v364 = vld [vmem:[%s126 + $0x358] sm:$0xf]
                %365 = vst [vmem:[%s127 + $0x1d8] sm:$0xf] %v364
                %v366 = vld [vmem:[%s126 + $0x35c] sm:$0xf]
                %367 = vst [vmem:[%s127 + $0x1dc] sm:$0xf] %v366
                %v368 = vld [vmem:[%s126 + $0x360] sm:$0xf]
                %369 = vst [vmem:[%s127 + $0x1e0] sm:$0xf] %v368
                %v370 = vld [vmem:[%s126 + $0x364] sm:$0xf]
                %371 = vst [vmem:[%s127 + $0x1e4] sm:$0xf] %v370
                %v372 = vld [vmem:[%s126 + $0x368] sm:$0xf]
                %373 = vst [vmem:[%s127 + $0x1e8] sm:$0xf] %v372
                %v374 = vld [vmem:[%s126 + $0x36c] sm:$0xf]
                %375 = vst [vmem:[%s127 + $0x1ec] sm:$0xf] %v374
                %v376 = vld [vmem:[%s126 + $0x370] sm:$0xf]
                %377 = vst [vmem:[%s127 + $0x1f0] sm:$0xf] %v376
                %v378 = vld [vmem:[%s126 + $0x374] sm:$0xf]
                %379 = vst [vmem:[%s127 + $0x1f4] sm:$0xf] %v378
                %v380 = vld [vmem:[%s126 + $0x378] sm:$0xf]
                %381 = vst [vmem:[%s127 + $0x1f8] sm:$0xf] %v380
                %v382 = vld [vmem:[%s126 + $0x37c] sm:$0xf]
                %383 = vst [vmem:[%s127 + $0x1fc] sm:$0xf] %v382
              $region41: #{native_cnn_forward.3} parent=35 // loop_footer
                %s125 = sadd.s32 1, %s121
              $region42: #{native_cnn_forward.3} parent=35 // loop_footer_branch
                %120 = sbr.rel target = $region38
              $region43: #{native_cnn_forward.3} parent=35 // loop_exit
                _
            $region36: #{native_cnn_forward.3} parent=27 // pred_fallthru
              _
          $region28: #{native_cnn_forward.3} parent=23 // pred_fallthru
            _
          %659 = vnop
        $region24: #{native_cnn_forward.3} parent=19 // pred_fallthru
          _
      $region20: #{native_cnn_forward.3} parent=5 // pred_fallthru
        _
      %p660 = scmp.le.s32.totalorder 1, %s8
      %p661 = scmp.lt.s32.totalorder %s8, 3
      %p662 = pnand %p660, %p661
      %p663 = pneg %p662
      // Predicated region
      $region62: #{native_cnn_forward.3} parent=5 // pred_check
        _
      $region63: #{native_cnn_forward.3} parent=5 // pred_check_branch
        %665 = sbr.rel (%p662) target = $region65
      $region64: #{native_cnn_forward.3} parent=5 // pred_region
        %s666 = ssub.s32 %s8, 1
        %s667 = sand.u32 %s21, 1
        %s668 = sand.u32 %s21, 1
        %s669 = smul.addr %s668, 512
        %s670 = scalar_lea.vmem [#allocation2], %s669
        // Predicated region
        $region66: #{native_cnn_forward.3} parent=64 // pred_check
          %p671 = pneg %p34
        $region67: #{native_cnn_forward.3} parent=64 // pred_check_branch
          %673 = sbr.rel (%p671) target = $region69
        $region68: #{native_cnn_forward.3} parent=64 // pred_region
          _
        $region69: #{native_cnn_forward.3} parent=64 // pred_fallthru
          _
        %s674 = sand.u32 %s21, 1
        %s675 = sand.u32 %s21, 1
        %s676 = smul.addr %s675, 512
        %s677 = scalar_lea.vmem [#allocation2], %s676
        %p678 = pneg %p34
        %p679 = pneg %p31
        %p680 = pneg %p55
        %p681 = pneg %p52
        %p682 = pneg %p81
        %p683 = pneg %p78
        %s684 = smul.u32 32, %s13
        %p685 = scmp.lt.s32.totalorder %s684, 63
        %s686 = scalar_select %p685, %s684, 63
        %s687 = smul.addr %s686, 4
        %s688 = scalar_lea.vmem %s2, %s687
        %s689 = smul.u32 32, %s13
        %s690 = smul.u32 32, %s13
        %p691 = scmp.lt.s32.totalorder %s690, 63
        %s692 = scalar_select %p691, %s690, 63
        %s693 = smul.addr %s692, 4
        %s694 = scalar_lea.vmem %s2, %s693
        %s695 = smul.u32 32, %s13
        %v697 = vld [vmem:[%s670] sm:$0xf]
        %v698 = vld [vmem:[%s670 + $0x4] sm:$0xf]
        %v699 = vld [vmem:[%s670 + $0x8] sm:$0xf]
        %v700 = vld [vmem:[%s670 + $0xc] sm:$0xf]
        %v701 = vld [vmem:[%s670 + $0x10] sm:$0xf]
        %v702 = vld [vmem:[%s670 + $0x14] sm:$0xf]
        %v703 = vld [vmem:[%s670 + $0x18] sm:$0xf]
        %v704 = vld [vmem:[%s670 + $0x1c] sm:$0xf]
        %v705 = vld [vmem:[%s670 + $0x20] sm:$0xf]
        %v706 = vld [vmem:[%s670 + $0x24] sm:$0xf]
        %v707 = vld [vmem:[%s670 + $0x28] sm:$0xf]
        %v708 = vld [vmem:[%s670 + $0x2c] sm:$0xf]
        %v709 = vld [vmem:[%s670 + $0x30] sm:$0xf]
        %v710 = vld [vmem:[%s670 + $0x34] sm:$0xf]
        %v711 = vld [vmem:[%s670 + $0x38] sm:$0xf]
        %v712 = vld [vmem:[%s670 + $0x3c] sm:$0xf]
        %v713 = vld [vmem:[%s670 + $0x40] sm:$0xf]
        %v714 = vld [vmem:[%s670 + $0x44] sm:$0xf]
        %v715 = vld [vmem:[%s670 + $0x48] sm:$0xf]
        %v716 = vld [vmem:[%s670 + $0x4c] sm:$0xf]
        %v717 = vld [vmem:[%s670 + $0x50] sm:$0xf]
        %v718 = vld [vmem:[%s670 + $0x54] sm:$0xf]
        %v719 = vld [vmem:[%s670 + $0x58] sm:$0xf]
        %v720 = vld [vmem:[%s670 + $0x5c] sm:$0xf]
        %v721 = vld [vmem:[%s670 + $0x60] sm:$0xf]
        %v722 = vld [vmem:[%s670 + $0x64] sm:$0xf]
        %v723 = vld [vmem:[%s670 + $0x68] sm:$0xf]
        %v724 = vld [vmem:[%s670 + $0x6c] sm:$0xf]
        %v725 = vld [vmem:[%s670 + $0x70] sm:$0xf]
        %v726 = vld [vmem:[%s670 + $0x74] sm:$0xf]
        %v727 = vld [vmem:[%s670 + $0x78] sm:$0xf]
        %v728 = vld [vmem:[%s670 + $0x7c] sm:$0xf]
        %v729 = vld [vmem:[%s670 + $0x80] sm:$0xf]
        %v730 = vld [vmem:[%s670 + $0x84] sm:$0xf]
        %v731 = vld [vmem:[%s670 + $0x88] sm:$0xf]
        %v732 = vld [vmem:[%s670 + $0x8c] sm:$0xf]
        %v733 = vld [vmem:[%s670 + $0x90] sm:$0xf]
        %v734 = vld [vmem:[%s670 + $0x94] sm:$0xf]
        %v735 = vld [vmem:[%s670 + $0x98] sm:$0xf]
        %v736 = vld [vmem:[%s670 + $0x9c] sm:$0xf]
        %v737 = vld [vmem:[%s670 + $0xa0] sm:$0xf]
        %v738 = vld [vmem:[%s670 + $0xa4] sm:$0xf]
        %v739 = vld [vmem:[%s670 + $0xa8] sm:$0xf]
        %v740 = vld [vmem:[%s670 + $0xac] sm:$0xf]
        %v741 = vld [vmem:[%s670 + $0xb0] sm:$0xf]
        %v742 = vld [vmem:[%s670 + $0xb4] sm:$0xf]
        %v743 = vld [vmem:[%s670 + $0xb8] sm:$0xf]
        %v744 = vld [vmem:[%s670 + $0xbc] sm:$0xf]
        %v745 = vld [vmem:[%s670 + $0xc0] sm:$0xf]
        %v746 = vld [vmem:[%s670 + $0xc4] sm:$0xf]
        %v747 = vld [vmem:[%s670 + $0xc8] sm:$0xf]
        %v748 = vld [vmem:[%s670 + $0xcc] sm:$0xf]
        %v749 = vld [vmem:[%s670 + $0xd0] sm:$0xf]
        %v750 = vld [vmem:[%s670 + $0xd4] sm:$0xf]
        %v751 = vld [vmem:[%s670 + $0xd8] sm:$0xf]
        %v752 = vld [vmem:[%s670 + $0xdc] sm:$0xf]
        %v753 = vld [vmem:[%s670 + $0xe0] sm:$0xf]
        %v754 = vld [vmem:[%s670 + $0xe4] sm:$0xf]
        %v755 = vld [vmem:[%s670 + $0xe8] sm:$0xf]
        %v756 = vld [vmem:[%s670 + $0xec] sm:$0xf]
        %v757 = vld [vmem:[%s670 + $0xf0] sm:$0xf]
        %v758 = vld [vmem:[%s670 + $0xf4] sm:$0xf]
        %v759 = vld [vmem:[%s670 + $0xf8] sm:$0xf]
        %v760 = vld [vmem:[%s670 + $0xfc] sm:$0xf]
        %v761 = vld [vmem:[%s670 + $0x100] sm:$0xf]
        %v762 = vld [vmem:[%s670 + $0x104] sm:$0xf]
        %v763 = vld [vmem:[%s670 + $0x108] sm:$0xf]
        %v764 = vld [vmem:[%s670 + $0x10c] sm:$0xf]
        %v765 = vld [vmem:[%s670 + $0x110] sm:$0xf]
        %v766 = vld [vmem:[%s670 + $0x114] sm:$0xf]
        %v767 = vld [vmem:[%s670 + $0x118] sm:$0xf]
        %v768 = vld [vmem:[%s670 + $0x11c] sm:$0xf]
        %v769 = vld [vmem:[%s670 + $0x120] sm:$0xf]
        %v770 = vld [vmem:[%s670 + $0x124] sm:$0xf]
        %v771 = vld [vmem:[%s670 + $0x128] sm:$0xf]
        %v772 = vld [vmem:[%s670 + $0x12c] sm:$0xf]
        %v773 = vld [vmem:[%s670 + $0x130] sm:$0xf]
        %v774 = vld [vmem:[%s670 + $0x134] sm:$0xf]
        %v775 = vld [vmem:[%s670 + $0x138] sm:$0xf]
        %v776 = vld [vmem:[%s670 + $0x13c] sm:$0xf]
        %v777 = vld [vmem:[%s670 + $0x140] sm:$0xf]
        %v778 = vld [vmem:[%s670 + $0x144] sm:$0xf]
        %v779 = vld [vmem:[%s670 + $0x148] sm:$0xf]
        %v780 = vld [vmem:[%s670 + $0x14c] sm:$0xf]
        %v781 = vld [vmem:[%s670 + $0x150] sm:$0xf]
        %v782 = vld [vmem:[%s670 + $0x154] sm:$0xf]
        %v783 = vld [vmem:[%s670 + $0x158] sm:$0xf]
        %v784 = vld [vmem:[%s670 + $0x15c] sm:$0xf]
        %v785 = vld [vmem:[%s670 + $0x160] sm:$0xf]
        %v786 = vld [vmem:[%s670 + $0x164] sm:$0xf]
        %v787 = vld [vmem:[%s670 + $0x168] sm:$0xf]
        %v788 = vld [vmem:[%s670 + $0x16c] sm:$0xf]
        %v789 = vld [vmem:[%s670 + $0x170] sm:$0xf]
        %v790 = vld [vmem:[%s670 + $0x174] sm:$0xf]
        %v791 = vld [vmem:[%s670 + $0x178] sm:$0xf]
        %v792 = vld [vmem:[%s670 + $0x17c] sm:$0xf]
        %v793 = vld [vmem:[%s670 + $0x180] sm:$0xf]
        %v794 = vld [vmem:[%s670 + $0x184] sm:$0xf]
        %v795 = vld [vmem:[%s670 + $0x188] sm:$0xf]
        %v796 = vld [vmem:[%s670 + $0x18c] sm:$0xf]
        %v797 = vld [vmem:[%s670 + $0x190] sm:$0xf]
        %v798 = vld [vmem:[%s670 + $0x194] sm:$0xf]
        %v799 = vld [vmem:[%s670 + $0x198] sm:$0xf]
        %v800 = vld [vmem:[%s670 + $0x19c] sm:$0xf]
        %v801 = vld [vmem:[%s670 + $0x1a0] sm:$0xf]
        %v802 = vld [vmem:[%s670 + $0x1a4] sm:$0xf]
        %v803 = vld [vmem:[%s670 + $0x1a8] sm:$0xf]
        %v804 = vld [vmem:[%s670 + $0x1ac] sm:$0xf]
        %v805 = vld [vmem:[%s670 + $0x1b0] sm:$0xf]
        %v806 = vld [vmem:[%s670 + $0x1b4] sm:$0xf]
        %v807 = vld [vmem:[%s670 + $0x1b8] sm:$0xf]
        %v808 = vld [vmem:[%s670 + $0x1bc] sm:$0xf]
        %v809 = vld [vmem:[%s670 + $0x1c0] sm:$0xf]
        %v810 = vld [vmem:[%s670 + $0x1c4] sm:$0xf]
        %v811 = vld [vmem:[%s670 + $0x1c8] sm:$0xf]
        %v812 = vld [vmem:[%s670 + $0x1cc] sm:$0xf]
        %v813 = vld [vmem:[%s670 + $0x1d0] sm:$0xf]
        %v814 = vld [vmem:[%s670 + $0x1d4] sm:$0xf]
        %v815 = vld [vmem:[%s670 + $0x1d8] sm:$0xf]
        %v816 = vld [vmem:[%s670 + $0x1dc] sm:$0xf]
        %v817 = vld [vmem:[%s670 + $0x1e0] sm:$0xf]
        %v818 = vld [vmem:[%s670 + $0x1e4] sm:$0xf]
        %v819 = vld [vmem:[%s670 + $0x1e8] sm:$0xf]
        %v820 = vld [vmem:[%s670 + $0x1ec] sm:$0xf]
        %v821 = vld [vmem:[%s670 + $0x1f0] sm:$0xf]
        %v822 = vld [vmem:[%s670 + $0x1f4] sm:$0xf]
        %v823 = vld [vmem:[%s670 + $0x1f8] sm:$0xf]
        %v824 = vld [vmem:[%s670 + $0x1fc] sm:$0xf]
        %v825 = vld [vmem:[%s1] sm:$0xf]
        %v826 = vld [vmem:[%s1 + $0x4] sm:$0x1]
        %v955 = vunpack.c.l.b16 %v697
        %v956 = vunpack.c.l.b16 %v698
        %v957 = vunpack.c.l.b16 %v699
        %v958 = vunpack.c.l.b16 %v700
        %v959 = vunpack.c.l.b16 %v701
        %v960 = vunpack.c.l.b16 %v702
        %v961 = vunpack.c.l.b16 %v703
        %v962 = vunpack.c.l.b16 %v704
        %v963 = vunpack.c.l.b16 %v705
        %v964 = vunpack.c.l.b16 %v706
        %v965 = vunpack.c.l.b16 %v707
        %v966 = vunpack.c.l.b16 %v708
        %v967 = vunpack.c.l.b16 %v709
        %v968 = vunpack.c.l.b16 %v710
        %v969 = vunpack.c.l.b16 %v711
        %v970 = vunpack.c.l.b16 %v712
        %v971 = vunpack.c.l.b16 %v713
        %v972 = vunpack.c.l.b16 %v714
        %v973 = vunpack.c.l.b16 %v715
        %v974 = vunpack.c.l.b16 %v716
        %v975 = vunpack.c.l.b16 %v717
        %v976 = vunpack.c.l.b16 %v718
        %v977 = vunpack.c.l.b16 %v719
        %v978 = vunpack.c.l.b16 %v720
        %v979 = vunpack.c.l.b16 %v721
        %v980 = vunpack.c.l.b16 %v722
        %v981 = vunpack.c.l.b16 %v723
        %v982 = vunpack.c.l.b16 %v724
        %v983 = vunpack.c.l.b16 %v725
        %v984 = vunpack.c.l.b16 %v726
        %v985 = vunpack.c.l.b16 %v727
        %v986 = vunpack.c.l.b16 %v728
        %v987 = vunpack.c.l.b16 %v729
        %v988 = vunpack.c.l.b16 %v730
        %v989 = vunpack.c.l.b16 %v731
        %v990 = vunpack.c.l.b16 %v732
        %v991 = vunpack.c.l.b16 %v733
        %v992 = vunpack.c.l.b16 %v734
        %v993 = vunpack.c.l.b16 %v735
        %v994 = vunpack.c.l.b16 %v736
        %v995 = vunpack.c.l.b16 %v737
        %v996 = vunpack.c.l.b16 %v738
        %v997 = vunpack.c.l.b16 %v739
        %v998 = vunpack.c.l.b16 %v740
        %v999 = vunpack.c.l.b16 %v741
        %v1000 = vunpack.c.l.b16 %v742
        %v1001 = vunpack.c.l.b16 %v743
        %v1002 = vunpack.c.l.b16 %v744
        %v1003 = vunpack.c.l.b16 %v745
        %v1004 = vunpack.c.l.b16 %v746
        %v1005 = vunpack.c.l.b16 %v747
        %v1006 = vunpack.c.l.b16 %v748
        %v1007 = vunpack.c.l.b16 %v749
        %v1008 = vunpack.c.l.b16 %v750
        %v1009 = vunpack.c.l.b16 %v751
        %v1010 = vunpack.c.l.b16 %v752
        %v1011 = vunpack.c.l.b16 %v753
        %v1012 = vunpack.c.l.b16 %v754
        %v1013 = vunpack.c.l.b16 %v755
        %v1014 = vunpack.c.l.b16 %v756
        %v1015 = vunpack.c.l.b16 %v757
        %v1016 = vunpack.c.l.b16 %v758
        %v1017 = vunpack.c.l.b16 %v759
        %v1018 = vunpack.c.l.b16 %v760
        %v1019 = vunpack.c.l.b16 %v761
        %v1020 = vunpack.c.l.b16 %v762
        %v1021 = vunpack.c.l.b16 %v763
        %v1022 = vunpack.c.l.b16 %v764
        %v1023 = vunpack.c.l.b16 %v765
        %v1024 = vunpack.c.l.b16 %v766
        %v1025 = vunpack.c.l.b16 %v767
        %v1026 = vunpack.c.l.b16 %v768
        %v1027 = vunpack.c.l.b16 %v769
        %v1028 = vunpack.c.l.b16 %v770
        %v1029 = vunpack.c.l.b16 %v771
        %v1030 = vunpack.c.l.b16 %v772
        %v1031 = vunpack.c.l.b16 %v773
        %v1032 = vunpack.c.l.b16 %v774
        %v1033 = vunpack.c.l.b16 %v775
        %v1034 = vunpack.c.l.b16 %v776
        %v1035 = vunpack.c.l.b16 %v777
        %v1036 = vunpack.c.l.b16 %v778
        %v1037 = vunpack.c.l.b16 %v779
        %v1038 = vunpack.c.l.b16 %v780
        %v1039 = vunpack.c.l.b16 %v781
        %v1040 = vunpack.c.l.b16 %v782
        %v1041 = vunpack.c.l.b16 %v783
        %v1042 = vunpack.c.l.b16 %v784
        %v1043 = vunpack.c.l.b16 %v785
        %v1044 = vunpack.c.l.b16 %v786
        %v1045 = vunpack.c.l.b16 %v787
        %v1046 = vunpack.c.l.b16 %v788
        %v1047 = vunpack.c.l.b16 %v789
        %v1048 = vunpack.c.l.b16 %v790
        %v1049 = vunpack.c.l.b16 %v791
        %v1050 = vunpack.c.l.b16 %v792
        %v1051 = vunpack.c.l.b16 %v793
        %v1052 = vunpack.c.l.b16 %v794
        %v1053 = vunpack.c.l.b16 %v795
        %v1054 = vunpack.c.l.b16 %v796
        %v1055 = vunpack.c.l.b16 %v797
        %v1056 = vunpack.c.l.b16 %v798
        %v1057 = vunpack.c.l.b16 %v799
        %v1058 = vunpack.c.l.b16 %v800
        %v1059 = vunpack.c.l.b16 %v801
        %v1060 = vunpack.c.l.b16 %v802
        %v1061 = vunpack.c.l.b16 %v803
        %v1062 = vunpack.c.l.b16 %v804
        %v1063 = vunpack.c.l.b16 %v805
        %v1064 = vunpack.c.l.b16 %v806
        %v1065 = vunpack.c.l.b16 %v807
        %v1066 = vunpack.c.l.b16 %v808
        %v1067 = vunpack.c.l.b16 %v809
        %v1068 = vunpack.c.l.b16 %v810
        %v1069 = vunpack.c.l.b16 %v811
        %v1070 = vunpack.c.l.b16 %v812
        %v1071 = vunpack.c.l.b16 %v813
        %v1072 = vunpack.c.l.b16 %v814
        %v1073 = vunpack.c.l.b16 %v815
        %v1074 = vunpack.c.l.b16 %v816
        %v1075 = vunpack.c.l.b16 %v817
        %v1076 = vunpack.c.l.b16 %v818
        %v1077 = vunpack.c.l.b16 %v819
        %v1078 = vunpack.c.l.b16 %v820
        %v1079 = vunpack.c.l.b16 %v821
        %v1080 = vunpack.c.l.b16 %v822
        %v1081 = vunpack.c.l.b16 %v823
        %v1082 = vunpack.c.l.b16 %v824
        %v1083 = vpack.c.b16 %v956, %v955
        %v1084 = vpack.c.b16 %v958, %v957
        %v1085 = vpack.c.b16 %v960, %v959
        %v1086 = vpack.c.b16 %v962, %v961
        %v1087 = vpack.c.b16 %v964, %v963
        %v1088 = vpack.c.b16 %v966, %v965
        %v1089 = vpack.c.b16 %v968, %v967
        %v1090 = vpack.c.b16 %v970, %v969
        %v1091 = vpack.c.b16 %v972, %v971
        %v1092 = vpack.c.b16 %v974, %v973
        %v1093 = vpack.c.b16 %v976, %v975
        %v1094 = vpack.c.b16 %v978, %v977
        %v1095 = vpack.c.b16 %v980, %v979
        %v1096 = vpack.c.b16 %v982, %v981
        %v1097 = vpack.c.b16 %v984, %v983
        %v1098 = vpack.c.b16 %v986, %v985
        %v1099 = vpack.c.b16 %v988, %v987
        %v1100 = vpack.c.b16 %v990, %v989
        %v1101 = vpack.c.b16 %v992, %v991
        %v1102 = vpack.c.b16 %v994, %v993
        %v1103 = vpack.c.b16 %v996, %v995
        %v1104 = vpack.c.b16 %v998, %v997
        %v1105 = vpack.c.b16 %v1000, %v999
        %v1106 = vpack.c.b16 %v1002, %v1001
        %v1107 = vpack.c.b16 %v1004, %v1003
        %v1108 = vpack.c.b16 %v1006, %v1005
        %v1109 = vpack.c.b16 %v1008, %v1007
        %v1110 = vpack.c.b16 %v1010, %v1009
        %v1111 = vpack.c.b16 %v1012, %v1011
        %v1112 = vpack.c.b16 %v1014, %v1013
        %v1113 = vpack.c.b16 %v1016, %v1015
        %v1114 = vpack.c.b16 %v1018, %v1017
        %v1115 = vpack.c.b16 %v1020, %v1019
        %v1116 = vpack.c.b16 %v1022, %v1021
        %v1117 = vpack.c.b16 %v1024, %v1023
        %v1118 = vpack.c.b16 %v1026, %v1025
        %v1119 = vpack.c.b16 %v1028, %v1027
        %v1120 = vpack.c.b16 %v1030, %v1029
        %v1121 = vpack.c.b16 %v1032, %v1031
        %v1122 = vpack.c.b16 %v1034, %v1033
        %v1123 = vpack.c.b16 %v1036, %v1035
        %v1124 = vpack.c.b16 %v1038, %v1037
        %v1125 = vpack.c.b16 %v1040, %v1039
        %v1126 = vpack.c.b16 %v1042, %v1041
        %v1127 = vpack.c.b16 %v1044, %v1043
        %v1128 = vpack.c.b16 %v1046, %v1045
        %v1129 = vpack.c.b16 %v1048, %v1047
        %v1130 = vpack.c.b16 %v1050, %v1049
        %v1131 = vpack.c.b16 %v1052, %v1051
        %v1132 = vpack.c.b16 %v1054, %v1053
        %v1133 = vpack.c.b16 %v1056, %v1055
        %v1134 = vpack.c.b16 %v1058, %v1057
        %v1135 = vpack.c.b16 %v1060, %v1059
        %v1136 = vpack.c.b16 %v1062, %v1061
        %v1137 = vpack.c.b16 %v1064, %v1063
        %v1138 = vpack.c.b16 %v1066, %v1065
        %v1139 = vpack.c.b16 %v1068, %v1067
        %v1140 = vpack.c.b16 %v1070, %v1069
        %v1141 = vpack.c.b16 %v1072, %v1071
        %v1142 = vpack.c.b16 %v1074, %v1073
        %v1143 = vpack.c.b16 %v1076, %v1075
        %v1144 = vpack.c.b16 %v1078, %v1077
        %v1145 = vpack.c.b16 %v1080, %v1079
        %v1146 = vpack.c.b16 %v1082, %v1081
        %v1149 = vunpack.c.l.b16 %v825
        %v1150 = vunpack.c.l.b16 %v826
        %v1151 = vpack.c.b16 %v1150, %v1149
        %vm1152 = vcmask 72704
        %v1154 = vsel %vm1152, %v1083, 0
        %v1157 = vsel %vm1152, %v1084, 0
        %v1160 = vsel %vm1152, %v1085, 0
        %v1163 = vsel %vm1152, %v1086, 0
        %v1166 = vsel %vm1152, %v1087, 0
        %v1169 = vsel %vm1152, %v1088, 0
        %v1172 = vsel %vm1152, %v1089, 0
        %v1175 = vsel %vm1152, %v1090, 0
        %v1178 = vsel %vm1152, %v1091, 0
        %v1181 = vsel %vm1152, %v1092, 0
        %v1184 = vsel %vm1152, %v1093, 0
        %v1187 = vsel %vm1152, %v1094, 0
        %v1190 = vsel %vm1152, %v1095, 0
        %v1193 = vsel %vm1152, %v1096, 0
        %v1196 = vsel %vm1152, %v1097, 0
        %v1199 = vsel %vm1152, %v1098, 0
        %v1202 = vsel %vm1152, %v1099, 0
        %v1205 = vsel %vm1152, %v1100, 0
        %v1208 = vsel %vm1152, %v1101, 0
        %v1211 = vsel %vm1152, %v1102, 0
        %v1214 = vsel %vm1152, %v1103, 0
        %v1217 = vsel %vm1152, %v1104, 0
        %v1220 = vsel %vm1152, %v1105, 0
        %v1223 = vsel %vm1152, %v1106, 0
        %v1226 = vsel %vm1152, %v1107, 0
        %v1229 = vsel %vm1152, %v1108, 0
        %v1232 = vsel %vm1152, %v1109, 0
        %v1235 = vsel %vm1152, %v1110, 0
        %v1238 = vsel %vm1152, %v1111, 0
        %v1241 = vsel %vm1152, %v1112, 0
        %v1244 = vsel %vm1152, %v1113, 0
        %v1247 = vsel %vm1152, %v1114, 0
        %v1250 = vsel %vm1152, %v1115, 0
        %v1253 = vsel %vm1152, %v1116, 0
        %v1256 = vsel %vm1152, %v1117, 0
        %v1259 = vsel %vm1152, %v1118, 0
        %v1262 = vsel %vm1152, %v1119, 0
        %v1265 = vsel %vm1152, %v1120, 0
        %v1268 = vsel %vm1152, %v1121, 0
        %v1271 = vsel %vm1152, %v1122, 0
        %v1274 = vsel %vm1152, %v1123, 0
        %v1277 = vsel %vm1152, %v1124, 0
        %v1280 = vsel %vm1152, %v1125, 0
        %v1283 = vsel %vm1152, %v1126, 0
        %v1286 = vsel %vm1152, %v1127, 0
        %v1289 = vsel %vm1152, %v1128, 0
        %v1292 = vsel %vm1152, %v1129, 0
        %v1295 = vsel %vm1152, %v1130, 0
        %v1298 = vsel %vm1152, %v1131, 0
        %v1301 = vsel %vm1152, %v1132, 0
        %v1304 = vsel %vm1152, %v1133, 0
        %v1307 = vsel %vm1152, %v1134, 0
        %v1310 = vsel %vm1152, %v1135, 0
        %v1313 = vsel %vm1152, %v1136, 0
        %v1316 = vsel %vm1152, %v1137, 0
        %v1319 = vsel %vm1152, %v1138, 0
        %v1322 = vsel %vm1152, %v1139, 0
        %v1325 = vsel %vm1152, %v1140, 0
        %v1328 = vsel %vm1152, %v1141, 0
        %v1331 = vsel %vm1152, %v1142, 0
        %v1334 = vsel %vm1152, %v1143, 0
        %v1337 = vsel %vm1152, %v1144, 0
        %v1340 = vsel %vm1152, %v1145, 0
        %v1343 = vsel %vm1152, %v1146, 0
        %vm1345 = vcmask 1043456
        %vm1346 = vcmask 1044480
        %v1347 = vsel %vm1345, 4294967295, 65535
        %v1348 = vsel %vm1346, %v1347, 0
        %v1350 = vand.u32 %v1151, %v1348
        %1352 = vmatprep.subr.bf16.mxu0 0
        %1353 = vmatpush1.bf16.msra.mxu0 %v1350
        %1354 = vmatprep.subr.bf16.mxu0 0
        %1355 = vmatpush1.bf16.msra.mxu0 0
        %1356 = vmatprep.subr.bf16.mxu0 0
        %1357 = vmatpush1.bf16.msra.mxu0 0
        %1358 = vmatprep.subr.bf16.mxu0 0
        %1359 = vmatpush1.bf16.msra.mxu0 0
        %1360 = vmatprep.subr.bf16.mxu0 0
        %1361 = vmatpush1.bf16.msra.mxu0 0
        %1362 = vmatprep.subr.bf16.mxu0 0
        %1363 = vmatpush1.bf16.msra.mxu0 0
        %1364 = vmatprep.subr.bf16.mxu0 0
        %1365 = vmatpush1.bf16.msra.mxu0 0
        %1366 = vmatprep.subr.bf16.mxu0 0
        %1367 = vmatpush1.bf16.msra.mxu0 0
        %1368 = vmatprep.subr.bf16.mxu0 0
        %1369 = vmatpush1.bf16.msra.mxu0 0
        %1370 = vmatprep.subr.bf16.mxu0 0
        %1371 = vmatpush1.bf16.msra.mxu0 0
        %1372 = vmatprep.subr.bf16.mxu0 0
        %1373 = vmatpush1.bf16.msra.mxu0 0
        %1374 = vmatprep.subr.bf16.mxu0 0
        %1375 = vmatpush1.bf16.msra.mxu0 0
        %1376 = vmatprep.subr.bf16.mxu0 0
        %1377 = vmatpush1.bf16.msra.mxu0 0
        %1378 = vmatprep.subr.bf16.mxu0 0
        %1379 = vmatpush1.bf16.msra.mxu0 0
        %1380 = vmatprep.subr.bf16.mxu0 0
        %1381 = vmatpush1.bf16.msra.mxu0 0
        %1382 = vmatprep.subr.bf16.mxu0 0
        %1383 = vmatpush1.bf16.msra.mxu0 0
        %1384 = vmatprep.mubr.bf16.mxu0 0
        %1385 = vmatmul.mubr.bf16.gmra.mrb[0].mxu0 %v1154
        %v1386 = vpop.f32.mrb[0].mxu0
        %v1387 = vadd.f32 0.0, %v1386
        %v1388 = vpop.f32.mrb[0].mxu0
        %v1389 = vpop.f32.mrb[0].mxu0
        %v1390 = vadd.f32 0.0, %v1389
        %v1391 = vpop.f32.mrb[0].mxu0
        %1392 = vmatprep.mubr.bf16.mxu0 0
        %1393 = vmatmul.mubr.bf16.gmra.mrb[0].mxu0 %v1157
        %v1394 = vpop.f32.mrb[0].mxu0
        %v1395 = vadd.f32 0.0, %v1394
        %v1396 = vpop.f32.mrb[0].mxu0
        %v1397 = vpop.f32.mrb[0].mxu0
        %v1398 = vadd.f32 0.0, %v1397
        %v1399 = vpop.f32.mrb[0].mxu0
        %1400 = vmatprep.mubr.bf16.mxu0 0
        %1401 = vmatmul.mubr.bf16.gmra.mrb[0].mxu0 %v1160
        %v1402 = vpop.f32.mrb[0].mxu0
        %v1403 = vadd.f32 0.0, %v1402
        %v1404 = vpop.f32.mrb[0].mxu0
        %v1405 = vpop.f32.mrb[0].mxu0
        %v1406 = vadd.f32 0.0, %v1405
        %v1407 = vpop.f32.mrb[0].mxu0
        %1408 = vmatprep.mubr.bf16.mxu0 0
        %1409 = vmatmul.mubr.bf16.gmra.mrb[0].mxu0 %v1163
        %v1410 = vpop.f32.mrb[0].mxu0
        %v1411 = vadd.f32 0.0, %v1410
        %v1412 = vpop.f32.mrb[0].mxu0
        %v1413 = vpop.f32.mrb[0].mxu0
        %v1414 = vadd.f32 0.0, %v1413
        %v1415 = vpop.f32.mrb[0].mxu0
        %1416 = vmatprep.mubr.bf16.mxu0 0
        %1417 = vmatmul.mubr.bf16.gmra.mrb[0].mxu0 %v1166
        %v1418 = vpop.f32.mrb[0].mxu0
        %v1419 = vadd.f32 0.0, %v1418
        %v1420 = vpop.f32.mrb[0].mxu0
        %v1421 = vpop.f32.mrb[0].mxu0
        %v1422 = vadd.f32 0.0, %v1421
        %v1423 = vpop.f32.mrb[0].mxu0
        %1424 = vmatprep.mubr.bf16.mxu0 0
        %1425 = vmatmul.mubr.bf16.gmra.mrb[0].mxu0 %v1169
        %v1426 = vpop.f32.mrb[0].mxu0
        %v1427 = vadd.f32 0.0, %v1426
        %v1428 = vpop.f32.mrb[0].mxu0
        %v1429 = vpop.f32.mrb[0].mxu0
        %v1430 = vadd.f32 0.0, %v1429
        %v1431 = vpop.f32.mrb[0].mxu0
        %1432 = vmatprep.mubr.bf16.mxu0 0
        %1433 = vmatmul.mubr.bf16.gmra.mrb[0].mxu0 %v1172
        %v1434 = vpop.f32.mrb[0].mxu0
        %v1435 = vadd.f32 0.0, %v1434
        %v1436 = vpop.f32.mrb[0].mxu0
        %v1437 = vpop.f32.mrb[0].mxu0
        %v1438 = vadd.f32 0.0, %v1437
        %v1439 = vpop.f32.mrb[0].mxu0
        %1440 = vmatprep.mubr.bf16.mxu0 0
        %1441 = vmatmul.mubr.bf16.gmra.mrb[0].mxu0 %v1175
        %v1442 = vpop.f32.mrb[0].mxu0
        %v1443 = vadd.f32 0.0, %v1442
        %v1444 = vpop.f32.mrb[0].mxu0
        %v1445 = vpop.f32.mrb[0].mxu0
        %v1446 = vadd.f32 0.0, %v1445
        %v1447 = vpop.f32.mrb[0].mxu0
        %1448 = vmatprep.mubr.bf16.mxu0 0
        %1449 = vmatmul.mubr.bf16.gmra.mrb[0].mxu0 %v1178
        %v1450 = vpop.f32.mrb[0].mxu0
        %v1451 = vadd.f32 0.0, %v1450
        %v1452 = vpop.f32.mrb[0].mxu0
        %v1453 = vpop.f32.mrb[0].mxu0
        %v1454 = vadd.f32 0.0, %v1453
        %v1455 = vpop.f32.mrb[0].mxu0
        %1456 = vmatprep.mubr.bf16.mxu0 0
        %1457 = vmatmul.mubr.bf16.gmra.mrb[0].mxu0 %v1181
        %v1458 = vpop.f32.mrb[0].mxu0
        %v1459 = vadd.f32 0.0, %v1458
        %v1460 = vpop.f32.mrb[0].mxu0
        %v1461 = vpop.f32.mrb[0].mxu0
        %v1462 = vadd.f32 0.0, %v1461
        %v1463 = vpop.f32.mrb[0].mxu0
        %1464 = vmatprep.mubr.bf16.mxu0 0
        %1465 = vmatmul.mubr.bf16.gmra.mrb[0].mxu0 %v1184
        %v1466 = vpop.f32.mrb[0].mxu0
        %v1467 = vadd.f32 0.0, %v1466
        %v1468 = vpop.f32.mrb[0].mxu0
        %v1469 = vpop.f32.mrb[0].mxu0
        %v1470 = vadd.f32 0.0, %v1469
        %v1471 = vpop.f32.mrb[0].mxu0
        %1472 = vmatprep.mubr.bf16.mxu0 0
        %1473 = vmatmul.mubr.bf16.gmra.mrb[0].mxu0 %v1187
        %v1474 = vpop.f32.mrb[0].mxu0
        %v1475 = vadd.f32 0.0, %v1474
        %v1476 = vpop.f32.mrb[0].mxu0
        %v1477 = vpop.f32.mrb[0].mxu0
        %v1478 = vadd.f32 0.0, %v1477
        %v1479 = vpop.f32.mrb[0].mxu0
        %1480 = vmatprep.mubr.bf16.mxu0 0
        %1481 = vmatmul.mubr.bf16.gmra.mrb[0].mxu0 %v1190
        %v1482 = vpop.f32.mrb[0].mxu0
        %v1483 = vadd.f32 0.0, %v1482
        %v1484 = vpop.f32.mrb[0].mxu0
        %v1485 = vpop.f32.mrb[0].mxu0
        %v1486 = vadd.f32 0.0, %v1485
        %v1487 = vpop.f32.mrb[0].mxu0
        %1488 = vmatprep.mubr.bf16.mxu0 0
        %1489 = vmatmul.mubr.bf16.gmra.mrb[0].mxu0 %v1193
        %v1490 = vpop.f32.mrb[0].mxu0
        %v1491 = vadd.f32 0.0, %v1490
        %v1492 = vpop.f32.mrb[0].mxu0
        %v1493 = vpop.f32.mrb[0].mxu0
        %v1494 = vadd.f32 0.0, %v1493
        %v1495 = vpop.f32.mrb[0].mxu0
        %1496 = vmatprep.mubr.bf16.mxu0 0
        %1497 = vmatmul.mubr.bf16.gmra.mrb[0].mxu0 %v1196
        %v1498 = vpop.f32.mrb[0].mxu0
        %v1499 = vadd.f32 0.0, %v1498
        %v1500 = vpop.f32.mrb[0].mxu0
        %v1501 = vpop.f32.mrb[0].mxu0
        %v1502 = vadd.f32 0.0, %v1501
        %v1503 = vpop.f32.mrb[0].mxu0
        %1504 = vmatprep.mubr.bf16.mxu0 0
        %1505 = vmatmul.mubr.bf16.gmra.mrb[0].mxu0 %v1199
        %v1506 = vpop.f32.mrb[0].mxu0
        %v1507 = vadd.f32 0.0, %v1506
        %v1508 = vpop.f32.mrb[0].mxu0
        %v1509 = vpop.f32.mrb[0].mxu0
        %v1510 = vadd.f32 0.0, %v1509
        %v1511 = vpop.f32.mrb[0].mxu0
        %1512 = vmatprep.mubr.bf16.mxu0 0
        %1513 = vmatmul.mubr.bf16.gmra.mrb[0].mxu0 %v1202
        %v1514 = vpop.f32.mrb[0].mxu0
        %v1515 = vadd.f32 0.0, %v1514
        %v1516 = vpop.f32.mrb[0].mxu0
        %v1517 = vpop.f32.mrb[0].mxu0
        %v1518 = vadd.f32 0.0, %v1517
        %v1519 = vpop.f32.mrb[0].mxu0
        %1520 = vmatprep.mubr.bf16.mxu0 0
        %1521 = vmatmul.mubr.bf16.gmra.mrb[0].mxu0 %v1205
        %v1522 = vpop.f32.mrb[0].mxu0
        %v1523 = vadd.f32 0.0, %v1522
        %v1524 = vpop.f32.mrb[0].mxu0
        %v1525 = vpop.f32.mrb[0].mxu0
        %v1526 = vadd.f32 0.0, %v1525
        %v1527 = vpop.f32.mrb[0].mxu0
        %1528 = vmatprep.mubr.bf16.mxu0 0
        %1529 = vmatmul.mubr.bf16.gmra.mrb[0].mxu0 %v1208
        %v1530 = vpop.f32.mrb[0].mxu0
        %v1531 = vadd.f32 0.0, %v1530
        %v1532 = vpop.f32.mrb[0].mxu0
        %v1533 = vpop.f32.mrb[0].mxu0
        %v1534 = vadd.f32 0.0, %v1533
        %v1535 = vpop.f32.mrb[0].mxu0
        %1536 = vmatprep.mubr.bf16.mxu0 0
        %1537 = vmatmul.mubr.bf16.gmra.mrb[0].mxu0 %v1211
        %v1538 = vpop.f32.mrb[0].mxu0
        %v1539 = vadd.f32 0.0, %v1538
        %v1540 = vpop.f32.mrb[0].mxu0
        %v1541 = vpop.f32.mrb[0].mxu0
        %v1542 = vadd.f32 0.0, %v1541
        %v1543 = vpop.f32.mrb[0].mxu0
        %1544 = vmatprep.mubr.bf16.mxu0 0
        %1545 = vmatmul.mubr.bf16.gmra.mrb[0].mxu0 %v1214
        %v1546 = vpop.f32.mrb[0].mxu0
        %v1547 = vadd.f32 0.0, %v1546
        %v1548 = vpop.f32.mrb[0].mxu0
        %v1549 = vpop.f32.mrb[0].mxu0
        %v1550 = vadd.f32 0.0, %v1549
        %v1551 = vpop.f32.mrb[0].mxu0
        %1552 = vmatprep.mubr.bf16.mxu0 0
        %1553 = vmatmul.mubr.bf16.gmra.mrb[0].mxu0 %v1217
        %v1554 = vpop.f32.mrb[0].mxu0
        %v1555 = vadd.f32 0.0, %v1554
        %v1556 = vpop.f32.mrb[0].mxu0
        %v1557 = vpop.f32.mrb[0].mxu0
        %v1558 = vadd.f32 0.0, %v1557
        %v1559 = vpop.f32.mrb[0].mxu0
        %1560 = vmatprep.mubr.bf16.mxu0 0
        %1561 = vmatmul.mubr.bf16.gmra.mrb[0].mxu0 %v1220
        %v1562 = vpop.f32.mrb[0].mxu0
        %v1563 = vadd.f32 0.0, %v1562
        %v1564 = vpop.f32.mrb[0].mxu0
        %v1565 = vpop.f32.mrb[0].mxu0
        %v1566 = vadd.f32 0.0, %v1565
        %v1567 = vpop.f32.mrb[0].mxu0
        %1568 = vmatprep.mubr.bf16.mxu0 0
        %1569 = vmatmul.mubr.bf16.gmra.mrb[0].mxu0 %v1223
        %v1570 = vpop.f32.mrb[0].mxu0
        %v1571 = vadd.f32 0.0, %v1570
        %v1572 = vpop.f32.mrb[0].mxu0
        %v1573 = vpop.f32.mrb[0].mxu0
        %v1574 = vadd.f32 0.0, %v1573
        %v1575 = vpop.f32.mrb[0].mxu0
        %1576 = vmatprep.mubr.bf16.mxu0 0
        %1577 = vmatmul.mubr.bf16.gmra.mrb[0].mxu0 %v1226
        %v1578 = vpop.f32.mrb[0].mxu0
        %v1579 = vadd.f32 0.0, %v1578
        %v1580 = vpop.f32.mrb[0].mxu0
        %v1581 = vpop.f32.mrb[0].mxu0
        %v1582 = vadd.f32 0.0, %v1581
        %v1583 = vpop.f32.mrb[0].mxu0
        %1584 = vmatprep.mubr.bf16.mxu0 0
        %1585 = vmatmul.mubr.bf16.gmra.mrb[0].mxu0 %v1229
        %v1586 = vpop.f32.mrb[0].mxu0
        %v1587 = vadd.f32 0.0, %v1586
        %v1588 = vpop.f32.mrb[0].mxu0
        %v1589 = vpop.f32.mrb[0].mxu0
        %v1590 = vadd.f32 0.0, %v1589
        %v1591 = vpop.f32.mrb[0].mxu0
        %1592 = vmatprep.mubr.bf16.mxu0 0
        %1593 = vmatmul.mubr.bf16.gmra.mrb[0].mxu0 %v1232
        %v1594 = vpop.f32.mrb[0].mxu0
        %v1595 = vadd.f32 0.0, %v1594
        %v1596 = vpop.f32.mrb[0].mxu0
        %v1597 = vpop.f32.mrb[0].mxu0
        %v1598 = vadd.f32 0.0, %v1597
        %v1599 = vpop.f32.mrb[0].mxu0
        %1600 = vmatprep.mubr.bf16.mxu0 0
        %1601 = vmatmul.mubr.bf16.gmra.mrb[0].mxu0 %v1235
        %v1602 = vpop.f32.mrb[0].mxu0
        %v1603 = vadd.f32 0.0, %v1602
        %v1604 = vpop.f32.mrb[0].mxu0
        %v1605 = vpop.f32.mrb[0].mxu0
        %v1606 = vadd.f32 0.0, %v1605
        %v1607 = vpop.f32.mrb[0].mxu0
        %1608 = vmatprep.mubr.bf16.mxu0 0
        %1609 = vmatmul.mubr.bf16.gmra.mrb[0].mxu0 %v1238
        %v1610 = vpop.f32.mrb[0].mxu0
        %v1611 = vadd.f32 0.0, %v1610
        %v1612 = vpop.f32.mrb[0].mxu0
        %v1613 = vpop.f32.mrb[0].mxu0
        %v1614 = vadd.f32 0.0, %v1613
        %v1615 = vpop.f32.mrb[0].mxu0
        %1616 = vmatprep.mubr.bf16.mxu0 0
        %1617 = vmatmul.mubr.bf16.gmra.mrb[0].mxu0 %v1241
        %v1618 = vpop.f32.mrb[0].mxu0
        %v1619 = vadd.f32 0.0, %v1618
        %v1620 = vpop.f32.mrb[0].mxu0
        %v1621 = vpop.f32.mrb[0].mxu0
        %v1622 = vadd.f32 0.0, %v1621
        %v1623 = vpop.f32.mrb[0].mxu0
        %1624 = vmatprep.mubr.bf16.mxu0 0
        %1625 = vmatmul.mubr.bf16.gmra.mrb[0].mxu0 %v1244
        %v1626 = vpop.f32.mrb[0].mxu0
        %v1627 = vadd.f32 0.0, %v1626
        %v1628 = vpop.f32.mrb[0].mxu0
        %v1629 = vpop.f32.mrb[0].mxu0
        %v1630 = vadd.f32 0.0, %v1629
        %v1631 = vpop.f32.mrb[0].mxu0
        %1632 = vmatprep.mubr.bf16.mxu0 0
        %1633 = vmatmul.mubr.bf16.gmra.mrb[0].mxu0 %v1247
        %v1634 = vpop.f32.mrb[0].mxu0
        %v1635 = vadd.f32 0.0, %v1634
        %v1636 = vpop.f32.mrb[0].mxu0
        %v1637 = vpop.f32.mrb[0].mxu0
        %v1638 = vadd.f32 0.0, %v1637
        %v1639 = vpop.f32.mrb[0].mxu0
        %1640 = vmatprep.mubr.bf16.mxu0 0
        %1641 = vmatmul.mubr.bf16.gmra.mrb[0].mxu0 %v1250
        %v1642 = vpop.f32.mrb[0].mxu0
        %v1643 = vadd.f32 0.0, %v1642
        %v1644 = vpop.f32.mrb[0].mxu0
        %v1645 = vpop.f32.mrb[0].mxu0
        %v1646 = vadd.f32 0.0, %v1645
        %v1647 = vpop.f32.mrb[0].mxu0
        %1648 = vmatprep.mubr.bf16.mxu0 0
        %1649 = vmatmul.mubr.bf16.gmra.mrb[0].mxu0 %v1253
        %v1650 = vpop.f32.mrb[0].mxu0
        %v1651 = vadd.f32 0.0, %v1650
        %v1652 = vpop.f32.mrb[0].mxu0
        %v1653 = vpop.f32.mrb[0].mxu0
        %v1654 = vadd.f32 0.0, %v1653
        %v1655 = vpop.f32.mrb[0].mxu0
        %1656 = vmatprep.mubr.bf16.mxu0 0
        %1657 = vmatmul.mubr.bf16.gmra.mrb[0].mxu0 %v1256
        %v1658 = vpop.f32.mrb[0].mxu0
        %v1659 = vadd.f32 0.0, %v1658
        %v1660 = vpop.f32.mrb[0].mxu0
        %v1661 = vpop.f32.mrb[0].mxu0
        %v1662 = vadd.f32 0.0, %v1661
        %v1663 = vpop.f32.mrb[0].mxu0
        %1664 = vmatprep.mubr.bf16.mxu0 0
        %1665 = vmatmul.mubr.bf16.gmra.mrb[0].mxu0 %v1259
        %v1666 = vpop.f32.mrb[0].mxu0
        %v1667 = vadd.f32 0.0, %v1666
        %v1668 = vpop.f32.mrb[0].mxu0
        %v1669 = vpop.f32.mrb[0].mxu0
        %v1670 = vadd.f32 0.0, %v1669
        %v1671 = vpop.f32.mrb[0].mxu0
        %1672 = vmatprep.mubr.bf16.mxu0 0
        %1673 = vmatmul.mubr.bf16.gmra.mrb[0].mxu0 %v1262
        %v1674 = vpop.f32.mrb[0].mxu0
        %v1675 = vadd.f32 0.0, %v1674
        %v1676 = vpop.f32.mrb[0].mxu0
        %v1677 = vpop.f32.mrb[0].mxu0
        %v1678 = vadd.f32 0.0, %v1677
        %v1679 = vpop.f32.mrb[0].mxu0
        %1680 = vmatprep.mubr.bf16.mxu0 0
        %1681 = vmatmul.mubr.bf16.gmra.mrb[0].mxu0 %v1265
        %v1682 = vpop.f32.mrb[0].mxu0
        %v1683 = vadd.f32 0.0, %v1682
        %v1684 = vpop.f32.mrb[0].mxu0
        %v1685 = vpop.f32.mrb[0].mxu0
        %v1686 = vadd.f32 0.0, %v1685
        %v1687 = vpop.f32.mrb[0].mxu0
        %1688 = vmatprep.mubr.bf16.mxu0 0
        %1689 = vmatmul.mubr.bf16.gmra.mrb[0].mxu0 %v1268
        %v1690 = vpop.f32.mrb[0].mxu0
        %v1691 = vadd.f32 0.0, %v1690
        %v1692 = vpop.f32.mrb[0].mxu0
        %v1693 = vpop.f32.mrb[0].mxu0
        %v1694 = vadd.f32 0.0, %v1693
        %v1695 = vpop.f32.mrb[0].mxu0
        %1696 = vmatprep.mubr.bf16.mxu0 0
        %1697 = vmatmul.mubr.bf16.gmra.mrb[0].mxu0 %v1271
        %v1698 = vpop.f32.mrb[0].mxu0
        %v1699 = vadd.f32 0.0, %v1698
        %v1700 = vpop.f32.mrb[0].mxu0
        %v1701 = vpop.f32.mrb[0].mxu0
        %v1702 = vadd.f32 0.0, %v1701
        %v1703 = vpop.f32.mrb[0].mxu0
        %1704 = vmatprep.mubr.bf16.mxu0 0
        %1705 = vmatmul.mubr.bf16.gmra.mrb[0].mxu0 %v1274
        %v1706 = vpop.f32.mrb[0].mxu0
        %v1707 = vadd.f32 0.0, %v1706
        %v1708 = vpop.f32.mrb[0].mxu0
        %v1709 = vpop.f32.mrb[0].mxu0
        %v1710 = vadd.f32 0.0, %v1709
        %v1711 = vpop.f32.mrb[0].mxu0
        %1712 = vmatprep.mubr.bf16.mxu0 0
        %1713 = vmatmul.mubr.bf16.gmra.mrb[0].mxu0 %v1277
        %v1714 = vpop.f32.mrb[0].mxu0
        %v1715 = vadd.f32 0.0, %v1714
        %v1716 = vpop.f32.mrb[0].mxu0
        %v1717 = vpop.f32.mrb[0].mxu0
        %v1718 = vadd.f32 0.0, %v1717
        %v1719 = vpop.f32.mrb[0].mxu0
        %1720 = vmatprep.mubr.bf16.mxu0 0
        %1721 = vmatmul.mubr.bf16.gmra.mrb[0].mxu0 %v1280
        %v1722 = vpop.f32.mrb[0].mxu0
        %v1723 = vadd.f32 0.0, %v1722
        %v1724 = vpop.f32.mrb[0].mxu0
        %v1725 = vpop.f32.mrb[0].mxu0
        %v1726 = vadd.f32 0.0, %v1725
        %v1727 = vpop.f32.mrb[0].mxu0
        %1728 = vmatprep.mubr.bf16.mxu0 0
        %1729 = vmatmul.mubr.bf16.gmra.mrb[0].mxu0 %v1283
        %v1730 = vpop.f32.mrb[0].mxu0
        %v1731 = vadd.f32 0.0, %v1730
        %v1732 = vpop.f32.mrb[0].mxu0
        %v1733 = vpop.f32.mrb[0].mxu0
        %v1734 = vadd.f32 0.0, %v1733
        %v1735 = vpop.f32.mrb[0].mxu0
        %1736 = vmatprep.mubr.bf16.mxu0 0
        %1737 = vmatmul.mubr.bf16.gmra.mrb[0].mxu0 %v1286
        %v1738 = vpop.f32.mrb[0].mxu0
        %v1739 = vadd.f32 0.0, %v1738
        %v1740 = vpop.f32.mrb[0].mxu0
        %v1741 = vpop.f32.mrb[0].mxu0
        %v1742 = vadd.f32 0.0, %v1741
        %v1743 = vpop.f32.mrb[0].mxu0
        %1744 = vmatprep.mubr.bf16.mxu0 0
        %1745 = vmatmul.mubr.bf16.gmra.mrb[0].mxu0 %v1289
        %v1746 = vpop.f32.mrb[0].mxu0
        %v1747 = vadd.f32 0.0, %v1746
        %v1748 = vpop.f32.mrb[0].mxu0
        %v1749 = vpop.f32.mrb[0].mxu0
        %v1750 = vadd.f32 0.0, %v1749
        %v1751 = vpop.f32.mrb[0].mxu0
        %1752 = vmatprep.mubr.bf16.mxu0 0
        %1753 = vmatmul.mubr.bf16.gmra.mrb[0].mxu0 %v1292
        %v1754 = vpop.f32.mrb[0].mxu0
        %v1755 = vadd.f32 0.0, %v1754
        %v1756 = vpop.f32.mrb[0].mxu0
        %v1757 = vpop.f32.mrb[0].mxu0
        %v1758 = vadd.f32 0.0, %v1757
        %v1759 = vpop.f32.mrb[0].mxu0
        %1760 = vmatprep.mubr.bf16.mxu0 0
        %1761 = vmatmul.mubr.bf16.gmra.mrb[0].mxu0 %v1295
        %v1762 = vpop.f32.mrb[0].mxu0
        %v1763 = vadd.f32 0.0, %v1762
        %v1764 = vpop.f32.mrb[0].mxu0
        %v1765 = vpop.f32.mrb[0].mxu0
        %v1766 = vadd.f32 0.0, %v1765
        %v1767 = vpop.f32.mrb[0].mxu0
        %1768 = vmatprep.mubr.bf16.mxu0 0
        %1769 = vmatmul.mubr.bf16.gmra.mrb[0].mxu0 %v1298
        %v1770 = vpop.f32.mrb[0].mxu0
        %v1771 = vadd.f32 0.0, %v1770
        %v1772 = vpop.f32.mrb[0].mxu0
        %v1773 = vpop.f32.mrb[0].mxu0
        %v1774 = vadd.f32 0.0, %v1773
        %v1775 = vpop.f32.mrb[0].mxu0
        %1776 = vmatprep.mubr.bf16.mxu0 0
        %1777 = vmatmul.mubr.bf16.gmra.mrb[0].mxu0 %v1301
        %v1778 = vpop.f32.mrb[0].mxu0
        %v1779 = vadd.f32 0.0, %v1778
        %v1780 = vpop.f32.mrb[0].mxu0
        %v1781 = vpop.f32.mrb[0].mxu0
        %v1782 = vadd.f32 0.0, %v1781
        %v1783 = vpop.f32.mrb[0].mxu0
        %1784 = vmatprep.mubr.bf16.mxu0 0
        %1785 = vmatmul.mubr.bf16.gmra.mrb[0].mxu0 %v1304
        %v1786 = vpop.f32.mrb[0].mxu0
        %v1787 = vadd.f32 0.0, %v1786
        %v1788 = vpop.f32.mrb[0].mxu0
        %v1789 = vpop.f32.mrb[0].mxu0
        %v1790 = vadd.f32 0.0, %v1789
        %v1791 = vpop.f32.mrb[0].mxu0
        %1792 = vmatprep.mubr.bf16.mxu0 0
        %1793 = vmatmul.mubr.bf16.gmra.mrb[0].mxu0 %v1307
        %v1794 = vpop.f32.mrb[0].mxu0
        %v1795 = vadd.f32 0.0, %v1794
        %v1796 = vpop.f32.mrb[0].mxu0
        %v1797 = vpop.f32.mrb[0].mxu0
        %v1798 = vadd.f32 0.0, %v1797
        %v1799 = vpop.f32.mrb[0].mxu0
        %1800 = vmatprep.mubr.bf16.mxu0 0
        %1801 = vmatmul.mubr.bf16.gmra.mrb[0].mxu0 %v1310
        %v1802 = vpop.f32.mrb[0].mxu0
        %v1803 = vadd.f32 0.0, %v1802
        %v1804 = vpop.f32.mrb[0].mxu0
        %v1805 = vpop.f32.mrb[0].mxu0
        %v1806 = vadd.f32 0.0, %v1805
        %v1807 = vpop.f32.mrb[0].mxu0
        %1808 = vmatprep.mubr.bf16.mxu0 0
        %1809 = vmatmul.mubr.bf16.gmra.mrb[0].mxu0 %v1313
        %v1810 = vpop.f32.mrb[0].mxu0
        %v1811 = vadd.f32 0.0, %v1810
        %v1812 = vpop.f32.mrb[0].mxu0
        %v1813 = vpop.f32.mrb[0].mxu0
        %v1814 = vadd.f32 0.0, %v1813
        %v1815 = vpop.f32.mrb[0].mxu0
        %1816 = vmatprep.mubr.bf16.mxu0 0
        %1817 = vmatmul.mubr.bf16.gmra.mrb[0].mxu0 %v1316
        %v1818 = vpop.f32.mrb[0].mxu0
        %v1819 = vadd.f32 0.0, %v1818
        %v1820 = vpop.f32.mrb[0].mxu0
        %v1821 = vpop.f32.mrb[0].mxu0
        %v1822 = vadd.f32 0.0, %v1821
        %v1823 = vpop.f32.mrb[0].mxu0
        %1824 = vmatprep.mubr.bf16.mxu0 0
        %1825 = vmatmul.mubr.bf16.gmra.mrb[0].mxu0 %v1319
        %v1826 = vpop.f32.mrb[0].mxu0
        %v1827 = vadd.f32 0.0, %v1826
        %v1828 = vpop.f32.mrb[0].mxu0
        %v1829 = vpop.f32.mrb[0].mxu0
        %v1830 = vadd.f32 0.0, %v1829
        %v1831 = vpop.f32.mrb[0].mxu0
        %1832 = vmatprep.mubr.bf16.mxu0 0
        %1833 = vmatmul.mubr.bf16.gmra.mrb[0].mxu0 %v1322
        %v1834 = vpop.f32.mrb[0].mxu0
        %v1835 = vadd.f32 0.0, %v1834
        %v1836 = vpop.f32.mrb[0].mxu0
        %v1837 = vpop.f32.mrb[0].mxu0
        %v1838 = vadd.f32 0.0, %v1837
        %v1839 = vpop.f32.mrb[0].mxu0
        %1840 = vmatprep.mubr.bf16.mxu0 0
        %1841 = vmatmul.mubr.bf16.gmra.mrb[0].mxu0 %v1325
        %v1842 = vpop.f32.mrb[0].mxu0
        %v1843 = vadd.f32 0.0, %v1842
        %v1844 = vpop.f32.mrb[0].mxu0
        %v1845 = vpop.f32.mrb[0].mxu0
        %v1846 = vadd.f32 0.0, %v1845
        %v1847 = vpop.f32.mrb[0].mxu0
        %1848 = vmatprep.mubr.bf16.mxu0 0
        %1849 = vmatmul.mubr.bf16.gmra.mrb[0].mxu0 %v1328
        %v1850 = vpop.f32.mrb[0].mxu0
        %v1851 = vadd.f32 0.0, %v1850
        %v1852 = vpop.f32.mrb[0].mxu0
        %v1853 = vpop.f32.mrb[0].mxu0
        %v1854 = vadd.f32 0.0, %v1853
        %v1855 = vpop.f32.mrb[0].mxu0
        %1856 = vmatprep.mubr.bf16.mxu0 0
        %1857 = vmatmul.mubr.bf16.gmra.mrb[0].mxu0 %v1331
        %v1858 = vpop.f32.mrb[0].mxu0
        %v1859 = vadd.f32 0.0, %v1858
        %v1860 = vpop.f32.mrb[0].mxu0
        %v1861 = vpop.f32.mrb[0].mxu0
        %v1862 = vadd.f32 0.0, %v1861
        %v1863 = vpop.f32.mrb[0].mxu0
        %1864 = vmatprep.mubr.bf16.mxu0 0
        %1865 = vmatmul.mubr.bf16.gmra.mrb[0].mxu0 %v1334
        %v1866 = vpop.f32.mrb[0].mxu0
        %v1867 = vadd.f32 0.0, %v1866
        %v1868 = vpop.f32.mrb[0].mxu0
        %v1869 = vpop.f32.mrb[0].mxu0
        %v1870 = vadd.f32 0.0, %v1869
        %v1871 = vpop.f32.mrb[0].mxu0
        %1872 = vmatprep.mubr.bf16.mxu0 0
        %1873 = vmatmul.mubr.bf16.gmra.mrb[0].mxu0 %v1337
        %v1874 = vpop.f32.mrb[0].mxu0
        %v1875 = vadd.f32 0.0, %v1874
        %v1876 = vpop.f32.mrb[0].mxu0
        %v1877 = vpop.f32.mrb[0].mxu0
        %v1878 = vadd.f32 0.0, %v1877
        %v1879 = vpop.f32.mrb[0].mxu0
        %1880 = vmatprep.mubr.bf16.mxu0 0
        %1881 = vmatmul.mubr.bf16.gmra.mrb[0].mxu0 %v1340
        %v1882 = vpop.f32.mrb[0].mxu0
        %v1883 = vadd.f32 0.0, %v1882
        %v1884 = vpop.f32.mrb[0].mxu0
        %v1885 = vpop.f32.mrb[0].mxu0
        %v1886 = vadd.f32 0.0, %v1885
        %v1887 = vpop.f32.mrb[0].mxu0
        %1888 = vmatprep.mubr.bf16.mxu0 0
        %1889 = vmatmul.mubr.bf16.gmra.mrb[0].mxu0 %v1343
        %v1890 = vpop.f32.mrb[0].mxu0
        %v1891 = vadd.f32 0.0, %v1890
        %v1892 = vpop.f32.mrb[0].mxu0
        %v1893 = vpop.f32.mrb[0].mxu0
        %v1894 = vadd.f32 0.0, %v1893
        %v1895 = vpop.f32.mrb[0].mxu0
        %1896 = vdwg.mxu0
        %v1897 = vmax.f32 %v1387, 0.0
        %v1898 = vmax.f32 %v1390, 0.0
        %v1899 = vmax.f32 %v1395, 0.0
        %v1900 = vmax.f32 %v1398, 0.0
        %v1901 = vmax.f32 %v1403, 0.0
        %v1902 = vmax.f32 %v1406, 0.0
        %v1903 = vmax.f32 %v1411, 0.0
        %v1904 = vmax.f32 %v1414, 0.0
        %v1905 = vmax.f32 %v1419, 0.0
        %v1906 = vmax.f32 %v1422, 0.0
        %v1907 = vmax.f32 %v1427, 0.0
        %v1908 = vmax.f32 %v1430, 0.0
        %v1909 = vmax.f32 %v1435, 0.0
        %v1910 = vmax.f32 %v1438, 0.0
        %v1911 = vmax.f32 %v1443, 0.0
        %v1912 = vmax.f32 %v1446, 0.0
        %v1913 = vmax.f32 %v1451, 0.0
        %v1914 = vmax.f32 %v1454, 0.0
        %v1915 = vmax.f32 %v1459, 0.0
        %v1916 = vmax.f32 %v1462, 0.0
        %v1917 = vmax.f32 %v1467, 0.0
        %v1918 = vmax.f32 %v1470, 0.0
        %v1919 = vmax.f32 %v1475, 0.0
        %v1920 = vmax.f32 %v1478, 0.0
        %v1921 = vmax.f32 %v1483, 0.0
        %v1922 = vmax.f32 %v1486, 0.0
        %v1923 = vmax.f32 %v1491, 0.0
        %v1924 = vmax.f32 %v1494, 0.0
        %v1925 = vmax.f32 %v1499, 0.0
        %v1926 = vmax.f32 %v1502, 0.0
        %v1927 = vmax.f32 %v1507, 0.0
        %v1928 = vmax.f32 %v1510, 0.0
        %v1929 = vmax.f32 %v1515, 0.0
        %v1930 = vmax.f32 %v1518, 0.0
        %v1931 = vmax.f32 %v1523, 0.0
        %v1932 = vmax.f32 %v1526, 0.0
        %v1933 = vmax.f32 %v1531, 0.0
        %v1934 = vmax.f32 %v1534, 0.0
        %v1935 = vmax.f32 %v1539, 0.0
        %v1936 = vmax.f32 %v1542, 0.0
        %v1937 = vmax.f32 %v1547, 0.0
        %v1938 = vmax.f32 %v1550, 0.0
        %v1939 = vmax.f32 %v1555, 0.0
        %v1940 = vmax.f32 %v1558, 0.0
        %v1941 = vmax.f32 %v1563, 0.0
        %v1942 = vmax.f32 %v1566, 0.0
        %v1943 = vmax.f32 %v1571, 0.0
        %v1944 = vmax.f32 %v1574, 0.0
        %v1945 = vmax.f32 %v1579, 0.0
        %v1946 = vmax.f32 %v1582, 0.0
        %v1947 = vmax.f32 %v1587, 0.0
        %v1948 = vmax.f32 %v1590, 0.0
        %v1949 = vmax.f32 %v1595, 0.0
        %v1950 = vmax.f32 %v1598, 0.0
        %v1951 = vmax.f32 %v1603, 0.0
        %v1952 = vmax.f32 %v1606, 0.0
        %v1953 = vmax.f32 %v1611, 0.0
        %v1954 = vmax.f32 %v1614, 0.0
        %v1955 = vmax.f32 %v1619, 0.0
        %v1956 = vmax.f32 %v1622, 0.0
        %v1957 = vmax.f32 %v1627, 0.0
        %v1958 = vmax.f32 %v1630, 0.0
        %v1959 = vmax.f32 %v1635, 0.0
        %v1960 = vmax.f32 %v1638, 0.0
        %v1961 = vmax.f32 %v1643, 0.0
        %v1962 = vmax.f32 %v1646, 0.0
        %v1963 = vmax.f32 %v1651, 0.0
        %v1964 = vmax.f32 %v1654, 0.0
        %v1965 = vmax.f32 %v1659, 0.0
        %v1966 = vmax.f32 %v1662, 0.0
        %v1967 = vmax.f32 %v1667, 0.0
        %v1968 = vmax.f32 %v1670, 0.0
        %v1969 = vmax.f32 %v1675, 0.0
        %v1970 = vmax.f32 %v1678, 0.0
        %v1971 = vmax.f32 %v1683, 0.0
        %v1972 = vmax.f32 %v1686, 0.0
        %v1973 = vmax.f32 %v1691, 0.0
        %v1974 = vmax.f32 %v1694, 0.0
        %v1975 = vmax.f32 %v1699, 0.0
        %v1976 = vmax.f32 %v1702, 0.0
        %v1977 = vmax.f32 %v1707, 0.0
        %v1978 = vmax.f32 %v1710, 0.0
        %v1979 = vmax.f32 %v1715, 0.0
        %v1980 = vmax.f32 %v1718, 0.0
        %v1981 = vmax.f32 %v1723, 0.0
        %v1982 = vmax.f32 %v1726, 0.0
        %v1983 = vmax.f32 %v1731, 0.0
        %v1984 = vmax.f32 %v1734, 0.0
        %v1985 = vmax.f32 %v1739, 0.0
        %v1986 = vmax.f32 %v1742, 0.0
        %v1987 = vmax.f32 %v1747, 0.0
        %v1988 = vmax.f32 %v1750, 0.0
        %v1989 = vmax.f32 %v1755, 0.0
        %v1990 = vmax.f32 %v1758, 0.0
        %v1991 = vmax.f32 %v1763, 0.0
        %v1992 = vmax.f32 %v1766, 0.0
        %v1993 = vmax.f32 %v1771, 0.0
        %v1994 = vmax.f32 %v1774, 0.0
        %v1995 = vmax.f32 %v1779, 0.0
        %v1996 = vmax.f32 %v1782, 0.0
        %v1997 = vmax.f32 %v1787, 0.0
        %v1998 = vmax.f32 %v1790, 0.0
        %v1999 = vmax.f32 %v1795, 0.0
        %v2000 = vmax.f32 %v1798, 0.0
        %v2001 = vmax.f32 %v1803, 0.0
        %v2002 = vmax.f32 %v1806, 0.0
        %v2003 = vmax.f32 %v1811, 0.0
        %v2004 = vmax.f32 %v1814, 0.0
        %v2005 = vmax.f32 %v1819, 0.0
        %v2006 = vmax.f32 %v1822, 0.0
        %v2007 = vmax.f32 %v1827, 0.0
        %v2008 = vmax.f32 %v1830, 0.0
        %v2009 = vmax.f32 %v1835, 0.0
        %v2010 = vmax.f32 %v1838, 0.0
        %v2011 = vmax.f32 %v1843, 0.0
        %v2012 = vmax.f32 %v1846, 0.0
        %v2013 = vmax.f32 %v1851, 0.0
        %v2014 = vmax.f32 %v1854, 0.0
        %v2015 = vmax.f32 %v1859, 0.0
        %v2016 = vmax.f32 %v1862, 0.0
        %v2017 = vmax.f32 %v1867, 0.0
        %v2018 = vmax.f32 %v1870, 0.0
        %v2019 = vmax.f32 %v1875, 0.0
        %v2020 = vmax.f32 %v1878, 0.0
        %v2021 = vmax.f32 %v1883, 0.0
        %v2022 = vmax.f32 %v1886, 0.0
        %v2023 = vmax.f32 %v1891, 0.0
        %v2024 = vmax.f32 %v1894, 0.0
        %v2025 = vmax.f32 %v1897, %v1929
        %v2026 = vmax.f32 %v1898, %v1930
        %v2027 = vmax.f32 %v1899, %v1931
        %v2028 = vmax.f32 %v1900, %v1932
        %v2029 = vmax.f32 %v1901, %v1933
        %v2030 = vmax.f32 %v1902, %v1934
        %v2031 = vmax.f32 %v1903, %v1935
        %v2032 = vmax.f32 %v1904, %v1936
        %v2033 = vmax.f32 %v1905, %v1937
        %v2034 = vmax.f32 %v1906, %v1938
        %v2035 = vmax.f32 %v1907, %v1939
        %v2036 = vmax.f32 %v1908, %v1940
        %v2037 = vmax.f32 %v1909, %v1941
        %v2038 = vmax.f32 %v1910, %v1942
        %v2039 = vmax.f32 %v1911, %v1943
        %v2040 = vmax.f32 %v1912, %v1944
        %v2041 = vmax.f32 %v1913, %v1945
        %v2042 = vmax.f32 %v1914, %v1946
        %v2043 = vmax.f32 %v1915, %v1947
        %v2044 = vmax.f32 %v1916, %v1948
        %v2045 = vmax.f32 %v1917, %v1949
        %v2046 = vmax.f32 %v1918, %v1950
        %v2047 = vmax.f32 %v1919, %v1951
        %v2048 = vmax.f32 %v1920, %v1952
        %v2049 = vmax.f32 %v1921, %v1953
        %v2050 = vmax.f32 %v1922, %v1954
        %v2051 = vmax.f32 %v1923, %v1955
        %v2052 = vmax.f32 %v1924, %v1956
        %v2053 = vmax.f32 %v1925, %v1957
        %v2054 = vmax.f32 %v1926, %v1958
        %v2055 = vmax.f32 %v1927, %v1959
        %v2056 = vmax.f32 %v1928, %v1960
        %v2057 = vmax.f32 %v1961, %v1993
        %v2058 = vmax.f32 %v1962, %v1994
        %v2059 = vmax.f32 %v1963, %v1995
        %v2060 = vmax.f32 %v1964, %v1996
        %v2061 = vmax.f32 %v1965, %v1997
        %v2062 = vmax.f32 %v1966, %v1998
        %v2063 = vmax.f32 %v1967, %v1999
        %v2064 = vmax.f32 %v1968, %v2000
        %v2065 = vmax.f32 %v1969, %v2001
        %v2066 = vmax.f32 %v1970, %v2002
        %v2067 = vmax.f32 %v1971, %v2003
        %v2068 = vmax.f32 %v1972, %v2004
        %v2069 = vmax.f32 %v1973, %v2005
        %v2070 = vmax.f32 %v1974, %v2006
        %v2071 = vmax.f32 %v1975, %v2007
        %v2072 = vmax.f32 %v1976, %v2008
        %v2073 = vmax.f32 %v1977, %v2009
        %v2074 = vmax.f32 %v1978, %v2010
        %v2075 = vmax.f32 %v1979, %v2011
        %v2076 = vmax.f32 %v1980, %v2012
        %v2077 = vmax.f32 %v1981, %v2013
        %v2078 = vmax.f32 %v1982, %v2014
        %v2079 = vmax.f32 %v1983, %v2015
        %v2080 = vmax.f32 %v1984, %v2016
        %v2081 = vmax.f32 %v1985, %v2017
        %v2082 = vmax.f32 %v1986, %v2018
        %v2083 = vmax.f32 %v1987, %v2019
        %v2084 = vmax.f32 %v1988, %v2020
        %v2085 = vmax.f32 %v1989, %v2021
        %v2086 = vmax.f32 %v1990, %v2022
        %v2087 = vmax.f32 %v1991, %v2023
        %v2088 = vmax.f32 %v1992, %v2024
        %v2089 = vmax.f32 %v2025, %v2057
        %v2090 = vmax.f32 %v2026, %v2058
        %v2091 = vmax.f32 %v2027, %v2059
        %v2092 = vmax.f32 %v2028, %v2060
        %v2093 = vmax.f32 %v2029, %v2061
        %v2094 = vmax.f32 %v2030, %v2062
        %v2095 = vmax.f32 %v2031, %v2063
        %v2096 = vmax.f32 %v2032, %v2064
        %v2097 = vmax.f32 %v2033, %v2065
        %v2098 = vmax.f32 %v2034, %v2066
        %v2099 = vmax.f32 %v2035, %v2067
        %v2100 = vmax.f32 %v2036, %v2068
        %v2101 = vmax.f32 %v2037, %v2069
        %v2102 = vmax.f32 %v2038, %v2070
        %v2103 = vmax.f32 %v2039, %v2071
        %v2104 = vmax.f32 %v2040, %v2072
        %v2105 = vmax.f32 %v2041, %v2073
        %v2106 = vmax.f32 %v2042, %v2074
        %v2107 = vmax.f32 %v2043, %v2075
        %v2108 = vmax.f32 %v2044, %v2076
        %v2109 = vmax.f32 %v2045, %v2077
        %v2110 = vmax.f32 %v2046, %v2078
        %v2111 = vmax.f32 %v2047, %v2079
        %v2112 = vmax.f32 %v2048, %v2080
        %v2113 = vmax.f32 %v2049, %v2081
        %v2114 = vmax.f32 %v2050, %v2082
        %v2115 = vmax.f32 %v2051, %v2083
        %v2116 = vmax.f32 %v2052, %v2084
        %v2117 = vmax.f32 %v2053, %v2085
        %v2118 = vmax.f32 %v2054, %v2086
        %v2119 = vmax.f32 %v2055, %v2087
        %v2120 = vmax.f32 %v2056, %v2088
        %v2121 = vpack.c.bf16 %v2090, %v2089
        %v2122 = vpack.c.bf16 %v2092, %v2091
        %v2123 = vpack.c.bf16 %v2094, %v2093
        %v2124 = vpack.c.bf16 %v2096, %v2095
        %v2125 = vpack.c.bf16 %v2098, %v2097
        %v2126 = vpack.c.bf16 %v2100, %v2099
        %v2127 = vpack.c.bf16 %v2102, %v2101
        %v2128 = vpack.c.bf16 %v2104, %v2103
        %v2129 = vpack.c.bf16 %v2106, %v2105
        %v2130 = vpack.c.bf16 %v2108, %v2107
        %v2131 = vpack.c.bf16 %v2110, %v2109
        %v2132 = vpack.c.bf16 %v2112, %v2111
        %v2133 = vpack.c.bf16 %v2114, %v2113
        %v2134 = vpack.c.bf16 %v2116, %v2115
        %v2135 = vpack.c.bf16 %v2118, %v2117
        %v2136 = vpack.c.bf16 %v2120, %v2119
        %v2153 = vunpack.c.l.b16 %v2121
        %v2154 = vunpack.c.h.b16 %v2121
        %v2155 = vunpack.c.l.b16 %v2122
        %v2156 = vunpack.c.h.b16 %v2122
        %v2157 = vunpack.c.l.b16 %v2123
        %v2158 = vunpack.c.h.b16 %v2123
        %v2159 = vunpack.c.l.b16 %v2124
        %v2160 = vunpack.c.h.b16 %v2124
        %v2161 = vunpack.c.l.b16 %v2125
        %v2162 = vunpack.c.h.b16 %v2125
        %v2163 = vunpack.c.l.b16 %v2126
        %v2164 = vunpack.c.h.b16 %v2126
        %v2165 = vunpack.c.l.b16 %v2127
        %v2166 = vunpack.c.h.b16 %v2127
        %v2167 = vunpack.c.l.b16 %v2128
        %v2168 = vunpack.c.h.b16 %v2128
        %v2169 = vunpack.c.l.b16 %v2129
        %v2170 = vunpack.c.h.b16 %v2129
        %v2171 = vunpack.c.l.b16 %v2130
        %v2172 = vunpack.c.h.b16 %v2130
        %v2173 = vunpack.c.l.b16 %v2131
        %v2174 = vunpack.c.h.b16 %v2131
        %v2175 = vunpack.c.l.b16 %v2132
        %v2176 = vunpack.c.h.b16 %v2132
        %v2177 = vunpack.c.l.b16 %v2133
        %v2178 = vunpack.c.h.b16 %v2133
        %v2179 = vunpack.c.l.b16 %v2134
        %v2180 = vunpack.c.h.b16 %v2134
        %v2181 = vunpack.c.l.b16 %v2135
        %v2182 = vunpack.c.h.b16 %v2135
        %v2183 = vunpack.c.l.b16 %v2136
        %v2184 = vunpack.c.h.b16 %v2136
        %v2185 = vpack.c.b16 %v2153, %v2153
        %v2186 = vpack.c.b16 %v2154, %v2154
        %v2187 = vpack.c.b16 %v2155, %v2155
        %v2188 = vpack.c.b16 %v2156, %v2156
        %v2189 = vpack.c.b16 %v2157, %v2157
        %v2190 = vpack.c.b16 %v2158, %v2158
        %v2191 = vpack.c.b16 %v2159, %v2159
        %v2192 = vpack.c.b16 %v2160, %v2160
        %v2193 = vpack.c.b16 %v2161, %v2161
        %v2194 = vpack.c.b16 %v2162, %v2162
        %v2195 = vpack.c.b16 %v2163, %v2163
        %v2196 = vpack.c.b16 %v2164, %v2164
        %v2197 = vpack.c.b16 %v2165, %v2165
        %v2198 = vpack.c.b16 %v2166, %v2166
        %v2199 = vpack.c.b16 %v2167, %v2167
        %v2200 = vpack.c.b16 %v2168, %v2168
        %v2201 = vpack.c.b16 %v2169, %v2169
        %v2202 = vpack.c.b16 %v2170, %v2170
        %v2203 = vpack.c.b16 %v2171, %v2171
        %v2204 = vpack.c.b16 %v2172, %v2172
        %v2205 = vpack.c.b16 %v2173, %v2173
        %v2206 = vpack.c.b16 %v2174, %v2174
        %v2207 = vpack.c.b16 %v2175, %v2175
        %v2208 = vpack.c.b16 %v2176, %v2176
        %v2209 = vpack.c.b16 %v2177, %v2177
        %v2210 = vpack.c.b16 %v2178, %v2178
        %v2211 = vpack.c.b16 %v2179, %v2179
        %v2212 = vpack.c.b16 %v2180, %v2180
        %v2213 = vpack.c.b16 %v2181, %v2181
        %v2214 = vpack.c.b16 %v2182, %v2182
        %v2215 = vpack.c.b16 %v2183, %v2183
        %v2216 = vpack.c.b16 %v2184, %v2184
        %2249 = vst [vmem:[%s694] sm:$0xf] %v2185
        %2250 = vst [vmem:[%s694 + $0x4] sm:$0xf] %v2186
        %2251 = vst [vmem:[%s694 + $0x8] sm:$0xf] %v2187
        %2252 = vst [vmem:[%s694 + $0xc] sm:$0xf] %v2188
        %2253 = vst [vmem:[%s694 + $0x10] sm:$0xf] %v2189
        %2254 = vst [vmem:[%s694 + $0x14] sm:$0xf] %v2190
        %2255 = vst [vmem:[%s694 + $0x18] sm:$0xf] %v2191
        %2256 = vst [vmem:[%s694 + $0x1c] sm:$0xf] %v2192
        %2257 = vst [vmem:[%s694 + $0x20] sm:$0xf] %v2193
        %2258 = vst [vmem:[%s694 + $0x24] sm:$0xf] %v2194
        %2259 = vst [vmem:[%s694 + $0x28] sm:$0xf] %v2195
        %2260 = vst [vmem:[%s694 + $0x2c] sm:$0xf] %v2196
        %2261 = vst [vmem:[%s694 + $0x30] sm:$0xf] %v2197
        %2262 = vst [vmem:[%s694 + $0x34] sm:$0xf] %v2198
        %2263 = vst [vmem:[%s694 + $0x38] sm:$0xf] %v2199
        %2264 = vst [vmem:[%s694 + $0x3c] sm:$0xf] %v2200
        %2265 = vst [vmem:[%s694 + $0x40] sm:$0xf] %v2201
        %2266 = vst [vmem:[%s694 + $0x44] sm:$0xf] %v2202
        %2267 = vst [vmem:[%s694 + $0x48] sm:$0xf] %v2203
        %2268 = vst [vmem:[%s694 + $0x4c] sm:$0xf] %v2204
        %2269 = vst [vmem:[%s694 + $0x50] sm:$0xf] %v2205
        %2270 = vst [vmem:[%s694 + $0x54] sm:$0xf] %v2206
        %2271 = vst [vmem:[%s694 + $0x58] sm:$0xf] %v2207
        %2272 = vst [vmem:[%s694 + $0x5c] sm:$0xf] %v2208
        %2273 = vst [vmem:[%s694 + $0x60] sm:$0xf] %v2209
        %2274 = vst [vmem:[%s694 + $0x64] sm:$0xf] %v2210
        %2275 = vst [vmem:[%s694 + $0x68] sm:$0xf] %v2211
        %2276 = vst [vmem:[%s694 + $0x6c] sm:$0xf] %v2212
        %2277 = vst [vmem:[%s694 + $0x70] sm:$0xf] %v2213
        %2278 = vst [vmem:[%s694 + $0x74] sm:$0xf] %v2214
        %2279 = vst [vmem:[%s694 + $0x78] sm:$0xf] %v2215
        %2280 = vst [vmem:[%s694 + $0x7c] sm:$0xf] %v2216
        %s2281 = smul.u32 32, %s13
        %p2282 = scmp.lt.s32.totalorder %s2281, 63
        %s2283 = scalar_select %p2282, %s2281, 63
        %s2284 = smul.addr %s2283, 4
        %s2285 = scalar_lea.vmem %s2, %s2284
        // Predicated region
        $region70: #{native_cnn_forward.3} parent=64 // pred_check
          %p2286 = pneg %p78
        $region71: #{native_cnn_forward.3} parent=64 // pred_check_branch
          %2288 = sbr.rel (%p2286) target = $region73
        $region72: #{native_cnn_forward.3} parent=64 // pred_region
          %s2289 = smul.u32 32, %s13
        $region73: #{native_cnn_forward.3} parent=64 // pred_fallthru
          _
      $region65: #{native_cnn_forward.3} parent=5 // pred_fallthru
        _
      %p2290 = scmp.le.s32.totalorder 2, %s8
      // Predicated region
      $region74: #{native_cnn_forward.3} parent=5 // pred_check
        %p2291 = pneg %p2290
      $region75: #{native_cnn_forward.3} parent=5 // pred_check_branch
        %2293 = sbr.rel (%p2291) target = $region77
      $region76: #{native_cnn_forward.3} parent=5 // pred_region
        %s2294 = ssub.s32 %s8, 2
        // Predicated region
        $region78: #{native_cnn_forward.3} parent=76 // pred_check
          %p2295 = pneg %p84
        $region79: #{native_cnn_forward.3} parent=76 // pred_check_branch
          %2297 = sbr.rel (%p2295) target = $region81
        $region80: #{native_cnn_forward.3} parent=76 // pred_region
          %s2298 = smul.u32 32, %s14
          %p2299 = scmp.lt.s32.totalorder %s2298, 63
          %s2300 = scalar_select %p2299, %s2298, 63
          %s2301 = smul.addr %s2300, 4
          %s2302 = scalar_lea.vmem %s2, %s2301
        $region81: #{native_cnn_forward.3} parent=76 // pred_fallthru
          _
      $region77: #{native_cnn_forward.3} parent=5 // pred_fallthru
        _
    $region6: #{native_cnn_forward.3} parent=1 // loop_footer
      %s12 = sadd.s32 1, %s8
    $region7: #{native_cnn_forward.3} parent=1 // loop_footer_branch
      %7 = sbr.rel target = $region3
    $region8: #{native_cnn_forward.3} parent=1 // loop_exit
      _

// kernel: native_cnn_forward.4
$region0: #{native_cnn_forward.4}
  #allocation0 [shape = 'u32[]', space=smem, size = 0x4, offset = 0x4, fixed_abs, tag = 'smem constant byte address 0x4 - core index']
  #allocation1 [shape = 'u32[144,128]{1,0:T(1,128)}', space=vmem, size = 0x12000, scoped, tag = 'internal scratch']
  %s0 = inlined_call_operand.vmem [shape: bf16[4,128,288], index: 0, kind: input, shape index: {}]
  %s1 = inlined_call_operand.vmem [shape: bf16[288,128], index: 1, kind: input, shape index: {}]
  %s2 = inlined_call_operand.vmem [shape: bf16[128,128], index: 2, kind: output, shape index: {}]
  %s3 = sld [smem:[#allocation0]]
  $region67: #{native_cnn_forward.4} parent=0
    _
  %s5 = ssub.s32 1, %s3
  %s6 = scalar_select 0, %s5, %s3
  $region1: #{native_cnn_forward.4} parent=0
    #allocation2 [shape = 'u8[393216]{0}', space=vmem, size = 0x60000, scoped, tag = 'input window, operand 0']
    loop: start=0, step=1, limit=4
    $region2: #{native_cnn_forward.4} parent=1 // loop_pre_header
      _
    $region3: #{native_cnn_forward.4} parent=1 // loop_header
      %s8 = sphi 0, %s12
      %p9 = scmp.ge.s32.totalorder %s8, 4
      %s18 = sphi 0, %s20
      %s21 = sphi 0, %s18
      %s22 = sphi 0, %s21
      %s38 = sphi 0, %s22
      %s42 = sphi 0, %s42
      %s44 = sphi 0, %s42
      %s45 = sphi 0, %s44
      %s59 = sphi 0, %s45
      %s65 = sphi 0, %s67
      %s68 = sphi 0, %s65
      %s69 = sphi 0, %s68
      %s85 = sphi 0, %s69
    $region4: #{native_cnn_forward.4} parent=1 // loop_header_branch
      %11 = sbr.rel (%p9) target = $region8
    $region5: #{native_cnn_forward.4} parent=1 // loop_body
      %s13 = ssub.s32 %s8, 1
      %s14 = ssub.s32 %s8, 2
      %s15 = sadd.s32 %s8, 1
      %s16 = ssub.s32 %s8, %s15
      %p17 = scmp.eq.s32.totalorder %s16, 0
      %s19 = sadd.s32 %s18, 1
      %s20 = scalar_select %p17, %s18, %s19
      %p23 = pneg %p17
      %p24 = scmp.eq.s32.totalorder %s8, 1
      %p25 = por %p23, %p24
      %p26 = scmp.ne.s32.totalorder %s18, %s21
      %p27 = scmp.eq.s32.totalorder %s8, 0
      %p28 = por %p26, %p27
      %p29 = scmp.ne.s32.totalorder %s18, %s21
      %p30 = scmp.eq.s32.totalorder %s13, 1
      %p31 = por %p29, %p30
      %p32 = scmp.ne.s32.totalorder %s21, %s22
      %p33 = scmp.eq.s32.totalorder %s13, 0
      %p34 = por %p32, %p33
      %p35 = scmp.ne.s32.totalorder %s21, %s22
      %p36 = scmp.eq.s32.totalorder %s14, 1
      %p37 = por %p35, %p36
      %p39 = scmp.ne.s32.totalorder %s22, %s38
      %p40 = scmp.eq.s32.totalorder %s14, 0
      %p41 = por %p39, %p40
      %s43 = sadd.s32 %s42, 1
      %p46 = scmp.eq.s32.totalorder %s8, 1
      %p47 = scmp.ne.s32.totalorder %s42, %s44
      %p48 = scmp.eq.s32.totalorder %s8, 0
      %p49 = por %p47, %p48
      %p50 = scmp.ne.s32.totalorder %s42, %s44
      %p51 = scmp.eq.s32.totalorder %s13, 1
      %p52 = por %p50, %p51
      %p53 = scmp.ne.s32.totalorder %s44, %s45
      %p54 = scmp.eq.s32.totalorder %s13, 0
      %p55 = por %p53, %p54
      %p56 = scmp.ne.s32.totalorder %s44, %s45
      %p57 = scmp.eq.s32.totalorder %s14, 1
      %p58 = por %p56, %p57
      %p60 = scmp.ne.s32.totalorder %s45, %s59
      %p61 = scmp.eq.s32.totalorder %s14, 0
      %p62 = por %p60, %p61
      %s63 = ssub.s32 %s8, %s15
      %p64 = scmp.eq.s32.totalorder %s63, 0
      %s66 = sadd.s32 %s65, 1
      %s67 = scalar_select %p64, %s65, %s66
      %p70 = pneg %p64
      %p71 = scmp.eq.s32.totalorder %s8, 1
      %p72 = por %p70, %p71
      %p73 = scmp.ne.s32.totalorder %s65, %s68
      %p74 = scmp.eq.s32.totalorder %s8, 0
      %p75 = por %p73, %p74
      %p76 = scmp.ne.s32.totalorder %s65, %s68
      %p77 = scmp.eq.s32.totalorder %s13, 1
      %p78 = por %p76, %p77
      %p79 = scmp.ne.s32.totalorder %s68, %s69
      %p80 = scmp.eq.s32.totalorder %s13, 0
      %p81 = por %p79, %p80
      %p82 = scmp.ne.s32.totalorder %s68, %s69
      %p83 = scmp.eq.s32.totalorder %s14, 1
      %p84 = por %p82, %p83
      %p86 = scmp.ne.s32.totalorder %s69, %s85
      %p87 = scmp.eq.s32.totalorder %s14, 0
      %p88 = por %p86, %p87
      %p89 = scmp.le.s32.totalorder 1, %s8
      %p90 = scmp.lt.s32.totalorder %s8, 3
      %p91 = pnand %p89, %p90
      %p92 = pneg %p91
      // Predicated region
      $region9: #{native_cnn_forward.4} parent=5 // pred_check
        _
      $region10: #{native_cnn_forward.4} parent=5 // pred_check_branch
        %94 = sbr.rel (%p91) target = $region12
      $region11: #{native_cnn_forward.4} parent=5 // pred_region
        %s95 = ssub.s32 %s8, 1
        // Predicated region
        $region13: #{native_cnn_forward.4} parent=11 // pred_check
          %p96 = pneg %p55
        $region14: #{native_cnn_forward.4} parent=11 // pred_check_branch
          %98 = sbr.rel (%p96) target = $region16
        $region15: #{native_cnn_forward.4} parent=11 // pred_region
          _
        $region16: #{native_cnn_forward.4} parent=11 // pred_fallthru
          _
      $region12: #{native_cnn_forward.4} parent=5 // pred_fallthru
        _
      %p99 = scmp.lt.s32.totalorder %s8, 2
      // Predicated region
      $region17: #{native_cnn_forward.4} parent=5 // pred_check
        %p100 = pneg %p99
      $region18: #{native_cnn_forward.4} parent=5 // pred_check_branch
        %102 = sbr.rel (%p100) target = $region20
      $region19: #{native_cnn_forward.4} parent=5 // pred_region
        // Predicated region
        $region21: #{native_cnn_forward.4} parent=19 // pred_check
          %p103 = pneg %p28
        $region22: #{native_cnn_forward.4} parent=19 // pred_check_branch
          %105 = sbr.rel (%p103) target = $region24
        $region23: #{native_cnn_forward.4} parent=19 // pred_region
          %s106 = sand.u32 %s18, 1
          %s107 = sand.u32 %s18, 1
          %s108 = smul.addr %s107, 384
          %s109 = scalar_lea.vmem [#allocation2], %s108
          %s110 = smul.u32 8, %s8
          %s111 = smul.addr %s110, 3
          %s112 = smul.addr %s111, 4
          %s113 = scalar_lea.vmem %s0, %s112
          // Predicated region
          $region25: #{native_cnn_forward.4} parent=23 // pred_check
            _
          $region26: #{native_cnn_forward.4} parent=23 // pred_check_branch
            %115 = sbr.rel (0) target = $region28
          $region27: #{native_cnn_forward.4} parent=23 // pred_region
            // Predicated region
            $region29: #{native_cnn_forward.4} parent=27 // pred_check
              _
            $region30: #{native_cnn_forward.4} parent=27 // pred_check_branch
              %117 = sbr.rel (0) target = $region32
            $region31: #{native_cnn_forward.4} parent=27 // pred_region
              %s118 = scalar_lea.vmem %s113, 8
              %s119 = scalar_lea.vmem %s109, 8 [#allocation2]
              loop: start=0, step=1, limit=1
              $region33: #{native_cnn_forward.4} parent=31 // loop_pre_header
                _
              $region34: #{native_cnn_forward.4} parent=31 // loop_header
                %s121 = sphi 0, %s125
                %p122 = scmp.ge.s32.totalorder %s121, 1
                %s126 = sphi %s113, %s113
                %s127 = sphi %s109, %s109
              $region35: #{native_cnn_forward.4} parent=31 // loop_header_branch
                %124 = sbr.rel (%p122) target = $region39
              $region36: #{native_cnn_forward.4} parent=31 // loop_body
                %v128 = vld [vmem:[%s126] sm:$0xff]
                %129 = vst [vmem:[%s127] sm:$0xff] %v128
                %v130 = vld [vmem:[%s126 + $0xc] sm:$0xff]
                %131 = vst [vmem:[%s127 + $0xc] sm:$0xff] %v130
                %v132 = vld [vmem:[%s126 + $0x18] sm:$0xff]
                %133 = vst [vmem:[%s127 + $0x18] sm:$0xff] %v132
                %v134 = vld [vmem:[%s126 + $0x24] sm:$0xff]
                %135 = vst [vmem:[%s127 + $0x24] sm:$0xff] %v134
                %v136 = vld [vmem:[%s126 + $0x30] sm:$0xff]
                %137 = vst [vmem:[%s127 + $0x30] sm:$0xff] %v136
                %v138 = vld [vmem:[%s126 + $0x3c] sm:$0xff]
                %139 = vst [vmem:[%s127 + $0x3c] sm:$0xff] %v138
                %v140 = vld [vmem:[%s126 + $0x48] sm:$0xff]
                %141 = vst [vmem:[%s127 + $0x48] sm:$0xff] %v140
                %v142 = vld [vmem:[%s126 + $0x54] sm:$0xff]
                %143 = vst [vmem:[%s127 + $0x54] sm:$0xff] %v142
                %v144 = vld [vmem:[%s126 + $0xc0] sm:$0xff]
                %145 = vst [vmem:[%s127 + $0x60] sm:$0xff] %v144
                %v146 = vld [vmem:[%s126 + $0xcc] sm:$0xff]
                %147 = vst [vmem:[%s127 + $0x6c] sm:$0xff] %v146
                %v148 = vld [vmem:[%s126 + $0xd8] sm:$0xff]
                %149 = vst [vmem:[%s127 + $0x78] sm:$0xff] %v148
                %v150 = vld [vmem:[%s126 + $0xe4] sm:$0xff]
                %151 = vst [vmem:[%s127 + $0x84] sm:$0xff] %v150
                %v152 = vld [vmem:[%s126 + $0xf0] sm:$0xff]
                %153 = vst [vmem:[%s127 + $0x90] sm:$0xff] %v152
                %v154 = vld [vmem:[%s126 + $0xfc] sm:$0xff]
                %155 = vst [vmem:[%s127 + $0x9c] sm:$0xff] %v154
                %v156 = vld [vmem:[%s126 + $0x108] sm:$0xff]
                %157 = vst [vmem:[%s127 + $0xa8] sm:$0xff] %v156
                %v158 = vld [vmem:[%s126 + $0x114] sm:$0xff]
                %159 = vst [vmem:[%s127 + $0xb4] sm:$0xff] %v158
                %v160 = vld [vmem:[%s126 + $0x180] sm:$0xff]
                %161 = vst [vmem:[%s127 + $0xc0] sm:$0xff] %v160
                %v162 = vld [vmem:[%s126 + $0x18c] sm:$0xff]
                %163 = vst [vmem:[%s127 + $0xcc] sm:$0xff] %v162
                %v164 = vld [vmem:[%s126 + $0x198] sm:$0xff]
                %165 = vst [vmem:[%s127 + $0xd8] sm:$0xff] %v164
                %v166 = vld [vmem:[%s126 + $0x1a4] sm:$0xff]
                %167 = vst [vmem:[%s127 + $0xe4] sm:$0xff] %v166
                %v168 = vld [vmem:[%s126 + $0x1b0] sm:$0xff]
                %169 = vst [vmem:[%s127 + $0xf0] sm:$0xff] %v168
                %v170 = vld [vmem:[%s126 + $0x1bc] sm:$0xff]
                %171 = vst [vmem:[%s127 + $0xfc] sm:$0xff] %v170
                %v172 = vld [vmem:[%s126 + $0x1c8] sm:$0xff]
                %173 = vst [vmem:[%s127 + $0x108] sm:$0xff] %v172
                %v174 = vld [vmem:[%s126 + $0x1d4] sm:$0xff]
                %175 = vst [vmem:[%s127 + $0x114] sm:$0xff] %v174
                %v176 = vld [vmem:[%s126 + $0x240] sm:$0xff]
                %177 = vst [vmem:[%s127 + $0x120] sm:$0xff] %v176
                %v178 = vld [vmem:[%s126 + $0x24c] sm:$0xff]
                %179 = vst [vmem:[%s127 + $0x12c] sm:$0xff] %v178
                %v180 = vld [vmem:[%s126 + $0x258] sm:$0xff]
                %181 = vst [vmem:[%s127 + $0x138] sm:$0xff] %v180
                %v182 = vld [vmem:[%s126 + $0x264] sm:$0xff]
                %183 = vst [vmem:[%s127 + $0x144] sm:$0xff] %v182
                %v184 = vld [vmem:[%s126 + $0x270] sm:$0xff]
                %185 = vst [vmem:[%s127 + $0x150] sm:$0xff] %v184
                %v186 = vld [vmem:[%s126 + $0x27c] sm:$0xff]
                %187 = vst [vmem:[%s127 + $0x15c] sm:$0xff] %v186
                %v188 = vld [vmem:[%s126 + $0x288] sm:$0xff]
                %189 = vst [vmem:[%s127 + $0x168] sm:$0xff] %v188
                %v190 = vld [vmem:[%s126 + $0x294] sm:$0xff]
                %191 = vst [vmem:[%s127 + $0x174] sm:$0xff] %v190
              $region37: #{native_cnn_forward.4} parent=31 // loop_footer
                %s125 = sadd.s32 1, %s121
              $region38: #{native_cnn_forward.4} parent=31 // loop_footer_branch
                %120 = sbr.rel target = $region34
              $region39: #{native_cnn_forward.4} parent=31 // loop_exit
                _
              loop: start=0, step=1, limit=1
              $region40: #{native_cnn_forward.4} parent=31 // loop_pre_header
                _
              $region41: #{native_cnn_forward.4} parent=31 // loop_header
                %s194 = sphi 0, %s198
                %p195 = scmp.ge.s32.totalorder %s194, 1
                %s199 = sphi %s118, %s118
                %s200 = sphi %s119, %s119
              $region42: #{native_cnn_forward.4} parent=31 // loop_header_branch
                %197 = sbr.rel (%p195) target = $region46
              $region43: #{native_cnn_forward.4} parent=31 // loop_body
                %v201 = vld [vmem:[%s199] sm:$0xf]
                %202 = vst [vmem:[%s200] sm:$0xf] %v201
                %v203 = vld [vmem:[%s199 + $0xc] sm:$0xf]
                %204 = vst [vmem:[%s200 + $0xc] sm:$0xf] %v203
                %v205 = vld [vmem:[%s199 + $0x18] sm:$0xf]
                %206 = vst [vmem:[%s200 + $0x18] sm:$0xf] %v205
                %v207 = vld [vmem:[%s199 + $0x24] sm:$0xf]
                %208 = vst [vmem:[%s200 + $0x24] sm:$0xf] %v207
                %v209 = vld [vmem:[%s199 + $0x30] sm:$0xf]
                %210 = vst [vmem:[%s200 + $0x30] sm:$0xf] %v209
                %v211 = vld [vmem:[%s199 + $0x3c] sm:$0xf]
                %212 = vst [vmem:[%s200 + $0x3c] sm:$0xf] %v211
                %v213 = vld [vmem:[%s199 + $0x48] sm:$0xf]
                %214 = vst [vmem:[%s200 + $0x48] sm:$0xf] %v213
                %v215 = vld [vmem:[%s199 + $0x54] sm:$0xf]
                %216 = vst [vmem:[%s200 + $0x54] sm:$0xf] %v215
                %v217 = vld [vmem:[%s199 + $0xc0] sm:$0xf]
                %218 = vst [vmem:[%s200 + $0x60] sm:$0xf] %v217
                %v219 = vld [vmem:[%s199 + $0xcc] sm:$0xf]
                %220 = vst [vmem:[%s200 + $0x6c] sm:$0xf] %v219
                %v221 = vld [vmem:[%s199 + $0xd8] sm:$0xf]
                %222 = vst [vmem:[%s200 + $0x78] sm:$0xf] %v221
                %v223 = vld [vmem:[%s199 + $0xe4] sm:$0xf]
                %224 = vst [vmem:[%s200 + $0x84] sm:$0xf] %v223
                %v225 = vld [vmem:[%s199 + $0xf0] sm:$0xf]
                %226 = vst [vmem:[%s200 + $0x90] sm:$0xf] %v225
                %v227 = vld [vmem:[%s199 + $0xfc] sm:$0xf]
                %228 = vst [vmem:[%s200 + $0x9c] sm:$0xf] %v227
                %v229 = vld [vmem:[%s199 + $0x108] sm:$0xf]
                %230 = vst [vmem:[%s200 + $0xa8] sm:$0xf] %v229
                %v231 = vld [vmem:[%s199 + $0x114] sm:$0xf]
                %232 = vst [vmem:[%s200 + $0xb4] sm:$0xf] %v231
                %v233 = vld [vmem:[%s199 + $0x180] sm:$0xf]
                %234 = vst [vmem:[%s200 + $0xc0] sm:$0xf] %v233
                %v235 = vld [vmem:[%s199 + $0x18c] sm:$0xf]
                %236 = vst [vmem:[%s200 + $0xcc] sm:$0xf] %v235
                %v237 = vld [vmem:[%s199 + $0x198] sm:$0xf]
                %238 = vst [vmem:[%s200 + $0xd8] sm:$0xf] %v237
                %v239 = vld [vmem:[%s199 + $0x1a4] sm:$0xf]
                %240 = vst [vmem:[%s200 + $0xe4] sm:$0xf] %v239
                %v241 = vld [vmem:[%s199 + $0x1b0] sm:$0xf]
                %242 = vst [vmem:[%s200 + $0xf0] sm:$0xf] %v241
                %v243 = vld [vmem:[%s199 + $0x1bc] sm:$0xf]
                %244 = vst [vmem:[%s200 + $0xfc] sm:$0xf] %v243
                %v245 = vld [vmem:[%s199 + $0x1c8] sm:$0xf]
                %246 = vst [vmem:[%s200 + $0x108] sm:$0xf] %v245
                %v247 = vld [vmem:[%s199 + $0x1d4] sm:$0xf]
                %248 = vst [vmem:[%s200 + $0x114] sm:$0xf] %v247
                %v249 = vld [vmem:[%s199 + $0x240] sm:$0xf]
                %250 = vst [vmem:[%s200 + $0x120] sm:$0xf] %v249
                %v251 = vld [vmem:[%s199 + $0x24c] sm:$0xf]
                %252 = vst [vmem:[%s200 + $0x12c] sm:$0xf] %v251
                %v253 = vld [vmem:[%s199 + $0x258] sm:$0xf]
                %254 = vst [vmem:[%s200 + $0x138] sm:$0xf] %v253
                %v255 = vld [vmem:[%s199 + $0x264] sm:$0xf]
                %256 = vst [vmem:[%s200 + $0x144] sm:$0xf] %v255
                %v257 = vld [vmem:[%s199 + $0x270] sm:$0xf]
                %258 = vst [vmem:[%s200 + $0x150] sm:$0xf] %v257
                %v259 = vld [vmem:[%s199 + $0x27c] sm:$0xf]
                %260 = vst [vmem:[%s200 + $0x15c] sm:$0xf] %v259
                %v261 = vld [vmem:[%s199 + $0x288] sm:$0xf]
                %262 = vst [vmem:[%s200 + $0x168] sm:$0xf] %v261
                %v263 = vld [vmem:[%s199 + $0x294] sm:$0xf]
                %264 = vst [vmem:[%s200 + $0x174] sm:$0xf] %v263
              $region44: #{native_cnn_forward.4} parent=31 // loop_footer
                %s198 = sadd.s32 1, %s194
              $region45: #{native_cnn_forward.4} parent=31 // loop_footer_branch
                %193 = sbr.rel target = $region41
              $region46: #{native_cnn_forward.4} parent=31 // loop_exit
                _
            $region32: #{native_cnn_forward.4} parent=27 // pred_fallthru
              _
          $region28: #{native_cnn_forward.4} parent=23 // pred_fallthru
            _
          %265 = vnop
        $region24: #{native_cnn_forward.4} parent=19 // pred_fallthru
          _
      $region20: #{native_cnn_forward.4} parent=5 // pred_fallthru
        _
      %p266 = scmp.le.s32.totalorder 1, %s8
      %p267 = scmp.lt.s32.totalorder %s8, 3
      %p268 = pnand %p266, %p267
      %p269 = pneg %p268
      // Predicated region
      $region47: #{native_cnn_forward.4} parent=5 // pred_check
        _
      $region48: #{native_cnn_forward.4} parent=5 // pred_check_branch
        %271 = sbr.rel (%p268) target = $region50
      $region49: #{native_cnn_forward.4} parent=5 // pred_region
        %s272 = ssub.s32 %s8, 1
        %s273 = sand.u32 %s21, 1
        %s274 = sand.u32 %s21, 1
        %s275 = smul.addr %s274, 384
        %s276 = scalar_lea.vmem [#allocation2], %s275
        // Predicated region
        $region51: #{native_cnn_forward.4} parent=49 // pred_check
          %p277 = pneg %p34
        $region52: #{native_cnn_forward.4} parent=49 // pred_check_branch
          %279 = sbr.rel (%p277) target = $region54
        $region53: #{native_cnn_forward.4} parent=49 // pred_region
          _
        $region54: #{native_cnn_forward.4} parent=49 // pred_fallthru
          _
        %s280 = sand.u32 %s21, 1
        %s281 = sand.u32 %s21, 1
        %s282 = smul.addr %s281, 384
        %s283 = scalar_lea.vmem [#allocation2], %s282
        %p284 = pneg %p34
        %p285 = pneg %p31
        %p286 = pneg %p55
        %p287 = pneg %p52
        %p288 = pneg %p81
        %p289 = pneg %p78
        %s290 = smul.u32 8, %s13
        %p291 = scmp.lt.s32.totalorder %s290, 15
        %s292 = scalar_select %p291, %s290, 15
        %s293 = smul.addr %s292, 4
        %s294 = scalar_lea.vmem %s2, %s293
        %s295 = smul.u32 8, %s13
        %s296 = smul.u32 8, %s13
        %p297 = scmp.lt.s32.totalorder %s296, 15
        %s298 = scalar_select %p297, %s296, 15
        %s299 = smul.addr %s298, 4
        %s300 = scalar_lea.vmem %s2, %s299
        %s301 = smul.u32 8, %s13
        %v303 = vld [vmem:[%s276] sm:$0xff]
        %v304 = vld [vmem:[%s276 + $0x8] sm:$0xf]
        %v305 = vld [vmem:[%s276 + $0xc] sm:$0xff]
        %v306 = vld [vmem:[%s276 + $0x14] sm:$0xf]
        %v307 = vld [vmem:[%s276 + $0x18] sm:$0xff]
        %v308 = vld [vmem:[%s276 + $0x20] sm:$0xf]
        %v309 = vld [vmem:[%s276 + $0x24] sm:$0xff]
        %v310 = vld [vmem:[%s276 + $0x2c] sm:$0xf]
        %v311 = vld [vmem:[%s276 + $0x30] sm:$0xff]
        %v312 = vld [vmem:[%s276 + $0x38] sm:$0xf]
        %v313 = vld [vmem:[%s276 + $0x3c] sm:$0xff]
        %v314 = vld [vmem:[%s276 + $0x44] sm:$0xf]
        %v315 = vld [vmem:[%s276 + $0x48] sm:$0xff]
        %v316 = vld [vmem:[%s276 + $0x50] sm:$0xf]
        %v317 = vld [vmem:[%s276 + $0x54] sm:$0xff]
        %v318 = vld [vmem:[%s276 + $0x5c] sm:$0xf]
        %v319 = vld [vmem:[%s276 + $0x60] sm:$0xff]
        %v320 = vld [vmem:[%s276 + $0x68] sm:$0xf]
        %v321 = vld [vmem:[%s276 + $0x6c] sm:$0xff]
        %v322 = vld [vmem:[%s276 + $0x74] sm:$0xf]
        %v323 = vld [vmem:[%s276 + $0x78] sm:$0xff]
        %v324 = vld [vmem:[%s276 + $0x80] sm:$0xf]
        %v325 = vld [vmem:[%s276 + $0x84] sm:$0xff]
        %v326 = vld [vmem:[%s276 + $0x8c] sm:$0xf]
        %v327 = vld [vmem:[%s276 + $0x90] sm:$0xff]
        %v328 = vld [vmem:[%s276 + $0x98] sm:$0xf]
        %v329 = vld [vmem:[%s276 + $0x9c] sm:$0xff]
        %v330 = vld [vmem:[%s276 + $0xa4] sm:$0xf]
        %v331 = vld [vmem:[%s276 + $0xa8] sm:$0xff]
        %v332 = vld [vmem:[%s276 + $0xb0] sm:$0xf]
        %v333 = vld [vmem:[%s276 + $0xb4] sm:$0xff]
        %v334 = vld [vmem:[%s276 + $0xbc] sm:$0xf]
        %v335 = vld [vmem:[%s276 + $0xc0] sm:$0xff]
        %v336 = vld [vmem:[%s276 + $0xc8] sm:$0xf]
        %v337 = vld [vmem:[%s276 + $0xcc] sm:$0xff]
        %v338 = vld [vmem:[%s276 + $0xd4] sm:$0xf]
        %v339 = vld [vmem:[%s276 + $0xd8] sm:$0xff]
        %v340 = vld [vmem:[%s276 + $0xe0] sm:$0xf]
        %v341 = vld [vmem:[%s276 + $0xe4] sm:$0xff]
        %v342 = vld [vmem:[%s276 + $0xec] sm:$0xf]
        %v343 = vld [vmem:[%s276 + $0xf0] sm:$0xff]
        %v344 = vld [vmem:[%s276 + $0xf8] sm:$0xf]
        %v345 = vld [vmem:[%s276 + $0xfc] sm:$0xff]
        %v346 = vld [vmem:[%s276 + $0x104] sm:$0xf]
        %v347 = vld [vmem:[%s276 + $0x108] sm:$0xff]
        %v348 = vld [vmem:[%s276 + $0x110] sm:$0xf]
        %v349 = vld [vmem:[%s276 + $0x114] sm:$0xff]
        %v350 = vld [vmem:[%s276 + $0x11c] sm:$0xf]
        %v351 = vld [vmem:[%s276 + $0x120] sm:$0xff]
        %v352 = vld [vmem:[%s276 + $0x128] sm:$0xf]
        %v353 = vld [vmem:[%s276 + $0x12c] sm:$0xff]
        %v354 = vld [vmem:[%s276 + $0x134] sm:$0xf]
        %v355 = vld [vmem:[%s276 + $0x138] sm:$0xff]
        %v356 = vld [vmem:[%s276 + $0x140] sm:$0xf]
        %v357 = vld [vmem:[%s276 + $0x144] sm:$0xff]
        %v358 = vld [vmem:[%s276 + $0x14c] sm:$0xf]
        %v359 = vld [vmem:[%s276 + $0x150] sm:$0xff]
        %v360 = vld [vmem:[%s276 + $0x158] sm:$0xf]
        %v361 = vld [vmem:[%s276 + $0x15c] sm:$0xff]
        %v362 = vld [vmem:[%s276 + $0x164] sm:$0xf]
        %v363 = vld [vmem:[%s276 + $0x168] sm:$0xff]
        %v364 = vld [vmem:[%s276 + $0x170] sm:$0xf]
        %v365 = vld [vmem:[%s276 + $0x174] sm:$0xff]
        %v366 = vld [vmem:[%s276 + $0x17c] sm:$0xf]
        %v367 = vld [vmem:[%s1] sm:$0xf]
        %v368 = vld [vmem:[%s1 + $0x4] sm:$0xf]
        %v369 = vld [vmem:[%s1 + $0x8] sm:$0xf]
        %v370 = vld [vmem:[%s1 + $0xc] sm:$0xf]
        %v371 = vld [vmem:[%s1 + $0x10] sm:$0xf]
        %v372 = vld [vmem:[%s1 + $0x14] sm:$0xf]
        %v373 = vld [vmem:[%s1 + $0x18] sm:$0xf]
        %v374 = vld [vmem:[%s1 + $0x1c] sm:$0xf]
        %v375 = vld [vmem:[%s1 + $0x20] sm:$0xf]
        %v376 = vld [vmem:[%s1 + $0x24] sm:$0xf]
        %v377 = vld [vmem:[%s1 + $0x28] sm:$0xf]
        %v378 = vld [vmem:[%s1 + $0x2c] sm:$0xf]
        %v379 = vld [vmem:[%s1 + $0x30] sm:$0xf]
        %v380 = vld [vmem:[%s1 + $0x34] sm:$0xf]
        %v381 = vld [vmem:[%s1 + $0x38] sm:$0xf]
        %v382 = vld [vmem:[%s1 + $0x3c] sm:$0xf]
        %v383 = vld [vmem:[%s1 + $0x40] sm:$0xf]
        %v384 = vld [vmem:[%s1 + $0x44] sm:$0xf]
        %v385 = vld [vmem:[%s1 + $0x48] sm:$0xf]
        %v386 = vld [vmem:[%s1 + $0x4c] sm:$0xf]
        %v387 = vld [vmem:[%s1 + $0x50] sm:$0xf]
        %v388 = vld [vmem:[%s1 + $0x54] sm:$0xf]
        %v389 = vld [vmem:[%s1 + $0x58] sm:$0xf]
        %v390 = vld [vmem:[%s1 + $0x5c] sm:$0xf]
        %v391 = vld [vmem:[%s1 + $0x60] sm:$0xf]
        %v392 = vld [vmem:[%s1 + $0x64] sm:$0xf]
        %v393 = vld [vmem:[%s1 + $0x68] sm:$0xf]
        %v394 = vld [vmem:[%s1 + $0x6c] sm:$0xf]
        %v395 = vld [vmem:[%s1 + $0x70] sm:$0xf]
        %v396 = vld [vmem:[%s1 + $0x74] sm:$0xf]
        %v397 = vld [vmem:[%s1 + $0x78] sm:$0xf]
        %v398 = vld [vmem:[%s1 + $0x7c] sm:$0xf]
        %v399 = vld [vmem:[%s1 + $0x80] sm:$0xf]
        %v400 = vld [vmem:[%s1 + $0x84] sm:$0xf]
        %v401 = vld [vmem:[%s1 + $0x88] sm:$0xf]
        %v402 = vld [vmem:[%s1 + $0x8c] sm:$0xf]
        %v467 = vunpack.c.l.b16 %v303
        %v468 = vunpack.c.h.b16 %v303
        %v469 = vunpack.c.l.b16 %v304
        %v470 = vunpack.c.l.b16 %v305
        %v471 = vunpack.c.h.b16 %v305
        %v472 = vunpack.c.l.b16 %v306
        %v473 = vunpack.c.l.b16 %v307
        %v474 = vunpack.c.h.b16 %v307
        %v475 = vunpack.c.l.b16 %v308
        %v476 = vunpack.c.l.b16 %v309
        %v477 = vunpack.c.h.b16 %v309
        %v478 = vunpack.c.l.b16 %v310
        %v479 = vunpack.c.l.b16 %v311
        %v480 = vunpack.c.h.b16 %v311
        %v481 = vunpack.c.l.b16 %v312
        %v482 = vunpack.c.l.b16 %v313
        %v483 = vunpack.c.h.b16 %v313
        %v484 = vunpack.c.l.b16 %v314
        %v485 = vunpack.c.l.b16 %v315
        %v486 = vunpack.c.h.b16 %v315
        %v487 = vunpack.c.l.b16 %v316
        %v488 = vunpack.c.l.b16 %v317
        %v489 = vunpack.c.h.b16 %v317
        %v490 = vunpack.c.l.b16 %v318
        %v491 = vunpack.c.l.b16 %v319
        %v492 = vunpack.c.h.b16 %v319
        %v493 = vunpack.c.l.b16 %v320
        %v494 = vunpack.c.l.b16 %v321
        %v495 = vunpack.c.h.b16 %v321
        %v496 = vunpack.c.l.b16 %v322
        %v497 = vunpack.c.l.b16 %v323
        %v498 = vunpack.c.h.b16 %v323
        %v499 = vunpack.c.l.b16 %v324
        %v500 = vunpack.c.l.b16 %v325
        %v501 = vunpack.c.h.b16 %v325
        %v502 = vunpack.c.l.b16 %v326
        %v503 = vunpack.c.l.b16 %v327
        %v504 = vunpack.c.h.b16 %v327
        %v505 = vunpack.c.l.b16 %v328
        %v506 = vunpack.c.l.b16 %v329
        %v507 = vunpack.c.h.b16 %v329
        %v508 = vunpack.c.l.b16 %v330
        %v509 = vunpack.c.l.b16 %v331
        %v510 = vunpack.c.h.b16 %v331
        %v511 = vunpack.c.l.b16 %v332
        %v512 = vunpack.c.l.b16 %v333
        %v513 = vunpack.c.h.b16 %v333
        %v514 = vunpack.c.l.b16 %v334
        %v515 = vunpack.c.l.b16 %v335
        %v516 = vunpack.c.h.b16 %v335
        %v517 = vunpack.c.l.b16 %v336
        %v518 = vunpack.c.l.b16 %v337
        %v519 = vunpack.c.h.b16 %v337
        %v520 = vunpack.c.l.b16 %v338
        %v521 = vunpack.c.l.b16 %v339
        %v522 = vunpack.c.h.b16 %v339
        %v523 = vunpack.c.l.b16 %v340
        %v524 = vunpack.c.l.b16 %v341
        %v525 = vunpack.c.h.b16 %v341
        %v526 = vunpack.c.l.b16 %v342
        %v527 = vunpack.c.l.b16 %v343
        %v528 = vunpack.c.h.b16 %v343
        %v529 = vunpack.c.l.b16 %v344
        %v530 = vunpack.c.l.b16 %v345
        %v531 = vunpack.c.h.b16 %v345
        %v532 = vunpack.c.l.b16 %v346
        %v533 = vunpack.c.l.b16 %v347
        %v534 = vunpack.c.h.b16 %v347
        %v535 = vunpack.c.l.b16 %v348
        %v536 = vunpack.c.l.b16 %v349
        %v537 = vunpack.c.h.b16 %v349
        %v538 = vunpack.c.l.b16 %v350
        %v539 = vunpack.c.l.b16 %v351
        %v540 = vunpack.c.h.b16 %v351
        %v541 = vunpack.c.l.b16 %v352
        %v542 = vunpack.c.l.b16 %v353
        %v543 = vunpack.c.h.b16 %v353
        %v544 = vunpack.c.l.b16 %v354
        %v545 = vunpack.c.l.b16 %v355
        %v546 = vunpack.c.h.b16 %v355
        %v547 = vunpack.c.l.b16 %v356
        %v548 = vunpack.c.l.b16 %v357
        %v549 = vunpack.c.h.b16 %v357
        %v550 = vunpack.c.l.b16 %v358
        %v551 = vunpack.c.l.b16 %v359
        %v552 = vunpack.c.h.b16 %v359
        %v553 = vunpack.c.l.b16 %v360
        %v554 = vunpack.c.l.b16 %v361
        %v555 = vunpack.c.h.b16 %v361
        %v556 = vunpack.c.l.b16 %v362
        %v557 = vunpack.c.l.b16 %v363
        %v558 = vunpack.c.h.b16 %v363
        %v559 = vunpack.c.l.b16 %v364
        %v560 = vunpack.c.l.b16 %v365
        %v561 = vunpack.c.h.b16 %v365
        %v562 = vunpack.c.l.b16 %v366
        %v563 = vpack.c.b16 %v470, %v467
        %v564 = vpack.c.b16 %v471, %v468
        %v565 = vpack.c.b16 %v472, %v469
        %v566 = vpack.c.b16 %v476, %v473
        %v567 = vpack.c.b16 %v477, %v474
        %v568 = vpack.c.b16 %v478, %v475
        %v569 = vpack.c.b16 %v482, %v479
        %v570 = vpack.c.b16 %v483, %v480
        %v571 = vpack.c.b16 %v484, %v481
        %v572 = vpack.c.b16 %v488, %v485
        %v573 = vpack.c.b16 %v489, %v486
        %v574 = vpack.c.b16 %v490, %v487
        %v575 = vpack.c.b16 %v494, %v491
        %v576 = vpack.c.b16 %v495, %v492
        %v577 = vpack.c.b16 %v496, %v493
        %v578 = vpack.c.b16 %v500, %v497
        %v579 = vpack.c.b16 %v501, %v498
        %v580 = vpack.c.b16 %v502, %v499
        %v581 = vpack.c.b16 %v506, %v503
        %v582 = vpack.c.b16 %v507, %v504
        %v583 = vpack.c.b16 %v508, %v505
        %v584 = vpack.c.b16 %v512, %v509
        %v585 = vpack.c.b16 %v513, %v510
        %v586 = vpack.c.b16 %v514, %v511
        %v587 = vpack.c.b16 %v518, %v515
        %v588 = vpack.c.b16 %v519, %v516
        %v589 = vpack.c.b16 %v520, %v517
        %v590 = vpack.c.b16 %v524, %v521
        %v591 = vpack.c.b16 %v525, %v522
        %v592 = vpack.c.b16 %v526, %v523
        %v593 = vpack.c.b16 %v530, %v527
        %v594 = vpack.c.b16 %v531, %v528
        %v595 = vpack.c.b16 %v532, %v529
        %v596 = vpack.c.b16 %v536, %v533
        %v597 = vpack.c.b16 %v537, %v534
        %v598 = vpack.c.b16 %v538, %v535
        %v599 = vpack.c.b16 %v542, %v539
        %v600 = vpack.c.b16 %v543, %v540
        %v601 = vpack.c.b16 %v544, %v541
        %v602 = vpack.c.b16 %v548, %v545
        %v603 = vpack.c.b16 %v549, %v546
        %v604 = vpack.c.b16 %v550, %v547
        %v605 = vpack.c.b16 %v554, %v551
        %v606 = vpack.c.b16 %v555, %v552
        %v607 = vpack.c.b16 %v556, %v553
        %v608 = vpack.c.b16 %v560, %v557
        %v609 = vpack.c.b16 %v561, %v558
        %v610 = vpack.c.b16 %v562, %v559
        %v679 = vunpack.c.l.b16 %v367
        %v680 = vunpack.c.l.b16 %v368
        %v681 = vunpack.c.l.b16 %v369
        %v682 = vunpack.c.l.b16 %v370
        %v683 = vunpack.c.l.b16 %v371
        %v684 = vunpack.c.l.b16 %v372
        %v685 = vunpack.c.l.b16 %v373
        %v686 = vunpack.c.l.b16 %v374
        %v687 = vunpack.c.l.b16 %v375
        %v688 = vunpack.c.l.b16 %v376
        %v689 = vunpack.c.l.b16 %v377
        %v690 = vunpack.c.l.b16 %v378
        %v691 = vunpack.c.l.b16 %v379
        %v692 = vunpack.c.l.b16 %v380
        %v693 = vunpack.c.l.b16 %v381
        %v694 = vunpack.c.l.b16 %v382
        %v695 = vunpack.c.l.b16 %v383
        %v696 = vunpack.c.l.b16 %v384
        %v697 = vunpack.c.l.b16 %v385
        %v698 = vunpack.c.l.b16 %v386
        %v699 = vunpack.c.l.b16 %v387
        %v700 = vunpack.c.l.b16 %v388
        %v701 = vunpack.c.l.b16 %v389
        %v702 = vunpack.c.l.b16 %v390
        %v703 = vunpack.c.l.b16 %v391
        %v704 = vunpack.c.l.b16 %v392
        %v705 = vunpack.c.l.b16 %v393
        %v706 = vunpack.c.l.b16 %v394
        %v707 = vunpack.c.l.b16 %v395
        %v708 = vunpack.c.l.b16 %v396
        %v709 = vunpack.c.l.b16 %v397
        %v710 = vunpack.c.l.b16 %v398
        %v711 = vunpack.c.l.b16 %v399
        %v712 = vunpack.c.l.b16 %v400
        %v713 = vunpack.c.l.b16 %v401
        %v714 = vunpack.c.l.b16 %v402
        %v715 = vpack.c.b16 %v680, %v679
        %v716 = vpack.c.b16 %v682, %v681
        %v717 = vpack.c.b16 %v684, %v683
        %v718 = vpack.c.b16 %v686, %v685
        %v719 = vpack.c.b16 %v688, %v687
        %v720 = vpack.c.b16 %v690, %v689
        %v721 = vpack.c.b16 %v692, %v691
        %v722 = vpack.c.b16 %v694, %v693
        %v723 = vpack.c.b16 %v696, %v695
        %v724 = vpack.c.b16 %v698, %v697
        %v725 = vpack.c.b16 %v700, %v699
        %v726 = vpack.c.b16 %v702, %v701
        %v727 = vpack.c.b16 %v704, %v703
        %v728 = vpack.c.b16 %v706, %v705
        %v729 = vpack.c.b16 %v708, %v707
        %v730 = vpack.c.b16 %v710, %v709
        %v731 = vpack.c.b16 %v712, %v711
        %v732 = vpack.c.b16 %v714, %v713
        %vm751 = vcmask 261120
        %v753 = vsel %vm751, %v565, 0
        %v756 = vsel %vm751, %v568, 0
        %v759 = vsel %vm751, %v571, 0
        %v762 = vsel %vm751, %v574, 0
        %v765 = vsel %vm751, %v577, 0
        %v768 = vsel %vm751, %v580, 0
        %v771 = vsel %vm751, %v583, 0
        %v774 = vsel %vm751, %v586, 0
        %v777 = vsel %vm751, %v589, 0
        %v780 = vsel %vm751, %v592, 0
        %v783 = vsel %vm751, %v595, 0
        %v786 = vsel %vm751, %v598, 0
        %v789 = vsel %vm751, %v601, 0
        %v792 = vsel %vm751, %v604, 0
        %v795 = vsel %vm751, %v607, 0
        %v798 = vsel %vm751, %v610, 0
        %800 = vmatprep.subr.bf16.mxu0 0
        %801 = vmatpush1.bf16.msra.mxu0 %v715
        %802 = vmatprep.subr.bf16.mxu0 0
        %803 = vmatpush1.bf16.msra.mxu0 %v716
        %804 = vmatprep.subr.bf16.mxu0 0
        %805 = vmatpush1.bf16.msra.mxu0 %v717
        %806 = vmatprep.subr.bf16.mxu0 0
        %807 = vmatpush1.bf16.msra.mxu0 %v718
        %808 = vmatprep.subr.bf16.mxu0 0
        %809 = vmatpush1.bf16.msra.mxu0 %v719
        %810 = vmatprep.subr.bf16.mxu0 0
        %811 = vmatpush1.bf16.msra.mxu0 %v720
        %812 = vmatprep.subr.bf16.mxu0 0
        %813 = vmatpush1.bf16.msra.mxu0 %v721
        %814 = vmatprep.subr.bf16.mxu0 0
        %815 = vmatpush1.bf16.msra.mxu0 %v722
        %816 = vmatprep.subr.bf16.mxu0 0
        %817 = vmatpush1.bf16.msra.mxu0 %v723
        %818 = vmatprep.subr.bf16.mxu0 0
        %819 = vmatpush1.bf16.msra.mxu0 %v724
        %820 = vmatprep.subr.bf16.mxu0 0
        %821 = vmatpush1.bf16.msra.mxu0 %v725
        %822 = vmatprep.subr.bf16.mxu0 0
        %823 = vmatpush1.bf16.msra.mxu0 %v726
        %824 = vmatprep.subr.bf16.mxu0 0
        %825 = vmatpush1.bf16.msra.mxu0 %v727
        %826 = vmatprep.subr.bf16.mxu0 0
        %827 = vmatpush1.bf16.msra.mxu0 %v728
        %828 = vmatprep.subr.bf16.mxu0 0
        %829 = vmatpush1.bf16.msra.mxu0 %v729
        %830 = vmatprep.subr.bf16.mxu0 0
        %831 = vmatpush1.bf16.msra.mxu0 %v730
        %832 = vmatprep.mubr.bf16.mxu0 %v564
        %833 = vmatmul.mubr.bf16.gmra.mrb[0].mxu0 %v563
        %v834 = vpop.f32.mrb[0].mxu0
        %v835 = vadd.f32 0.0, %v834
        %v836 = vpop.f32.mrb[0].mxu0
        %v837 = vpop.f32.mrb[0].mxu0
        %v838 = vadd.f32 0.0, %v837
        %v839 = vpop.f32.mrb[0].mxu0
        %840 = vmatprep.mubr.bf16.mxu0 %v567
        %841 = vmatmul.mubr.bf16.gmra.mrb[0].mxu0 %v566
        %v842 = vpop.f32.mrb[0].mxu0
        %v843 = vadd.f32 0.0, %v842
        %v844 = vpop.f32.mrb[0].mxu0
        %v845 = vpop.f32.mrb[0].mxu0
        %v846 = vadd.f32 0.0, %v845
        %v847 = vpop.f32.mrb[0].mxu0
        %848 = vmatprep.mubr.bf16.mxu0 %v570
        %849 = vmatmul.mubr.bf16.gmra.mrb[0].mxu0 %v569
        %v850 = vpop.f32.mrb[0].mxu0
        %v851 = vadd.f32 0.0, %v850
        %v852 = vpop.f32.mrb[0].mxu0
        %v853 = vpop.f32.mrb[0].mxu0
        %v854 = vadd.f32 0.0, %v853
        %v855 = vpop.f32.mrb[0].mxu0
        %856 = vmatprep.mubr.bf16.mxu0 %v573
        %857 = vmatmul.mubr.bf16.gmra.mrb[0].mxu0 %v572
        %v858 = vpop.f32.mrb[0].mxu0
        %v859 = vadd.f32 0.0, %v858
        %v860 = vpop.f32.mrb[0].mxu0
        %v861 = vpop.f32.mrb[0].mxu0
        %v862 = vadd.f32 0.0, %v861
        %v863 = vpop.f32.mrb[0].mxu0
        %864 = vmatprep.mubr.bf16.mxu0 %v576
        %865 = vmatmul.mubr.bf16.gmra.mrb[0].mxu0 %v575
        %v866 = vpop.f32.mrb[0].mxu0
        %v867 = vadd.f32 0.0, %v866
        %v868 = vpop.f32.mrb[0].mxu0
        %v869 = vpop.f32.mrb[0].mxu0
        %v870 = vadd.f32 0.0, %v869
        %v871 = vpop.f32.mrb[0].mxu0
        %872 = vmatprep.mubr.bf16.mxu0 %v579
        %873 = vmatmul.mubr.bf16.gmra.mrb[0].mxu0 %v578
        %v874 = vpop.f32.mrb[0].mxu0
        %v875 = vadd.f32 0.0, %v874
        %v876 = vpop.f32.mrb[0].mxu0
        %v877 = vpop.f32.mrb[0].mxu0
        %v878 = vadd.f32 0.0, %v877
        %v879 = vpop.f32.mrb[0].mxu0
        %880 = vmatprep.mubr.bf16.mxu0 %v582
        %881 = vmatmul.mubr.bf16.gmra.mrb[0].mxu0 %v581
        %v882 = vpop.f32.mrb[0].mxu0
        %v883 = vadd.f32 0.0, %v882
        %v884 = vpop.f32.mrb[0].mxu0
        %v885 = vpop.f32.mrb[0].mxu0
        %v886 = vadd.f32 0.0, %v885
        %v887 = vpop.f32.mrb[0].mxu0
        %888 = vmatprep.mubr.bf16.mxu0 %v585
        %889 = vmatmul.mubr.bf16.gmra.mrb[0].mxu0 %v584
        %v890 = vpop.f32.mrb[0].mxu0
        %v891 = vadd.f32 0.0, %v890
        %v892 = vpop.f32.mrb[0].mxu0
        %v893 = vpop.f32.mrb[0].mxu0
        %v894 = vadd.f32 0.0, %v893
        %v895 = vpop.f32.mrb[0].mxu0
        %896 = vmatprep.mubr.bf16.mxu0 %v588
        %897 = vmatmul.mubr.bf16.gmra.mrb[0].mxu0 %v587
        %v898 = vpop.f32.mrb[0].mxu0
        %v899 = vadd.f32 0.0, %v898
        %v900 = vpop.f32.mrb[0].mxu0
        %v901 = vpop.f32.mrb[0].mxu0
        %v902 = vadd.f32 0.0, %v901
        %v903 = vpop.f32.mrb[0].mxu0
        %904 = vmatprep.mubr.bf16.mxu0 %v591
        %905 = vmatmul.mubr.bf16.gmra.mrb[0].mxu0 %v590
        %v906 = vpop.f32.mrb[0].mxu0
        %v907 = vadd.f32 0.0, %v906
        %v908 = vpop.f32.mrb[0].mxu0
        %v909 = vpop.f32.mrb[0].mxu0
        %v910 = vadd.f32 0.0, %v909
        %v911 = vpop.f32.mrb[0].mxu0
        %912 = vmatprep.mubr.bf16.mxu0 %v594
        %913 = vmatmul.mubr.bf16.gmra.mrb[0].mxu0 %v593
        %v914 = vpop.f32.mrb[0].mxu0
        %v915 = vadd.f32 0.0, %v914
        %v916 = vpop.f32.mrb[0].mxu0
        %v917 = vpop.f32.mrb[0].mxu0
        %v918 = vadd.f32 0.0, %v917
        %v919 = vpop.f32.mrb[0].mxu0
        %920 = vmatprep.mubr.bf16.mxu0 %v597
        %921 = vmatmul.mubr.bf16.gmra.mrb[0].mxu0 %v596
        %v922 = vpop.f32.mrb[0].mxu0
        %v923 = vadd.f32 0.0, %v922
        %v924 = vpop.f32.mrb[0].mxu0
        %v925 = vpop.f32.mrb[0].mxu0
        %v926 = vadd.f32 0.0, %v925
        %v927 = vpop.f32.mrb[0].mxu0
        %928 = vmatprep.mubr.bf16.mxu0 %v600
        %929 = vmatmul.mubr.bf16.gmra.mrb[0].mxu0 %v599
        %v930 = vpop.f32.mrb[0].mxu0
        %v931 = vadd.f32 0.0, %v930
        %v932 = vpop.f32.mrb[0].mxu0
        %v933 = vpop.f32.mrb[0].mxu0
        %v934 = vadd.f32 0.0, %v933
        %v935 = vpop.f32.mrb[0].mxu0
        %936 = vmatprep.mubr.bf16.mxu0 %v603
        %937 = vmatmul.mubr.bf16.gmra.mrb[0].mxu0 %v602
        %v938 = vpop.f32.mrb[0].mxu0
        %v939 = vadd.f32 0.0, %v938
        %v940 = vpop.f32.mrb[0].mxu0
        %v941 = vpop.f32.mrb[0].mxu0
        %v942 = vadd.f32 0.0, %v941
        %v943 = vpop.f32.mrb[0].mxu0
        %944 = vmatprep.mubr.bf16.mxu0 %v606
        %945 = vmatmul.mubr.bf16.gmra.mrb[0].mxu0 %v605
        %v946 = vpop.f32.mrb[0].mxu0
        %v947 = vadd.f32 0.0, %v946
        %v948 = vpop.f32.mrb[0].mxu0
        %v949 = vpop.f32.mrb[0].mxu0
        %v950 = vadd.f32 0.0, %v949
        %v951 = vpop.f32.mrb[0].mxu0
        %952 = vmatprep.mubr.bf16.mxu0 %v609
        %953 = vmatmul.mubr.bf16.gmra.mrb[0].mxu0 %v608
        %v954 = vpop.f32.mrb[0].mxu0
        %v955 = vadd.f32 0.0, %v954
        %v956 = vpop.f32.mrb[0].mxu0
        %v957 = vpop.f32.mrb[0].mxu0
        %v958 = vadd.f32 0.0, %v957
        %v959 = vpop.f32.mrb[0].mxu0
        %960 = vdwg.mxu0
        %961 = vmatprep.subr.bf16.mxu0 0
        %962 = vmatpush1.bf16.msra.mxu0 %v731
        %963 = vmatprep.subr.bf16.mxu0 0
        %964 = vmatpush1.bf16.msra.mxu0 %v732
        %965 = vmatprep.subr.bf16.mxu0 0
        %966 = vmatpush1.bf16.msra.mxu0 0
        %967 = vmatprep.subr.bf16.mxu0 0
        %968 = vmatpush1.bf16.msra.mxu0 0
        %969 = vmatprep.subr.bf16.mxu0 0
        %970 = vmatpush1.bf16.msra.mxu0 0
        %971 = vmatprep.subr.bf16.mxu0 0
        %972 = vmatpush1.bf16.msra.mxu0 0
        %973 = vmatprep.subr.bf16.mxu0 0
        %974 = vmatpush1.bf16.msra.mxu0 0
        %975 = vmatprep.subr.bf16.mxu0 0
        %976 = vmatpush1.bf16.msra.mxu0 0
        %977 = vmatprep.subr.bf16.mxu0 0
        %978 = vmatpush1.bf16.msra.mxu0 0
        %979 = vmatprep.subr.bf16.mxu0 0
        %980 = vmatpush1.bf16.msra.mxu0 0
        %981 = vmatprep.subr.bf16.mxu0 0
        %982 = vmatpush1.bf16.msra.mxu0 0
        %983 = vmatprep.subr.bf16.mxu0 0
        %984 = vmatpush1.bf16.msra.mxu0 0
        %985 = vmatprep.subr.bf16.mxu0 0
        %986 = vmatpush1.bf16.msra.mxu0 0
        %987 = vmatprep.subr.bf16.mxu0 0
        %988 = vmatpush1.bf16.msra.mxu0 0
        %989 = vmatprep.subr.bf16.mxu0 0
        %990 = vmatpush1.bf16.msra.mxu0 0
        %991 = vmatprep.subr.bf16.mxu0 0
        %992 = vmatpush1.bf16.msra.mxu0 0
        %993 = vmatprep.mubr.bf16.mxu0 0
        %994 = vmatmul.mubr.bf16.gmra.mrb[0].mxu0 %v753
        %v995 = vpop.f32.mrb[0].mxu0
        %v996 = vadd.f32 %v835, %v995
        %v997 = vpop.f32.mrb[0].mxu0
        %v998 = vpop.f32.mrb[0].mxu0
        %v999 = vadd.f32 %v838, %v998
        %v1000 = vpop.f32.mrb[0].mxu0
        %1001 = vmatprep.mubr.bf16.mxu0 0
        %1002 = vmatmul.mubr.bf16.gmra.mrb[0].mxu0 %v756
        %v1003 = vpop.f32.mrb[0].mxu0
        %v1004 = vadd.f32 %v843, %v1003
        %v1005 = vpop.f32.mrb[0].mxu0
        %v1006 = vpop.f32.mrb[0].mxu0
        %v1007 = vadd.f32 %v846, %v1006
        %v1008 = vpop.f32.mrb[0].mxu0
        %1009 = vmatprep.mubr.bf16.mxu0 0
        %1010 = vmatmul.mubr.bf16.gmra.mrb[0].mxu0 %v759
        %v1011 = vpop.f32.mrb[0].mxu0
        %v1012 = vadd.f32 %v851, %v1011
        %v1013 = vpop.f32.mrb[0].mxu0
        %v1014 = vpop.f32.mrb[0].mxu0
        %v1015 = vadd.f32 %v854, %v1014
        %v1016 = vpop.f32.mrb[0].mxu0
        %1017 = vmatprep.mubr.bf16.mxu0 0
        %1018 = vmatmul.mubr.bf16.gmra.mrb[0].mxu0 %v762
        %v1019 = vpop.f32.mrb[0].mxu0
        %v1020 = vadd.f32 %v859, %v1019
        %v1021 = vpop.f32.mrb[0].mxu0
        %v1022 = vpop.f32.mrb[0].mxu0
        %v1023 = vadd.f32 %v862, %v1022
        %v1024 = vpop.f32.mrb[0].mxu0
        %1025 = vmatprep.mubr.bf16.mxu0 0
        %1026 = vmatmul.mubr.bf16.gmra.mrb[0].mxu0 %v765
        %v1027 = vpop.f32.mrb[0].mxu0
        %v1028 = vadd.f32 %v867, %v1027
        %v1029 = vpop.f32.mrb[0].mxu0
        %v1030 = vpop.f32.mrb[0].mxu0
        %v1031 = vadd.f32 %v870, %v1030
        %v1032 = vpop.f32.mrb[0].mxu0
        %1033 = vmatprep.mubr.bf16.mxu0 0
        %1034 = vmatmul.mubr.bf16.gmra.mrb[0].mxu0 %v768
        %v1035 = vpop.f32.mrb[0].mxu0
        %v1036 = vadd.f32 %v875, %v1035
        %v1037 = vpop.f32.mrb[0].mxu0
        %v1038 = vpop.f32.mrb[0].mxu0
        %v1039 = vadd.f32 %v878, %v1038
        %v1040 = vpop.f32.mrb[0].mxu0
        %1041 = vmatprep.mubr.bf16.mxu0 0
        %1042 = vmatmul.mubr.bf16.gmra.mrb[0].mxu0 %v771
        %v1043 = vpop.f32.mrb[0].mxu0
        %v1044 = vadd.f32 %v883, %v1043
        %v1045 = vpop.f32.mrb[0].mxu0
        %v1046 = vpop.f32.mrb[0].mxu0
        %v1047 = vadd.f32 %v886, %v1046
        %v1048 = vpop.f32.mrb[0].mxu0
        %1049 = vmatprep.mubr.bf16.mxu0 0
        %1050 = vmatmul.mubr.bf16.gmra.mrb[0].mxu0 %v774
        %v1051 = vpop.f32.mrb[0].mxu0
        %v1052 = vadd.f32 %v891, %v1051
        %v1053 = vpop.f32.mrb[0].mxu0
        %v1054 = vpop.f32.mrb[0].mxu0
        %v1055 = vadd.f32 %v894, %v1054
        %v1056 = vpop.f32.mrb[0].mxu0
        %1057 = vmatprep.mubr.bf16.mxu0 0
        %1058 = vmatmul.mubr.bf16.gmra.mrb[0].mxu0 %v777
        %v1059 = vpop.f32.mrb[0].mxu0
        %v1060 = vadd.f32 %v899, %v1059
        %v1061 = vpop.f32.mrb[0].mxu0
        %v1062 = vpop.f32.mrb[0].mxu0
        %v1063 = vadd.f32 %v902, %v1062
        %v1064 = vpop.f32.mrb[0].mxu0
        %1065 = vmatprep.mubr.bf16.mxu0 0
        %1066 = vmatmul.mubr.bf16.gmra.mrb[0].mxu0 %v780
        %v1067 = vpop.f32.mrb[0].mxu0
        %v1068 = vadd.f32 %v907, %v1067
        %v1069 = vpop.f32.mrb[0].mxu0
        %v1070 = vpop.f32.mrb[0].mxu0
        %v1071 = vadd.f32 %v910, %v1070
        %v1072 = vpop.f32.mrb[0].mxu0
        %1073 = vmatprep.mubr.bf16.mxu0 0
        %1074 = vmatmul.mubr.bf16.gmra.mrb[0].mxu0 %v783
        %v1075 = vpop.f32.mrb[0].mxu0
        %v1076 = vadd.f32 %v915, %v1075
        %v1077 = vpop.f32.mrb[0].mxu0
        %v1078 = vpop.f32.mrb[0].mxu0
        %v1079 = vadd.f32 %v918, %v1078
        %v1080 = vpop.f32.mrb[0].mxu0
        %1081 = vmatprep.mubr.bf16.mxu0 0
        %1082 = vmatmul.mubr.bf16.gmra.mrb[0].mxu0 %v786
        %v1083 = vpop.f32.mrb[0].mxu0
        %v1084 = vadd.f32 %v923, %v1083
        %v1085 = vpop.f32.mrb[0].mxu0
        %v1086 = vpop.f32.mrb[0].mxu0
        %v1087 = vadd.f32 %v926, %v1086
        %v1088 = vpop.f32.mrb[0].mxu0
        %1089 = vmatprep.mubr.bf16.mxu0 0
        %1090 = vmatmul.mubr.bf16.gmra.mrb[0].mxu0 %v789
        %v1091 = vpop.f32.mrb[0].mxu0
        %v1092 = vadd.f32 %v931, %v1091
        %v1093 = vpop.f32.mrb[0].mxu0
        %v1094 = vpop.f32.mrb[0].mxu0
        %v1095 = vadd.f32 %v934, %v1094
        %v1096 = vpop.f32.mrb[0].mxu0
        %1097 = vmatprep.mubr.bf16.mxu0 0
        %1098 = vmatmul.mubr.bf16.gmra.mrb[0].mxu0 %v792
        %v1099 = vpop.f32.mrb[0].mxu0
        %v1100 = vadd.f32 %v939, %v1099
        %v1101 = vpop.f32.mrb[0].mxu0
        %v1102 = vpop.f32.mrb[0].mxu0
        %v1103 = vadd.f32 %v942, %v1102
        %v1104 = vpop.f32.mrb[0].mxu0
        %1105 = vmatprep.mubr.bf16.mxu0 0
        %1106 = vmatmul.mubr.bf16.gmra.mrb[0].mxu0 %v795
        %v1107 = vpop.f32.mrb[0].mxu0
        %v1108 = vadd.f32 %v947, %v1107
        %v1109 = vpop.f32.mrb[0].mxu0
        %v1110 = vpop.f32.mrb[0].mxu0
        %v1111 = vadd.f32 %v950, %v1110
        %v1112 = vpop.f32.mrb[0].mxu0
        %1113 = vmatprep.mubr.bf16.mxu0 0
        %1114 = vmatmul.mubr.bf16.gmra.mrb[0].mxu0 %v798
        %v1115 = vpop.f32.mrb[0].mxu0
        %v1116 = vadd.f32 %v955, %v1115
        %v1117 = vpop.f32.mrb[0].mxu0
        %v1118 = vpop.f32.mrb[0].mxu0
        %v1119 = vadd.f32 %v958, %v1118
        %v1120 = vpop.f32.mrb[0].mxu0
        %1121 = vdwg.mxu0
        %v1122 = vmax.f32 %v996, 0.0
        %v1123 = vmax.f32 %v999, 0.0
        %v1124 = vmax.f32 %v1004, 0.0
        %v1125 = vmax.f32 %v1007, 0.0
        %v1126 = vmax.f32 %v1012, 0.0
        %v1127 = vmax.f32 %v1015, 0.0
        %v1128 = vmax.f32 %v1020, 0.0
        %v1129 = vmax.f32 %v1023, 0.0
        %v1130 = vmax.f32 %v1028, 0.0
        %v1131 = vmax.f32 %v1031, 0.0
        %v1132 = vmax.f32 %v1036, 0.0
        %v1133 = vmax.f32 %v1039, 0.0
        %v1134 = vmax.f32 %v1044, 0.0
        %v1135 = vmax.f32 %v1047, 0.0
        %v1136 = vmax.f32 %v1052, 0.0
        %v1137 = vmax.f32 %v1055, 0.0
        %v1138 = vmax.f32 %v1060, 0.0
        %v1139 = vmax.f32 %v1063, 0.0
        %v1140 = vmax.f32 %v1068, 0.0
        %v1141 = vmax.f32 %v1071, 0.0
        %v1142 = vmax.f32 %v1076, 0.0
        %v1143 = vmax.f32 %v1079, 0.0
        %v1144 = vmax.f32 %v1084, 0.0
        %v1145 = vmax.f32 %v1087, 0.0
        %v1146 = vmax.f32 %v1092, 0.0
        %v1147 = vmax.f32 %v1095, 0.0
        %v1148 = vmax.f32 %v1100, 0.0
        %v1149 = vmax.f32 %v1103, 0.0
        %v1150 = vmax.f32 %v1108, 0.0
        %v1151 = vmax.f32 %v1111, 0.0
        %v1152 = vmax.f32 %v1116, 0.0
        %v1153 = vmax.f32 %v1119, 0.0
        %v1154 = vmax.f32 %v1122, %v1130
        %v1155 = vmax.f32 %v1123, %v1131
        %v1156 = vmax.f32 %v1124, %v1132
        %v1157 = vmax.f32 %v1125, %v1133
        %v1158 = vmax.f32 %v1126, %v1134
        %v1159 = vmax.f32 %v1127, %v1135
        %v1160 = vmax.f32 %v1128, %v1136
        %v1161 = vmax.f32 %v1129, %v1137
        %v1162 = vmax.f32 %v1138, %v1146
        %v1163 = vmax.f32 %v1139, %v1147
        %v1164 = vmax.f32 %v1140, %v1148
        %v1165 = vmax.f32 %v1141, %v1149
        %v1166 = vmax.f32 %v1142, %v1150
        %v1167 = vmax.f32 %v1143, %v1151
        %v1168 = vmax.f32 %v1144, %v1152
        %v1169 = vmax.f32 %v1145, %v1153
        %v1170 = vmax.f32 %v1154, %v1162
        %v1171 = vmax.f32 %v1155, %v1163
        %v1172 = vmax.f32 %v1156, %v1164
        %v1173 = vmax.f32 %v1157, %v1165
        %v1174 = vmax.f32 %v1158, %v1166
        %v1175 = vmax.f32 %v1159, %v1167
        %v1176 = vmax.f32 %v1160, %v1168
        %v1177 = vmax.f32 %v1161, %v1169
        %v1178 = vpack.c.bf16 %v1171, %v1170
        %v1179 = vpack.c.bf16 %v1173, %v1172
        %v1180 = vpack.c.bf16 %v1175, %v1174
        %v1181 = vpack.c.bf16 %v1177, %v1176
        %v1186 = vunpack.c.l.b16 %v1178
        %v1187 = vunpack.c.h.b16 %v1178
        %v1188 = vunpack.c.l.b16 %v1179
        %v1189 = vunpack.c.h.b16 %v1179
        %v1190 = vunpack.c.l.b16 %v1180
        %v1191 = vunpack.c.h.b16 %v1180
        %v1192 = vunpack.c.l.b16 %v1181
        %v1193 = vunpack.c.h.b16 %v1181
        %v1194 = vpack.c.b16 %v1186, %v1186
        %v1195 = vpack.c.b16 %v1187, %v1187
        %v1196 = vpack.c.b16 %v1188, %v1188
        %v1197 = vpack.c.b16 %v1189, %v1189
        %v1198 = vpack.c.b16 %v1190, %v1190
        %v1199 = vpack.c.b16 %v1191, %v1191
        %v1200 = vpack.c.b16 %v1192, %v1192
        %v1201 = vpack.c.b16 %v1193, %v1193
        %1210 = vst [vmem:[%s300] sm:$0xf] %v1194
        %1211 = vst [vmem:[%s300 + $0x4] sm:$0xf] %v1195
        %1212 = vst [vmem:[%s300 + $0x8] sm:$0xf] %v1196
        %1213 = vst [vmem:[%s300 + $0xc] sm:$0xf] %v1197
        %1214 = vst [vmem:[%s300 + $0x10] sm:$0xf] %v1198
        %1215 = vst [vmem:[%s300 + $0x14] sm:$0xf] %v1199
        %1216 = vst [vmem:[%s300 + $0x18] sm:$0xf] %v1200
        %1217 = vst [vmem:[%s300 + $0x1c] sm:$0xf] %v1201
        %s1218 = smul.u32 8, %s13
        %p1219 = scmp.lt.s32.totalorder %s1218, 15
        %s1220 = scalar_select %p1219, %s1218, 15
        %s1221 = smul.addr %s1220, 4
        %s1222 = scalar_lea.vmem %s2, %s1221
        // Predicated region
        $region55: #{native_cnn_forward.4} parent=49 // pred_check
          %p1223 = pneg %p78
        $region56: #{native_cnn_forward.4} parent=49 // pred_check_branch
          %1225 = sbr.rel (%p1223) target = $region58
        $region57: #{native_cnn_forward.4} parent=49 // pred_region
          %s1226 = smul.u32 8, %s13
        $region58: #{native_cnn_forward.4} parent=49 // pred_fallthru
          _
      $region50: #{native_cnn_forward.4} parent=5 // pred_fallthru
        _
      %p1227 = scmp.le.s32.totalorder 2, %s8
      // Predicated region
      $region59: #{native_cnn_forward.4} parent=5 // pred_check
        %p1228 = pneg %p1227
      $region60: #{native_cnn_forward.4} parent=5 // pred_check_branch
        %1230 = sbr.rel (%p1228) target = $region62
      $region61: #{native_cnn_forward.4} parent=5 // pred_region
        %s1231 = ssub.s32 %s8, 2
        // Predicated region
        $region63: #{native_cnn_forward.4} parent=61 // pred_check
          %p1232 = pneg %p84
        $region64: #{native_cnn_forward.4} parent=61 // pred_check_branch
          %1234 = sbr.rel (%p1232) target = $region66
        $region65: #{native_cnn_forward.4} parent=61 // pred_region
          %s1235 = smul.u32 8, %s14
          %p1236 = scmp.lt.s32.totalorder %s1235, 15
          %s1237 = scalar_select %p1236, %s1235, 15
          %s1238 = smul.addr %s1237, 4
          %s1239 = scalar_lea.vmem %s2, %s1238
        $region66: #{native_cnn_forward.4} parent=61 // pred_fallthru
          _
      $region62: #{native_cnn_forward.4} parent=5 // pred_fallthru
        _
    $region6: #{native_cnn_forward.4} parent=1 // loop_footer
      %s12 = sadd.s32 1, %s8
    $region7: #{native_cnn_forward.4} parent=1 // loop_footer_branch
      %7 = sbr.rel target = $region3
    $region8: #{native_cnn_forward.4} parent=1 // loop_exit
      _

// kernel: native_cnn_forward.5
$region0: #{native_cnn_forward.5}
  #allocation0 [shape = 'u32[]', space=smem, size = 0x4, offset = 0x4, fixed_abs, tag = 'smem constant byte address 0x4 - core index']
  #allocation1 [shape = 'u32[144,128]{1,0:T(1,128)}', space=vmem, size = 0x12000, scoped, tag = 'internal scratch']
  %s0 = inlined_call_operand.vmem [shape: bf16[8,3136], index: 0, kind: input, shape index: {}]
  %s1 = inlined_call_operand.vmem [shape: bf16[3136,128], index: 1, kind: input, shape index: {}]
  %s2 = inlined_call_operand.vmem [shape: f32[1,128], index: 2, kind: input, shape index: {}]
  %s3 = inlined_call_operand.vmem [shape: f32[8,128], index: 3, kind: output, shape index: {}]
  %s4 = sld [smem:[#allocation0]]
  $region22: #{native_cnn_forward.5} parent=0
    _
  %s6 = ssub.s32 1, %s4
  %s7 = scalar_select 0, %s6, %s4
  // Predicated region
  $region2: #{native_cnn_forward.5} parent=0 // pred_check
    _
  $region3: #{native_cnn_forward.5} parent=0 // pred_check_branch
    %9 = sbr.rel (0) target = $region5
  $region4: #{native_cnn_forward.5} parent=0 // pred_region
    _
  $region5: #{native_cnn_forward.5} parent=0 // pred_fallthru
    _
  // Predicated region
  $region6: #{native_cnn_forward.5} parent=0 // pred_check
    _
  $region7: #{native_cnn_forward.5} parent=0 // pred_check_branch
    %11 = sbr.rel (0) target = $region9
  $region8: #{native_cnn_forward.5} parent=0 // pred_region
    _
  $region9: #{native_cnn_forward.5} parent=0 // pred_fallthru
    _
  // Predicated region
  $region10: #{native_cnn_forward.5} parent=0 // pred_check
    _
  $region11: #{native_cnn_forward.5} parent=0 // pred_check_branch
    %13 = sbr.rel (0) target = $region13
  $region12: #{native_cnn_forward.5} parent=0 // pred_region
    _
  $region13: #{native_cnn_forward.5} parent=0 // pred_fallthru
    _
  %v15 = vld [vmem:[%s0] sm:$0xff]
  %v16 = vld [vmem:[%s0 + $0x8] sm:$0xff]
  %v17 = vld [vmem:[%s0 + $0x10] sm:$0xff]
  %v18 = vld [vmem:[%s0 + $0x18] sm:$0xff]
  %v19 = vld [vmem:[%s0 + $0x20] sm:$0xff]
  %v20 = vld [vmem:[%s0 + $0x28] sm:$0xff]
  %v21 = vld [vmem:[%s0 + $0x30] sm:$0xff]
  %v22 = vld [vmem:[%s0 + $0x38] sm:$0xff]
  %v23 = vld [vmem:[%s0 + $0x40] sm:$0xff]
  %v24 = vld [vmem:[%s0 + $0x48] sm:$0xff]
  %v25 = vld [vmem:[%s0 + $0x50] sm:$0xff]
  %v26 = vld [vmem:[%s0 + $0x58] sm:$0xff]
  %v27 = vld [vmem:[%s0 + $0x60] sm:$0xf]
  %v28 = vld [vmem:[%s1] sm:$0xf]
  %v29 = vld [vmem:[%s1 + $0x4] sm:$0xf]
  %v30 = vld [vmem:[%s1 + $0x8] sm:$0xf]
  %v31 = vld [vmem:[%s1 + $0xc] sm:$0xf]
  %v32 = vld [vmem:[%s1 + $0x10] sm:$0xf]
  %v33 = vld [vmem:[%s1 + $0x14] sm:$0xf]
  %v34 = vld [vmem:[%s1 + $0x18] sm:$0xf]
  %v35 = vld [vmem:[%s1 + $0x1c] sm:$0xf]
  %v36 = vld [vmem:[%s1 + $0x20] sm:$0xf]
  %v37 = vld [vmem:[%s1 + $0x24] sm:$0xf]
  %v38 = vld [vmem:[%s1 + $0x28] sm:$0xf]
  %v39 = vld [vmem:[%s1 + $0x2c] sm:$0xf]
  %v40 = vld [vmem:[%s1 + $0x30] sm:$0xf]
  %v41 = vld [vmem:[%s1 + $0x34] sm:$0xf]
  %v42 = vld [vmem:[%s1 + $0x38] sm:$0xf]
  %v43 = vld [vmem:[%s1 + $0x3c] sm:$0xf]
  %v44 = vld [vmem:[%s1 + $0x40] sm:$0xf]
  %v45 = vld [vmem:[%s1 + $0x44] sm:$0xf]
  %v46 = vld [vmem:[%s1 + $0x48] sm:$0xf]
  %v47 = vld [vmem:[%s1 + $0x4c] sm:$0xf]
  %v48 = vld [vmem:[%s1 + $0x50] sm:$0xf]
  %v49 = vld [vmem:[%s1 + $0x54] sm:$0xf]
  %v50 = vld [vmem:[%s1 + $0x58] sm:$0xf]
  %v51 = vld [vmem:[%s1 + $0x5c] sm:$0xf]
  %v52 = vld [vmem:[%s1 + $0x60] sm:$0xf]
  %v53 = vld [vmem:[%s1 + $0x64] sm:$0xf]
  %v54 = vld [vmem:[%s1 + $0x68] sm:$0xf]
  %v55 = vld [vmem:[%s1 + $0x6c] sm:$0xf]
  %v56 = vld [vmem:[%s1 + $0x70] sm:$0xf]
  %v57 = vld [vmem:[%s1 + $0x74] sm:$0xf]
  %v58 = vld [vmem:[%s1 + $0x78] sm:$0xf]
  %v59 = vld [vmem:[%s1 + $0x7c] sm:$0xf]
  %v60 = vld [vmem:[%s1 + $0x80] sm:$0xf]
  %v61 = vld [vmem:[%s1 + $0x84] sm:$0xf]
  %v62 = vld [vmem:[%s1 + $0x88] sm:$0xf]
  %v63 = vld [vmem:[%s1 + $0x8c] sm:$0xf]
  %v64 = vld [vmem:[%s1 + $0x90] sm:$0xf]
  %v65 = vld [vmem:[%s1 + $0x94] sm:$0xf]
  %v66 = vld [vmem:[%s1 + $0x98] sm:$0xf]
  %v67 = vld [vmem:[%s1 + $0x9c] sm:$0xf]
  %v68 = vld [vmem:[%s1 + $0xa0] sm:$0xf]
  %v69 = vld [vmem:[%s1 + $0xa4] sm:$0xf]
  %v70 = vld [vmem:[%s1 + $0xa8] sm:$0xf]
  %v71 = vld [vmem:[%s1 + $0xac] sm:$0xf]
  %v72 = vld [vmem:[%s1 + $0xb0] sm:$0xf]
  %v73 = vld [vmem:[%s1 + $0xb4] sm:$0xf]
  %v74 = vld [vmem:[%s1 + $0xb8] sm:$0xf]
  %v75 = vld [vmem:[%s1 + $0xbc] sm:$0xf]
  %v76 = vld [vmem:[%s1 + $0xc0] sm:$0xf]
  %v77 = vld [vmem:[%s1 + $0xc4] sm:$0xf]
  %v78 = vld [vmem:[%s1 + $0xc8] sm:$0xf]
  %v79 = vld [vmem:[%s1 + $0xcc] sm:$0xf]
  %v80 = vld [vmem:[%s1 + $0xd0] sm:$0xf]
  %v81 = vld [vmem:[%s1 + $0xd4] sm:$0xf]
  %v82 = vld [vmem:[%s1 + $0xd8] sm:$0xf]
  %v83 = vld [vmem:[%s1 + $0xdc] sm:$0xf]
  %v84 = vld [vmem:[%s1 + $0xe0] sm:$0xf]
  %v85 = vld [vmem:[%s1 + $0xe4] sm:$0xf]
  %v86 = vld [vmem:[%s1 + $0xe8] sm:$0xf]
  %v87 = vld [vmem:[%s1 + $0xec] sm:$0xf]
  %v88 = vld [vmem:[%s1 + $0xf0] sm:$0xf]
  %v89 = vld [vmem:[%s1 + $0xf4] sm:$0xf]
  %v90 = vld [vmem:[%s1 + $0xf8] sm:$0xf]
  %v91 = vld [vmem:[%s1 + $0xfc] sm:$0xf]
  %v92 = vld [vmem:[%s1 + $0x100] sm:$0xf]
  %v93 = vld [vmem:[%s1 + $0x104] sm:$0xf]
  %v94 = vld [vmem:[%s1 + $0x108] sm:$0xf]
  %v95 = vld [vmem:[%s1 + $0x10c] sm:$0xf]
  %v96 = vld [vmem:[%s1 + $0x110] sm:$0xf]
  %v97 = vld [vmem:[%s1 + $0x114] sm:$0xf]
  %v98 = vld [vmem:[%s1 + $0x118] sm:$0xf]
  %v99 = vld [vmem:[%s1 + $0x11c] sm:$0xf]
  %v100 = vld [vmem:[%s1 + $0x120] sm:$0xf]
  %v101 = vld [vmem:[%s1 + $0x124] sm:$0xf]
  %v102 = vld [vmem:[%s1 + $0x128] sm:$0xf]
  %v103 = vld [vmem:[%s1 + $0x12c] sm:$0xf]
  %v104 = vld [vmem:[%s1 + $0x130] sm:$0xf]
  %v105 = vld [vmem:[%s1 + $0x134] sm:$0xf]
  %v106 = vld [vmem:[%s1 + $0x138] sm:$0xf]
  %v107 = vld [vmem:[%s1 + $0x13c] sm:$0xf]
  %v108 = vld [vmem:[%s1 + $0x140] sm:$0xf]
  %v109 = vld [vmem:[%s1 + $0x144] sm:$0xf]
  %v110 = vld [vmem:[%s1 + $0x148] sm:$0xf]
  %v111 = vld [vmem:[%s1 + $0x14c] sm:$0xf]
  %v112 = vld [vmem:[%s1 + $0x150] sm:$0xf]
  %v113 = vld [vmem:[%s1 + $0x154] sm:$0xf]
  %v114 = vld [vmem:[%s1 + $0x158] sm:$0xf]
  %v115 = vld [vmem:[%s1 + $0x15c] sm:$0xf]
  %v116 = vld [vmem:[%s1 + $0x160] sm:$0xf]
  %v117 = vld [vmem:[%s1 + $0x164] sm:$0xf]
  %v118 = vld [vmem:[%s1 + $0x168] sm:$0xf]
  %v119 = vld [vmem:[%s1 + $0x16c] sm:$0xf]
  %v120 = vld [vmem:[%s1 + $0x170] sm:$0xf]
  %v121 = vld [vmem:[%s1 + $0x174] sm:$0xf]
  %v122 = vld [vmem:[%s1 + $0x178] sm:$0xf]
  %v123 = vld [vmem:[%s1 + $0x17c] sm:$0xf]
  %v124 = vld [vmem:[%s1 + $0x180] sm:$0xf]
  %v125 = vld [vmem:[%s1 + $0x184] sm:$0xf]
  %v126 = vld [vmem:[%s1 + $0x188] sm:$0xf]
  %v127 = vld [vmem:[%s1 + $0x18c] sm:$0xf]
  %v128 = vld [vmem:[%s1 + $0x190] sm:$0xf]
  %v129 = vld [vmem:[%s1 + $0x194] sm:$0xf]
  %v130 = vld [vmem:[%s1 + $0x198] sm:$0xf]
  %v131 = vld [vmem:[%s1 + $0x19c] sm:$0xf]
  %v132 = vld [vmem:[%s1 + $0x1a0] sm:$0xf]
  %v133 = vld [vmem:[%s1 + $0x1a4] sm:$0xf]
  %v134 = vld [vmem:[%s1 + $0x1a8] sm:$0xf]
  %v135 = vld [vmem:[%s1 + $0x1ac] sm:$0xf]
  %v136 = vld [vmem:[%s1 + $0x1b0] sm:$0xf]
  %v137 = vld [vmem:[%s1 + $0x1b4] sm:$0xf]
  %v138 = vld [vmem:[%s1 + $0x1b8] sm:$0xf]
  %v139 = vld [vmem:[%s1 + $0x1bc] sm:$0xf]
  %v140 = vld [vmem:[%s1 + $0x1c0] sm:$0xf]
  %v141 = vld [vmem:[%s1 + $0x1c4] sm:$0xf]
  %v142 = vld [vmem:[%s1 + $0x1c8] sm:$0xf]
  %v143 = vld [vmem:[%s1 + $0x1cc] sm:$0xf]
  %v144 = vld [vmem:[%s1 + $0x1d0] sm:$0xf]
  %v145 = vld [vmem:[%s1 + $0x1d4] sm:$0xf]
  %v146 = vld [vmem:[%s1 + $0x1d8] sm:$0xf]
  %v147 = vld [vmem:[%s1 + $0x1dc] sm:$0xf]
  %v148 = vld [vmem:[%s1 + $0x1e0] sm:$0xf]
  %v149 = vld [vmem:[%s1 + $0x1e4] sm:$0xf]
  %v150 = vld [vmem:[%s1 + $0x1e8] sm:$0xf]
  %v151 = vld [vmem:[%s1 + $0x1ec] sm:$0xf]
  %v152 = vld [vmem:[%s1 + $0x1f0] sm:$0xf]
  %v153 = vld [vmem:[%s1 + $0x1f4] sm:$0xf]
  %v154 = vld [vmem:[%s1 + $0x1f8] sm:$0xf]
  %v155 = vld [vmem:[%s1 + $0x1fc] sm:$0xf]
  %v156 = vld [vmem:[%s1 + $0x200] sm:$0xf]
  %v157 = vld [vmem:[%s1 + $0x204] sm:$0xf]
  %v158 = vld [vmem:[%s1 + $0x208] sm:$0xf]
  %v159 = vld [vmem:[%s1 + $0x20c] sm:$0xf]
  %v160 = vld [vmem:[%s1 + $0x210] sm:$0xf]
  %v161 = vld [vmem:[%s1 + $0x214] sm:$0xf]
  %v162 = vld [vmem:[%s1 + $0x218] sm:$0xf]
  %v163 = vld [vmem:[%s1 + $0x21c] sm:$0xf]
  %v164 = vld [vmem:[%s1 + $0x220] sm:$0xf]
  %v165 = vld [vmem:[%s1 + $0x224] sm:$0xf]
  %v166 = vld [vmem:[%s1 + $0x228] sm:$0xf]
  %v167 = vld [vmem:[%s1 + $0x22c] sm:$0xf]
  %v168 = vld [vmem:[%s1 + $0x230] sm:$0xf]
  %v169 = vld [vmem:[%s1 + $0x234] sm:$0xf]
  %v170 = vld [vmem:[%s1 + $0x238] sm:$0xf]
  %v171 = vld [vmem:[%s1 + $0x23c] sm:$0xf]
  %v172 = vld [vmem:[%s1 + $0x240] sm:$0xf]
  %v173 = vld [vmem:[%s1 + $0x244] sm:$0xf]
  %v174 = vld [vmem:[%s1 + $0x248] sm:$0xf]
  %v175 = vld [vmem:[%s1 + $0x24c] sm:$0xf]
  %v176 = vld [vmem:[%s1 + $0x250] sm:$0xf]
  %v177 = vld [vmem:[%s1 + $0x254] sm:$0xf]
  %v178 = vld [vmem:[%s1 + $0x258] sm:$0xf]
  %v179 = vld [vmem:[%s1 + $0x25c] sm:$0xf]
  %v180 = vld [vmem:[%s1 + $0x260] sm:$0xf]
  %v181 = vld [vmem:[%s1 + $0x264] sm:$0xf]
  %v182 = vld [vmem:[%s1 + $0x268] sm:$0xf]
  %v183 = vld [vmem:[%s1 + $0x26c] sm:$0xf]
  %v184 = vld [vmem:[%s1 + $0x270] sm:$0xf]
  %v185 = vld [vmem:[%s1 + $0x274] sm:$0xf]
  %v186 = vld [vmem:[%s1 + $0x278] sm:$0xf]
  %v187 = vld [vmem:[%s1 + $0x27c] sm:$0xf]
  %v188 = vld [vmem:[%s1 + $0x280] sm:$0xf]
  %v189 = vld [vmem:[%s1 + $0x284] sm:$0xf]
  %v190 = vld [vmem:[%s1 + $0x288] sm:$0xf]
  %v191 = vld [vmem:[%s1 + $0x28c] sm:$0xf]
  %v192 = vld [vmem:[%s1 + $0x290] sm:$0xf]
  %v193 = vld [vmem:[%s1 + $0x294] sm:$0xf]
  %v194 = vld [vmem:[%s1 + $0x298] sm:$0xf]
  %v195 = vld [vmem:[%s1 + $0x29c] sm:$0xf]
  %v196 = vld [vmem:[%s1 + $0x2a0] sm:$0xf]
  %v197 = vld [vmem:[%s1 + $0x2a4] sm:$0xf]
  %v198 = vld [vmem:[%s1 + $0x2a8] sm:$0xf]
  %v199 = vld [vmem:[%s1 + $0x2ac] sm:$0xf]
  %v200 = vld [vmem:[%s1 + $0x2b0] sm:$0xf]
  %v201 = vld [vmem:[%s1 + $0x2b4] sm:$0xf]
  %v202 = vld [vmem:[%s1 + $0x2b8] sm:$0xf]
  %v203 = vld [vmem:[%s1 + $0x2bc] sm:$0xf]
  %v204 = vld [vmem:[%s1 + $0x2c0] sm:$0xf]
  %v205 = vld [vmem:[%s1 + $0x2c4] sm:$0xf]
  %v206 = vld [vmem:[%s1 + $0x2c8] sm:$0xf]
  %v207 = vld [vmem:[%s1 + $0x2cc] sm:$0xf]
  %v208 = vld [vmem:[%s1 + $0x2d0] sm:$0xf]
  %v209 = vld [vmem:[%s1 + $0x2d4] sm:$0xf]
  %v210 = vld [vmem:[%s1 + $0x2d8] sm:$0xf]
  %v211 = vld [vmem:[%s1 + $0x2dc] sm:$0xf]
  %v212 = vld [vmem:[%s1 + $0x2e0] sm:$0xf]
  %v213 = vld [vmem:[%s1 + $0x2e4] sm:$0xf]
  %v214 = vld [vmem:[%s1 + $0x2e8] sm:$0xf]
  %v215 = vld [vmem:[%s1 + $0x2ec] sm:$0xf]
  %v216 = vld [vmem:[%s1 + $0x2f0] sm:$0xf]
  %v217 = vld [vmem:[%s1 + $0x2f4] sm:$0xf]
  %v218 = vld [vmem:[%s1 + $0x2f8] sm:$0xf]
  %v219 = vld [vmem:[%s1 + $0x2fc] sm:$0xf]
  %v220 = vld [vmem:[%s1 + $0x300] sm:$0xf]
  %v221 = vld [vmem:[%s1 + $0x304] sm:$0xf]
  %v222 = vld [vmem:[%s1 + $0x308] sm:$0xf]
  %v223 = vld [vmem:[%s1 + $0x30c] sm:$0xf]
  %v224 = vld [vmem:[%s1 + $0x310] sm:$0xf]
  %v225 = vld [vmem:[%s1 + $0x314] sm:$0xf]
  %v226 = vld [vmem:[%s1 + $0x318] sm:$0xf]
  %v227 = vld [vmem:[%s1 + $0x31c] sm:$0xf]
  %v228 = vld [vmem:[%s1 + $0x320] sm:$0xf]
  %v229 = vld [vmem:[%s1 + $0x324] sm:$0xf]
  %v230 = vld [vmem:[%s1 + $0x328] sm:$0xf]
  %v231 = vld [vmem:[%s1 + $0x32c] sm:$0xf]
  %v232 = vld [vmem:[%s1 + $0x330] sm:$0xf]
  %v233 = vld [vmem:[%s1 + $0x334] sm:$0xf]
  %v234 = vld [vmem:[%s1 + $0x338] sm:$0xf]
  %v235 = vld [vmem:[%s1 + $0x33c] sm:$0xf]
  %v236 = vld [vmem:[%s1 + $0x340] sm:$0xf]
  %v237 = vld [vmem:[%s1 + $0x344] sm:$0xf]
  %v238 = vld [vmem:[%s1 + $0x348] sm:$0xf]
  %v239 = vld [vmem:[%s1 + $0x34c] sm:$0xf]
  %v240 = vld [vmem:[%s1 + $0x350] sm:$0xf]
  %v241 = vld [vmem:[%s1 + $0x354] sm:$0xf]
  %v242 = vld [vmem:[%s1 + $0x358] sm:$0xf]
  %v243 = vld [vmem:[%s1 + $0x35c] sm:$0xf]
  %v244 = vld [vmem:[%s1 + $0x360] sm:$0xf]
  %v245 = vld [vmem:[%s1 + $0x364] sm:$0xf]
  %v246 = vld [vmem:[%s1 + $0x368] sm:$0xf]
  %v247 = vld [vmem:[%s1 + $0x36c] sm:$0xf]
  %v248 = vld [vmem:[%s1 + $0x370] sm:$0xf]
  %v249 = vld [vmem:[%s1 + $0x374] sm:$0xf]
  %v250 = vld [vmem:[%s1 + $0x378] sm:$0xf]
  %v251 = vld [vmem:[%s1 + $0x37c] sm:$0xf]
  %v252 = vld [vmem:[%s1 + $0x380] sm:$0xf]
  %v253 = vld [vmem:[%s1 + $0x384] sm:$0xf]
  %v254 = vld [vmem:[%s1 + $0x388] sm:$0xf]
  %v255 = vld [vmem:[%s1 + $0x38c] sm:$0xf]
  %v256 = vld [vmem:[%s1 + $0x390] sm:$0xf]
  %v257 = vld [vmem:[%s1 + $0x394] sm:$0xf]
  %v258 = vld [vmem:[%s1 + $0x398] sm:$0xf]
  %v259 = vld [vmem:[%s1 + $0x39c] sm:$0xf]
  %v260 = vld [vmem:[%s1 + $0x3a0] sm:$0xf]
  %v261 = vld [vmem:[%s1 + $0x3a4] sm:$0xf]
  %v262 = vld [vmem:[%s1 + $0x3a8] sm:$0xf]
  %v263 = vld [vmem:[%s1 + $0x3ac] sm:$0xf]
  %v264 = vld [vmem:[%s1 + $0x3b0] sm:$0xf]
  %v265 = vld [vmem:[%s1 + $0x3b4] sm:$0xf]
  %v266 = vld [vmem:[%s1 + $0x3b8] sm:$0xf]
  %v267 = vld [vmem:[%s1 + $0x3bc] sm:$0xf]
  %v268 = vld [vmem:[%s1 + $0x3c0] sm:$0xf]
  %v269 = vld [vmem:[%s1 + $0x3c4] sm:$0xf]
  %v270 = vld [vmem:[%s1 + $0x3c8] sm:$0xf]
  %v271 = vld [vmem:[%s1 + $0x3cc] sm:$0xf]
  %v272 = vld [vmem:[%s1 + $0x3d0] sm:$0xf]
  %v273 = vld [vmem:[%s1 + $0x3d4] sm:$0xf]
  %v274 = vld [vmem:[%s1 + $0x3d8] sm:$0xf]
  %v275 = vld [vmem:[%s1 + $0x3dc] sm:$0xf]
  %v276 = vld [vmem:[%s1 + $0x3e0] sm:$0xf]
  %v277 = vld [vmem:[%s1 + $0x3e4] sm:$0xf]
  %v278 = vld [vmem:[%s1 + $0x3e8] sm:$0xf]
  %v279 = vld [vmem:[%s1 + $0x3ec] sm:$0xf]
  %v280 = vld [vmem:[%s1 + $0x3f0] sm:$0xf]
  %v281 = vld [vmem:[%s1 + $0x3f4] sm:$0xf]
  %v282 = vld [vmem:[%s1 + $0x3f8] sm:$0xf]
  %v283 = vld [vmem:[%s1 + $0x3fc] sm:$0xf]
  %v284 = vld [vmem:[%s1 + $0x400] sm:$0xf]
  %v285 = vld [vmem:[%s1 + $0x404] sm:$0xf]
  %v286 = vld [vmem:[%s1 + $0x408] sm:$0xf]
  %v287 = vld [vmem:[%s1 + $0x40c] sm:$0xf]
  %v288 = vld [vmem:[%s1 + $0x410] sm:$0xf]
  %v289 = vld [vmem:[%s1 + $0x414] sm:$0xf]
  %v290 = vld [vmem:[%s1 + $0x418] sm:$0xf]
  %v291 = vld [vmem:[%s1 + $0x41c] sm:$0xf]
  %v292 = vld [vmem:[%s1 + $0x420] sm:$0xf]
  %v293 = vld [vmem:[%s1 + $0x424] sm:$0xf]
  %v294 = vld [vmem:[%s1 + $0x428] sm:$0xf]
  %v295 = vld [vmem:[%s1 + $0x42c] sm:$0xf]
  %v296 = vld [vmem:[%s1 + $0x430] sm:$0xf]
  %v297 = vld [vmem:[%s1 + $0x434] sm:$0xf]
  %v298 = vld [vmem:[%s1 + $0x438] sm:$0xf]
  %v299 = vld [vmem:[%s1 + $0x43c] sm:$0xf]
  %v300 = vld [vmem:[%s1 + $0x440] sm:$0xf]
  %v301 = vld [vmem:[%s1 + $0x444] sm:$0xf]
  %v302 = vld [vmem:[%s1 + $0x448] sm:$0xf]
  %v303 = vld [vmem:[%s1 + $0x44c] sm:$0xf]
  %v304 = vld [vmem:[%s1 + $0x450] sm:$0xf]
  %v305 = vld [vmem:[%s1 + $0x454] sm:$0xf]
  %v306 = vld [vmem:[%s1 + $0x458] sm:$0xf]
  %v307 = vld [vmem:[%s1 + $0x45c] sm:$0xf]
  %v308 = vld [vmem:[%s1 + $0x460] sm:$0xf]
  %v309 = vld [vmem:[%s1 + $0x464] sm:$0xf]
  %v310 = vld [vmem:[%s1 + $0x468] sm:$0xf]
  %v311 = vld [vmem:[%s1 + $0x46c] sm:$0xf]
  %v312 = vld [vmem:[%s1 + $0x470] sm:$0xf]
  %v313 = vld [vmem:[%s1 + $0x474] sm:$0xf]
  %v314 = vld [vmem:[%s1 + $0x478] sm:$0xf]
  %v315 = vld [vmem:[%s1 + $0x47c] sm:$0xf]
  %v316 = vld [vmem:[%s1 + $0x480] sm:$0xf]
  %v317 = vld [vmem:[%s1 + $0x484] sm:$0xf]
  %v318 = vld [vmem:[%s1 + $0x488] sm:$0xf]
  %v319 = vld [vmem:[%s1 + $0x48c] sm:$0xf]
  %v320 = vld [vmem:[%s1 + $0x490] sm:$0xf]
  %v321 = vld [vmem:[%s1 + $0x494] sm:$0xf]
  %v322 = vld [vmem:[%s1 + $0x498] sm:$0xf]
  %v323 = vld [vmem:[%s1 + $0x49c] sm:$0xf]
  %v324 = vld [vmem:[%s1 + $0x4a0] sm:$0xf]
  %v325 = vld [vmem:[%s1 + $0x4a4] sm:$0xf]
  %v326 = vld [vmem:[%s1 + $0x4a8] sm:$0xf]
  %v327 = vld [vmem:[%s1 + $0x4ac] sm:$0xf]
  %v328 = vld [vmem:[%s1 + $0x4b0] sm:$0xf]
  %v329 = vld [vmem:[%s1 + $0x4b4] sm:$0xf]
  %v330 = vld [vmem:[%s1 + $0x4b8] sm:$0xf]
  %v331 = vld [vmem:[%s1 + $0x4bc] sm:$0xf]
  %v332 = vld [vmem:[%s1 + $0x4c0] sm:$0xf]
  %v333 = vld [vmem:[%s1 + $0x4c4] sm:$0xf]
  %v334 = vld [vmem:[%s1 + $0x4c8] sm:$0xf]
  %v335 = vld [vmem:[%s1 + $0x4cc] sm:$0xf]
  %v336 = vld [vmem:[%s1 + $0x4d0] sm:$0xf]
  %v337 = vld [vmem:[%s1 + $0x4d4] sm:$0xf]
  %v338 = vld [vmem:[%s1 + $0x4d8] sm:$0xf]
  %v339 = vld [vmem:[%s1 + $0x4dc] sm:$0xf]
  %v340 = vld [vmem:[%s1 + $0x4e0] sm:$0xf]
  %v341 = vld [vmem:[%s1 + $0x4e4] sm:$0xf]
  %v342 = vld [vmem:[%s1 + $0x4e8] sm:$0xf]
  %v343 = vld [vmem:[%s1 + $0x4ec] sm:$0xf]
  %v344 = vld [vmem:[%s1 + $0x4f0] sm:$0xf]
  %v345 = vld [vmem:[%s1 + $0x4f4] sm:$0xf]
  %v346 = vld [vmem:[%s1 + $0x4f8] sm:$0xf]
  %v347 = vld [vmem:[%s1 + $0x4fc] sm:$0xf]
  %v348 = vld [vmem:[%s1 + $0x500] sm:$0xf]
  %v349 = vld [vmem:[%s1 + $0x504] sm:$0xf]
  %v350 = vld [vmem:[%s1 + $0x508] sm:$0xf]
  %v351 = vld [vmem:[%s1 + $0x50c] sm:$0xf]
  %v352 = vld [vmem:[%s1 + $0x510] sm:$0xf]
  %v353 = vld [vmem:[%s1 + $0x514] sm:$0xf]
  %v354 = vld [vmem:[%s1 + $0x518] sm:$0xf]
  %v355 = vld [vmem:[%s1 + $0x51c] sm:$0xf]
  %v356 = vld [vmem:[%s1 + $0x520] sm:$0xf]
  %v357 = vld [vmem:[%s1 + $0x524] sm:$0xf]
  %v358 = vld [vmem:[%s1 + $0x528] sm:$0xf]
  %v359 = vld [vmem:[%s1 + $0x52c] sm:$0xf]
  %v360 = vld [vmem:[%s1 + $0x530] sm:$0xf]
  %v361 = vld [vmem:[%s1 + $0x534] sm:$0xf]
  %v362 = vld [vmem:[%s1 + $0x538] sm:$0xf]
  %v363 = vld [vmem:[%s1 + $0x53c] sm:$0xf]
  %v364 = vld [vmem:[%s1 + $0x540] sm:$0xf]
  %v365 = vld [vmem:[%s1 + $0x544] sm:$0xf]
  %v366 = vld [vmem:[%s1 + $0x548] sm:$0xf]
  %v367 = vld [vmem:[%s1 + $0x54c] sm:$0xf]
  %v368 = vld [vmem:[%s1 + $0x550] sm:$0xf]
  %v369 = vld [vmem:[%s1 + $0x554] sm:$0xf]
  %v370 = vld [vmem:[%s1 + $0x558] sm:$0xf]
  %v371 = vld [vmem:[%s1 + $0x55c] sm:$0xf]
  %v372 = vld [vmem:[%s1 + $0x560] sm:$0xf]
  %v373 = vld [vmem:[%s1 + $0x564] sm:$0xf]
  %v374 = vld [vmem:[%s1 + $0x568] sm:$0xf]
  %v375 = vld [vmem:[%s1 + $0x56c] sm:$0xf]
  %v376 = vld [vmem:[%s1 + $0x570] sm:$0xf]
  %v377 = vld [vmem:[%s1 + $0x574] sm:$0xf]
  %v378 = vld [vmem:[%s1 + $0x578] sm:$0xf]
  %v379 = vld [vmem:[%s1 + $0x57c] sm:$0xf]
  %v380 = vld [vmem:[%s1 + $0x580] sm:$0xf]
  %v381 = vld [vmem:[%s1 + $0x584] sm:$0xf]
  %v382 = vld [vmem:[%s1 + $0x588] sm:$0xf]
  %v383 = vld [vmem:[%s1 + $0x58c] sm:$0xf]
  %v384 = vld [vmem:[%s1 + $0x590] sm:$0xf]
  %v385 = vld [vmem:[%s1 + $0x594] sm:$0xf]
  %v386 = vld [vmem:[%s1 + $0x598] sm:$0xf]
  %v387 = vld [vmem:[%s1 + $0x59c] sm:$0xf]
  %v388 = vld [vmem:[%s1 + $0x5a0] sm:$0xf]
  %v389 = vld [vmem:[%s1 + $0x5a4] sm:$0xf]
  %v390 = vld [vmem:[%s1 + $0x5a8] sm:$0xf]
  %v391 = vld [vmem:[%s1 + $0x5ac] sm:$0xf]
  %v392 = vld [vmem:[%s1 + $0x5b0] sm:$0xf]
  %v393 = vld [vmem:[%s1 + $0x5b4] sm:$0xf]
  %v394 = vld [vmem:[%s1 + $0x5b8] sm:$0xf]
  %v395 = vld [vmem:[%s1 + $0x5bc] sm:$0xf]
  %v396 = vld [vmem:[%s1 + $0x5c0] sm:$0xf]
  %v397 = vld [vmem:[%s1 + $0x5c4] sm:$0xf]
  %v398 = vld [vmem:[%s1 + $0x5c8] sm:$0xf]
  %v399 = vld [vmem:[%s1 + $0x5cc] sm:$0xf]
  %v400 = vld [vmem:[%s1 + $0x5d0] sm:$0xf]
  %v401 = vld [vmem:[%s1 + $0x5d4] sm:$0xf]
  %v402 = vld [vmem:[%s1 + $0x5d8] sm:$0xf]
  %v403 = vld [vmem:[%s1 + $0x5dc] sm:$0xf]
  %v404 = vld [vmem:[%s1 + $0x5e0] sm:$0xf]
  %v405 = vld [vmem:[%s1 + $0x5e4] sm:$0xf]
  %v406 = vld [vmem:[%s1 + $0x5e8] sm:$0xf]
  %v407 = vld [vmem:[%s1 + $0x5ec] sm:$0xf]
  %v408 = vld [vmem:[%s1 + $0x5f0] sm:$0xf]
  %v409 = vld [vmem:[%s1 + $0x5f4] sm:$0xf]
  %v410 = vld [vmem:[%s1 + $0x5f8] sm:$0xf]
  %v411 = vld [vmem:[%s1 + $0x5fc] sm:$0xf]
  %v412 = vld [vmem:[%s1 + $0x600] sm:$0xf]
  %v413 = vld [vmem:[%s1 + $0x604] sm:$0xf]
  %v414 = vld [vmem:[%s1 + $0x608] sm:$0xf]
  %v415 = vld [vmem:[%s1 + $0x60c] sm:$0xf]
  %v416 = vld [vmem:[%s1 + $0x610] sm:$0xf]
  %v417 = vld [vmem:[%s1 + $0x614] sm:$0xf]
  %v418 = vld [vmem:[%s1 + $0x618] sm:$0xf]
  %v419 = vld [vmem:[%s1 + $0x61c] sm:$0xf]
  %v420 = vld [vmem:[%s2] sm:$0x1]
  %v422 = vlaneseq
  %v423 = vshrl.u32 %v422, 7
  %v424 = vsub.s32 0, %v423
  %v425 = vrot.slane %v420, %v424
  %v440 = vunpack.c.l.b16 %v15
  %v441 = vunpack.c.h.b16 %v15
  %v442 = vunpack.c.l.b16 %v16
  %v443 = vunpack.c.h.b16 %v16
  %v444 = vunpack.c.l.b16 %v17
  %v445 = vunpack.c.h.b16 %v17
  %v446 = vunpack.c.l.b16 %v18
  %v447 = vunpack.c.h.b16 %v18
  %v448 = vunpack.c.l.b16 %v19
  %v449 = vunpack.c.h.b16 %v19
  %v450 = vunpack.c.l.b16 %v20
  %v451 = vunpack.c.h.b16 %v20
  %v452 = vunpack.c.l.b16 %v21
  %v453 = vunpack.c.h.b16 %v21
  %v454 = vunpack.c.l.b16 %v22
  %v455 = vunpack.c.h.b16 %v22
  %v456 = vunpack.c.l.b16 %v23
  %v457 = vunpack.c.h.b16 %v23
  %v458 = vunpack.c.l.b16 %v24
  %v459 = vunpack.c.h.b16 %v24
  %v460 = vunpack.c.l.b16 %v25
  %v461 = vunpack.c.h.b16 %v25
  %v462 = vunpack.c.l.b16 %v26
  %v463 = vunpack.c.h.b16 %v26
  %v464 = vunpack.c.l.b16 %v27
  %v465 = vpack.c.b16 %v440, %v440
  %v466 = vpack.c.b16 %v441, %v441
  %v467 = vpack.c.b16 %v442, %v442
  %v468 = vpack.c.b16 %v443, %v443
  %v469 = vpack.c.b16 %v444, %v444
  %v470 = vpack.c.b16 %v445, %v445
  %v471 = vpack.c.b16 %v446, %v446
  %v472 = vpack.c.b16 %v447, %v447
  %v473 = vpack.c.b16 %v448, %v448
  %v474 = vpack.c.b16 %v449, %v449
  %v475 = vpack.c.b16 %v450, %v450
  %v476 = vpack.c.b16 %v451, %v451
  %v477 = vpack.c.b16 %v452, %v452
  %v478 = vpack.c.b16 %v453, %v453
  %v479 = vpack.c.b16 %v454, %v454
  %v480 = vpack.c.b16 %v455, %v455
  %v481 = vpack.c.b16 %v456, %v456
  %v482 = vpack.c.b16 %v457, %v457
  %v483 = vpack.c.b16 %v458, %v458
  %v484 = vpack.c.b16 %v459, %v459
  %v485 = vpack.c.b16 %v460, %v460
  %v486 = vpack.c.b16 %v461, %v461
  %v487 = vpack.c.b16 %v462, %v462
  %v488 = vpack.c.b16 %v463, %v463
  %v489 = vpack.c.b16 %v464, %v464
  %v906 = vunpack.c.l.b16 %v28
  %v907 = vunpack.c.l.b16 %v29
  %v908 = vunpack.c.l.b16 %v30
  %v909 = vunpack.c.l.b16 %v31
  %v910 = vunpack.c.l.b16 %v32
  %v911 = vunpack.c.l.b16 %v33
  %v912 = vunpack.c.l.b16 %v34
  %v913 = vunpack.c.l.b16 %v35
  %v914 = vunpack.c.l.b16 %v36
  %v915 = vunpack.c.l.b16 %v37
  %v916 = vunpack.c.l.b16 %v38
  %v917 = vunpack.c.l.b16 %v39
  %v918 = vunpack.c.l.b16 %v40
  %v919 = vunpack.c.l.b16 %v41
  %v920 = vunpack.c.l.b16 %v42
  %v921 = vunpack.c.l.b16 %v43
  %v922 = vunpack.c.l.b16 %v44
  %v923 = vunpack.c.l.b16 %v45
  %v924 = vunpack.c.l.b16 %v46
  %v925 = vunpack.c.l.b16 %v47
  %v926 = vunpack.c.l.b16 %v48
  %v927 = vunpack.c.l.b16 %v49
  %v928 = vunpack.c.l.b16 %v50
  %v929 = vunpack.c.l.b16 %v51
  %v930 = vunpack.c.l.b16 %v52
  %v931 = vunpack.c.l.b16 %v53
  %v932 = vunpack.c.l.b16 %v54
  %v933 = vunpack.c.l.b16 %v55
  %v934 = vunpack.c.l.b16 %v56
  %v935 = vunpack.c.l.b16 %v57
  %v936 = vunpack.c.l.b16 %v58
  %v937 = vunpack.c.l.b16 %v59
  %v938 = vunpack.c.l.b16 %v60
  %v939 = vunpack.c.l.b16 %v61
  %v940 = vunpack.c.l.b16 %v62
  %v941 = vunpack.c.l.b16 %v63
  %v942 = vunpack.c.l.b16 %v64
  %v943 = vunpack.c.l.b16 %v65
  %v944 = vunpack.c.l.b16 %v66
  %v945 = vunpack.c.l.b16 %v67
  %v946 = vunpack.c.l.b16 %v68
  %v947 = vunpack.c.l.b16 %v69
  %v948 = vunpack.c.l.b16 %v70
  %v949 = vunpack.c.l.b16 %v71
  %v950 = vunpack.c.l.b16 %v72
  %v951 = vunpack.c.l.b16 %v73
  %v952 = vunpack.c.l.b16 %v74
  %v953 = vunpack.c.l.b16 %v75
  %v954 = vunpack.c.l.b16 %v76
  %v955 = vunpack.c.l.b16 %v77
  %v956 = vunpack.c.l.b16 %v78
  %v957 = vunpack.c.l.b16 %v79
  %v958 = vunpack.c.l.b16 %v80
  %v959 = vunpack.c.l.b16 %v81
  %v960 = vunpack.c.l.b16 %v82
  %v961 = vunpack.c.l.b16 %v83
  %v962 = vunpack.c.l.b16 %v84
  %v963 = vunpack.c.l.b16 %v85
  %v964 = vunpack.c.l.b16 %v86
  %v965 = vunpack.c.l.b16 %v87
  %v966 = vunpack.c.l.b16 %v88
  %v967 = vunpack.c.l.b16 %v89
  %v968 = vunpack.c.l.b16 %v90
  %v969 = vunpack.c.l.b16 %v91
  %v970 = vunpack.c.l.b16 %v92
  %v971 = vunpack.c.l.b16 %v93
  %v972 = vunpack.c.l.b16 %v94
  %v973 = vunpack.c.l.b16 %v95
  %v974 = vunpack.c.l.b16 %v96
  %v975 = vunpack.c.l.b16 %v97
  %v976 = vunpack.c.l.b16 %v98
  %v977 = vunpack.c.l.b16 %v99
  %v978 = vunpack.c.l.b16 %v100
  %v979 = vunpack.c.l.b16 %v101
  %v980 = vunpack.c.l.b16 %v102
  %v981 = vunpack.c.l.b16 %v103
  %v982 = vunpack.c.l.b16 %v104
  %v983 = vunpack.c.l.b16 %v105
  %v984 = vunpack.c.l.b16 %v106
  %v985 = vunpack.c.l.b16 %v107
  %v986 = vunpack.c.l.b16 %v108
  %v987 = vunpack.c.l.b16 %v109
  %v988 = vunpack.c.l.b16 %v110
  %v989 = vunpack.c.l.b16 %v111
  %v990 = vunpack.c.l.b16 %v112
  %v991 = vunpack.c.l.b16 %v113
  %v992 = vunpack.c.l.b16 %v114
  %v993 = vunpack.c.l.b16 %v115
  %v994 = vunpack.c.l.b16 %v116
  %v995 = vunpack.c.l.b16 %v117
  %v996 = vunpack.c.l.b16 %v118
  %v997 = vunpack.c.l.b16 %v119
  %v998 = vunpack.c.l.b16 %v120
  %v999 = vunpack.c.l.b16 %v121
  %v1000 = vunpack.c.l.b16 %v122
  %v1001 = vunpack.c.l.b16 %v123
  %v1002 = vunpack.c.l.b16 %v124
  %v1003 = vunpack.c.l.b16 %v125
  %v1004 = vunpack.c.l.b16 %v126
  %v1005 = vunpack.c.l.b16 %v127
  %v1006 = vunpack.c.l.b16 %v128
  %v1007 = vunpack.c.l.b16 %v129
  %v1008 = vunpack.c.l.b16 %v130
  %v1009 = vunpack.c.l.b16 %v131
  %v1010 = vunpack.c.l.b16 %v132
  %v1011 = vunpack.c.l.b16 %v133
  %v1012 = vunpack.c.l.b16 %v134
  %v1013 = vunpack.c.l.b16 %v135
  %v1014 = vunpack.c.l.b16 %v136
  %v1015 = vunpack.c.l.b16 %v137
  %v1016 = vunpack.c.l.b16 %v138
  %v1017 = vunpack.c.l.b16 %v139
  %v1018 = vunpack.c.l.b16 %v140
  %v1019 = vunpack.c.l.b16 %v141
  %v1020 = vunpack.c.l.b16 %v142
  %v1021 = vunpack.c.l.b16 %v143
  %v1022 = vunpack.c.l.b16 %v144
  %v1023 = vunpack.c.l.b16 %v145
  %v1024 = vunpack.c.l.b16 %v146
  %v1025 = vunpack.c.l.b16 %v147
  %v1026 = vunpack.c.l.b16 %v148
  %v1027 = vunpack.c.l.b16 %v149
  %v1028 = vunpack.c.l.b16 %v150
  %v1029 = vunpack.c.l.b16 %v151
  %v1030 = vunpack.c.l.b16 %v152
  %v1031 = vunpack.c.l.b16 %v153
  %v1032 = vunpack.c.l.b16 %v154
  %v1033 = vunpack.c.l.b16 %v155
  %v1034 = vunpack.c.l.b16 %v156
  %v1035 = vunpack.c.l.b16 %v157
  %v1036 = vunpack.c.l.b16 %v158
  %v1037 = vunpack.c.l.b16 %v159
  %v1038 = vunpack.c.l.b16 %v160
  %v1039 = vunpack.c.l.b16 %v161
  %v1040 = vunpack.c.l.b16 %v162
  %v1041 = vunpack.c.l.b16 %v163
  %v1042 = vunpack.c.l.b16 %v164
  %v1043 = vunpack.c.l.b16 %v165
  %v1044 = vunpack.c.l.b16 %v166
  %v1045 = vunpack.c.l.b16 %v167
  %v1046 = vunpack.c.l.b16 %v168
  %v1047 = vunpack.c.l.b16 %v169
  %v1048 = vunpack.c.l.b16 %v170
  %v1049 = vunpack.c.l.b16 %v171
  %v1050 = vunpack.c.l.b16 %v172
  %v1051 = vunpack.c.l.b16 %v173
  %v1052 = vunpack.c.l.b16 %v174
  %v1053 = vunpack.c.l.b16 %v175
  %v1054 = vunpack.c.l.b16 %v176
  %v1055 = vunpack.c.l.b16 %v177
  %v1056 = vunpack.c.l.b16 %v178
  %v1057 = vunpack.c.l.b16 %v179
  %v1058 = vunpack.c.l.b16 %v180
  %v1059 = vunpack.c.l.b16 %v181
  %v1060 = vunpack.c.l.b16 %v182
  %v1061 = vunpack.c.l.b16 %v183
  %v1062 = vunpack.c.l.b16 %v184
  %v1063 = vunpack.c.l.b16 %v185
  %v1064 = vunpack.c.l.b16 %v186
  %v1065 = vunpack.c.l.b16 %v187
  %v1066 = vunpack.c.l.b16 %v188
  %v1067 = vunpack.c.l.b16 %v189
  %v1068 = vunpack.c.l.b16 %v190
  %v1069 = vunpack.c.l.b16 %v191
  %v1070 = vunpack.c.l.b16 %v192
  %v1071 = vunpack.c.l.b16 %v193
  %v1072 = vunpack.c.l.b16 %v194
  %v1073 = vunpack.c.l.b16 %v195
  %v1074 = vunpack.c.l.b16 %v196
  %v1075 = vunpack.c.l.b16 %v197
  %v1076 = vunpack.c.l.b16 %v198
  %v1077 = vunpack.c.l.b16 %v199
  %v1078 = vunpack.c.l.b16 %v200
  %v1079 = vunpack.c.l.b16 %v201
  %v1080 = vunpack.c.l.b16 %v202
  %v1081 = vunpack.c.l.b16 %v203
  %v1082 = vunpack.c.l.b16 %v204
  %v1083 = vunpack.c.l.b16 %v205
  %v1084 = vunpack.c.l.b16 %v206
  %v1085 = vunpack.c.l.b16 %v207
  %v1086 = vunpack.c.l.b16 %v208
  %v1087 = vunpack.c.l.b16 %v209
  %v1088 = vunpack.c.l.b16 %v210
  %v1089 = vunpack.c.l.b16 %v211
  %v1090 = vunpack.c.l.b16 %v212
  %v1091 = vunpack.c.l.b16 %v213
  %v1092 = vunpack.c.l.b16 %v214
  %v1093 = vunpack.c.l.b16 %v215
  %v1094 = vunpack.c.l.b16 %v216
  %v1095 = vunpack.c.l.b16 %v217
  %v1096 = vunpack.c.l.b16 %v218
  %v1097 = vunpack.c.l.b16 %v219
  %v1098 = vunpack.c.l.b16 %v220
  %v1099 = vunpack.c.l.b16 %v221
  %v1100 = vunpack.c.l.b16 %v222
  %v1101 = vunpack.c.l.b16 %v223
  %v1102 = vunpack.c.l.b16 %v224
  %v1103 = vunpack.c.l.b16 %v225
  %v1104 = vunpack.c.l.b16 %v226
  %v1105 = vunpack.c.l.b16 %v227
  %v1106 = vunpack.c.l.b16 %v228
  %v1107 = vunpack.c.l.b16 %v229
  %v1108 = vunpack.c.l.b16 %v230
  %v1109 = vunpack.c.l.b16 %v231
  %v1110 = vunpack.c.l.b16 %v232
  %v1111 = vunpack.c.l.b16 %v233
  %v1112 = vunpack.c.l.b16 %v234
  %v1113 = vunpack.c.l.b16 %v235
  %v1114 = vunpack.c.l.b16 %v236
  %v1115 = vunpack.c.l.b16 %v237
  %v1116 = vunpack.c.l.b16 %v238
  %v1117 = vunpack.c.l.b16 %v239
  %v1118 = vunpack.c.l.b16 %v240
  %v1119 = vunpack.c.l.b16 %v241
  %v1120 = vunpack.c.l.b16 %v242
  %v1121 = vunpack.c.l.b16 %v243
  %v1122 = vunpack.c.l.b16 %v244
  %v1123 = vunpack.c.l.b16 %v245
  %v1124 = vunpack.c.l.b16 %v246
  %v1125 = vunpack.c.l.b16 %v247
  %v1126 = vunpack.c.l.b16 %v248
  %v1127 = vunpack.c.l.b16 %v249
  %v1128 = vunpack.c.l.b16 %v250
  %v1129 = vunpack.c.l.b16 %v251
  %v1130 = vunpack.c.l.b16 %v252
  %v1131 = vunpack.c.l.b16 %v253
  %v1132 = vunpack.c.l.b16 %v254
  %v1133 = vunpack.c.l.b16 %v255
  %v1134 = vunpack.c.l.b16 %v256
  %v1135 = vunpack.c.l.b16 %v257
  %v1136 = vunpack.c.l.b16 %v258
  %v1137 = vunpack.c.l.b16 %v259
  %v1138 = vunpack.c.l.b16 %v260
  %v1139 = vunpack.c.l.b16 %v261
  %v1140 = vunpack.c.l.b16 %v262
  %v1141 = vunpack.c.l.b16 %v263
  %v1142 = vunpack.c.l.b16 %v264
  %v1143 = vunpack.c.l.b16 %v265
  %v1144 = vunpack.c.l.b16 %v266
  %v1145 = vunpack.c.l.b16 %v267
  %v1146 = vunpack.c.l.b16 %v268
  %v1147 = vunpack.c.l.b16 %v269
  %v1148 = vunpack.c.l.b16 %v270
  %v1149 = vunpack.c.l.b16 %v271
  %v1150 = vunpack.c.l.b16 %v272
  %v1151 = vunpack.c.l.b16 %v273
  %v1152 = vunpack.c.l.b16 %v274
  %v1153 = vunpack.c.l.b16 %v275
  %v1154 = vunpack.c.l.b16 %v276
  %v1155 = vunpack.c.l.b16 %v277
  %v1156 = vunpack.c.l.b16 %v278
  %v1157 = vunpack.c.l.b16 %v279
  %v1158 = vunpack.c.l.b16 %v280
  %v1159 = vunpack.c.l.b16 %v281
  %v1160 = vunpack.c.l.b16 %v282
  %v1161 = vunpack.c.l.b16 %v283
  %v1162 = vunpack.c.l.b16 %v284
  %v1163 = vunpack.c.l.b16 %v285
  %v1164 = vunpack.c.l.b16 %v286
  %v1165 = vunpack.c.l.b16 %v287
  %v1166 = vunpack.c.l.b16 %v288
  %v1167 = vunpack.c.l.b16 %v289
  %v1168 = vunpack.c.l.b16 %v290
  %v1169 = vunpack.c.l.b16 %v291
  %v1170 = vunpack.c.l.b16 %v292
  %v1171 = vunpack.c.l.b16 %v293
  %v1172 = vunpack.c.l.b16 %v294
  %v1173 = vunpack.c.l.b16 %v295
  %v1174 = vunpack.c.l.b16 %v296
  %v1175 = vunpack.c.l.b16 %v297
  %v1176 = vunpack.c.l.b16 %v298
  %v1177 = vunpack.c.l.b16 %v299
  %v1178 = vunpack.c.l.b16 %v300
  %v1179 = vunpack.c.l.b16 %v301
  %v1180 = vunpack.c.l.b16 %v302
  %v1181 = vunpack.c.l.b16 %v303
  %v1182 = vunpack.c.l.b16 %v304
  %v1183 = vunpack.c.l.b16 %v305
  %v1184 = vunpack.c.l.b16 %v306
  %v1185 = vunpack.c.l.b16 %v307
  %v1186 = vunpack.c.l.b16 %v308
  %v1187 = vunpack.c.l.b16 %v309
  %v1188 = vunpack.c.l.b16 %v310
  %v1189 = vunpack.c.l.b16 %v311
  %v1190 = vunpack.c.l.b16 %v312
  %v1191 = vunpack.c.l.b16 %v313
  %v1192 = vunpack.c.l.b16 %v314
  %v1193 = vunpack.c.l.b16 %v315
  %v1194 = vunpack.c.l.b16 %v316
  %v1195 = vunpack.c.l.b16 %v317
  %v1196 = vunpack.c.l.b16 %v318
  %v1197 = vunpack.c.l.b16 %v319
  %v1198 = vunpack.c.l.b16 %v320
  %v1199 = vunpack.c.l.b16 %v321
  %v1200 = vunpack.c.l.b16 %v322
  %v1201 = vunpack.c.l.b16 %v323
  %v1202 = vunpack.c.l.b16 %v324
  %v1203 = vunpack.c.l.b16 %v325
  %v1204 = vunpack.c.l.b16 %v326
  %v1205 = vunpack.c.l.b16 %v327
  %v1206 = vunpack.c.l.b16 %v328
  %v1207 = vunpack.c.l.b16 %v329
  %v1208 = vunpack.c.l.b16 %v330
  %v1209 = vunpack.c.l.b16 %v331
  %v1210 = vunpack.c.l.b16 %v332
  %v1211 = vunpack.c.l.b16 %v333
  %v1212 = vunpack.c.l.b16 %v334
  %v1213 = vunpack.c.l.b16 %v335
  %v1214 = vunpack.c.l.b16 %v336
  %v1215 = vunpack.c.l.b16 %v337
  %v1216 = vunpack.c.l.b16 %v338
  %v1217 = vunpack.c.l.b16 %v339
  %v1218 = vunpack.c.l.b16 %v340
  %v1219 = vunpack.c.l.b16 %v341
  %v1220 = vunpack.c.l.b16 %v342
  %v1221 = vunpack.c.l.b16 %v343
  %v1222 = vunpack.c.l.b16 %v344
  %v1223 = vunpack.c.l.b16 %v345
  %v1224 = vunpack.c.l.b16 %v346
  %v1225 = vunpack.c.l.b16 %v347
  %v1226 = vunpack.c.l.b16 %v348
  %v1227 = vunpack.c.l.b16 %v349
  %v1228 = vunpack.c.l.b16 %v350
  %v1229 = vunpack.c.l.b16 %v351
  %v1230 = vunpack.c.l.b16 %v352
  %v1231 = vunpack.c.l.b16 %v353
  %v1232 = vunpack.c.l.b16 %v354
  %v1233 = vunpack.c.l.b16 %v355
  %v1234 = vunpack.c.l.b16 %v356
  %v1235 = vunpack.c.l.b16 %v357
  %v1236 = vunpack.c.l.b16 %v358
  %v1237 = vunpack.c.l.b16 %v359
  %v1238 = vunpack.c.l.b16 %v360
  %v1239 = vunpack.c.l.b16 %v361
  %v1240 = vunpack.c.l.b16 %v362
  %v1241 = vunpack.c.l.b16 %v363
  %v1242 = vunpack.c.l.b16 %v364
  %v1243 = vunpack.c.l.b16 %v365
  %v1244 = vunpack.c.l.b16 %v366
  %v1245 = vunpack.c.l.b16 %v367
  %v1246 = vunpack.c.l.b16 %v368
  %v1247 = vunpack.c.l.b16 %v369
  %v1248 = vunpack.c.l.b16 %v370
  %v1249 = vunpack.c.l.b16 %v371
  %v1250 = vunpack.c.l.b16 %v372
  %v1251 = vunpack.c.l.b16 %v373
  %v1252 = vunpack.c.l.b16 %v374
  %v1253 = vunpack.c.l.b16 %v375
  %v1254 = vunpack.c.l.b16 %v376
  %v1255 = vunpack.c.l.b16 %v377
  %v1256 = vunpack.c.l.b16 %v378
  %v1257 = vunpack.c.l.b16 %v379
  %v1258 = vunpack.c.l.b16 %v380
  %v1259 = vunpack.c.l.b16 %v381
  %v1260 = vunpack.c.l.b16 %v382
  %v1261 = vunpack.c.l.b16 %v383
  %v1262 = vunpack.c.l.b16 %v384
  %v1263 = vunpack.c.l.b16 %v385
  %v1264 = vunpack.c.l.b16 %v386
  %v1265 = vunpack.c.l.b16 %v387
  %v1266 = vunpack.c.l.b16 %v388
  %v1267 = vunpack.c.l.b16 %v389
  %v1268 = vunpack.c.l.b16 %v390
  %v1269 = vunpack.c.l.b16 %v391
  %v1270 = vunpack.c.l.b16 %v392
  %v1271 = vunpack.c.l.b16 %v393
  %v1272 = vunpack.c.l.b16 %v394
  %v1273 = vunpack.c.l.b16 %v395
  %v1274 = vunpack.c.l.b16 %v396
  %v1275 = vunpack.c.l.b16 %v397
  %v1276 = vunpack.c.l.b16 %v398
  %v1277 = vunpack.c.l.b16 %v399
  %v1278 = vunpack.c.l.b16 %v400
  %v1279 = vunpack.c.l.b16 %v401
  %v1280 = vunpack.c.l.b16 %v402
  %v1281 = vunpack.c.l.b16 %v403
  %v1282 = vunpack.c.l.b16 %v404
  %v1283 = vunpack.c.l.b16 %v405
  %v1284 = vunpack.c.l.b16 %v406
  %v1285 = vunpack.c.l.b16 %v407
  %v1286 = vunpack.c.l.b16 %v408
  %v1287 = vunpack.c.l.b16 %v409
  %v1288 = vunpack.c.l.b16 %v410
  %v1289 = vunpack.c.l.b16 %v411
  %v1290 = vunpack.c.l.b16 %v412
  %v1291 = vunpack.c.l.b16 %v413
  %v1292 = vunpack.c.l.b16 %v414
  %v1293 = vunpack.c.l.b16 %v415
  %v1294 = vunpack.c.l.b16 %v416
  %v1295 = vunpack.c.l.b16 %v417
  %v1296 = vunpack.c.l.b16 %v418
  %v1297 = vunpack.c.l.b16 %v419
  %v1298 = vpack.c.b16 %v907, %v906
  %v1299 = vpack.c.b16 %v909, %v908
  %v1300 = vpack.c.b16 %v911, %v910
  %v1301 = vpack.c.b16 %v913, %v912
  %v1302 = vpack.c.b16 %v915, %v914
  %v1303 = vpack.c.b16 %v917, %v916
  %v1304 = vpack.c.b16 %v919, %v918
  %v1305 = vpack.c.b16 %v921, %v920
  %v1306 = vpack.c.b16 %v923, %v922
  %v1307 = vpack.c.b16 %v925, %v924
  %v1308 = vpack.c.b16 %v927, %v926
  %v1309 = vpack.c.b16 %v929, %v928
  %v1310 = vpack.c.b16 %v931, %v930
  %v1311 = vpack.c.b16 %v933, %v932
  %v1312 = vpack.c.b16 %v935, %v934
  %v1313 = vpack.c.b16 %v937, %v936
  %v1314 = vpack.c.b16 %v939, %v938
  %v1315 = vpack.c.b16 %v941, %v940
  %v1316 = vpack.c.b16 %v943, %v942
  %v1317 = vpack.c.b16 %v945, %v944
  %v1318 = vpack.c.b16 %v947, %v946
  %v1319 = vpack.c.b16 %v949, %v948
  %v1320 = vpack.c.b16 %v951, %v950
  %v1321 = vpack.c.b16 %v953, %v952
  %v1322 = vpack.c.b16 %v955, %v954
  %v1323 = vpack.c.b16 %v957, %v956
  %v1324 = vpack.c.b16 %v959, %v958
  %v1325 = vpack.c.b16 %v961, %v960
  %v1326 = vpack.c.b16 %v963, %v962
  %v1327 = vpack.c.b16 %v965, %v964
  %v1328 = vpack.c.b16 %v967, %v966
  %v1329 = vpack.c.b16 %v969, %v968
  %v1330 = vpack.c.b16 %v971, %v970
  %v1331 = vpack.c.b16 %v973, %v972
  %v1332 = vpack.c.b16 %v975, %v974
  %v1333 = vpack.c.b16 %v977, %v976
  %v1334 = vpack.c.b16 %v979, %v978
  %v1335 = vpack.c.b16 %v981, %v980
  %v1336 = vpack.c.b16 %v983, %v982
  %v1337 = vpack.c.b16 %v985, %v984
  %v1338 = vpack.c.b16 %v987, %v986
  %v1339 = vpack.c.b16 %v989, %v988
  %v1340 = vpack.c.b16 %v991, %v990
  %v1341 = vpack.c.b16 %v993, %v992
  %v1342 = vpack.c.b16 %v995, %v994
  %v1343 = vpack.c.b16 %v997, %v996
  %v1344 = vpack.c.b16 %v999, %v998
  %v1345 = vpack.c.b16 %v1001, %v1000
  %v1346 = vpack.c.b16 %v1003, %v1002
  %v1347 = vpack.c.b16 %v1005, %v1004
  %v1348 = vpack.c.b16 %v1007, %v1006
  %v1349 = vpack.c.b16 %v1009, %v1008
  %v1350 = vpack.c.b16 %v1011, %v1010
  %v1351 = vpack.c.b16 %v1013, %v1012
  %v1352 = vpack.c.b16 %v1015, %v1014
  %v1353 = vpack.c.b16 %v1017, %v1016
  %v1354 = vpack.c.b16 %v1019, %v1018
  %v1355 = vpack.c.b16 %v1021, %v1020
  %v1356 = vpack.c.b16 %v1023, %v1022
  %v1357 = vpack.c.b16 %v1025, %v1024
  %v1358 = vpack.c.b16 %v1027, %v1026
  %v1359 = vpack.c.b16 %v1029, %v1028
  %v1360 = vpack.c.b16 %v1031, %v1030
  %v1361 = vpack.c.b16 %v1033, %v1032
  %v1362 = vpack.c.b16 %v1035, %v1034
  %v1363 = vpack.c.b16 %v1037, %v1036
  %v1364 = vpack.c.b16 %v1039, %v1038
  %v1365 = vpack.c.b16 %v1041, %v1040
  %v1366 = vpack.c.b16 %v1043, %v1042
  %v1367 = vpack.c.b16 %v1045, %v1044
  %v1368 = vpack.c.b16 %v1047, %v1046
  %v1369 = vpack.c.b16 %v1049, %v1048
  %v1370 = vpack.c.b16 %v1051, %v1050
  %v1371 = vpack.c.b16 %v1053, %v1052
  %v1372 = vpack.c.b16 %v1055, %v1054
  %v1373 = vpack.c.b16 %v1057, %v1056
  %v1374 = vpack.c.b16 %v1059, %v1058
  %v1375 = vpack.c.b16 %v1061, %v1060
  %v1376 = vpack.c.b16 %v1063, %v1062
  %v1377 = vpack.c.b16 %v1065, %v1064
  %v1378 = vpack.c.b16 %v1067, %v1066
  %v1379 = vpack.c.b16 %v1069, %v1068
  %v1380 = vpack.c.b16 %v1071, %v1070
  %v1381 = vpack.c.b16 %v1073, %v1072
  %v1382 = vpack.c.b16 %v1075, %v1074
  %v1383 = vpack.c.b16 %v1077, %v1076
  %v1384 = vpack.c.b16 %v1079, %v1078
  %v1385 = vpack.c.b16 %v1081, %v1080
  %v1386 = vpack.c.b16 %v1083, %v1082
  %v1387 = vpack.c.b16 %v1085, %v1084
  %v1388 = vpack.c.b16 %v1087, %v1086
  %v1389 = vpack.c.b16 %v1089, %v1088
  %v1390 = vpack.c.b16 %v1091, %v1090
  %v1391 = vpack.c.b16 %v1093, %v1092
  %v1392 = vpack.c.b16 %v1095, %v1094
  %v1393 = vpack.c.b16 %v1097, %v1096
  %v1394 = vpack.c.b16 %v1099, %v1098
  %v1395 = vpack.c.b16 %v1101, %v1100
  %v1396 = vpack.c.b16 %v1103, %v1102
  %v1397 = vpack.c.b16 %v1105, %v1104
  %v1398 = vpack.c.b16 %v1107, %v1106
  %v1399 = vpack.c.b16 %v1109, %v1108
  %v1400 = vpack.c.b16 %v1111, %v1110
  %v1401 = vpack.c.b16 %v1113, %v1112
  %v1402 = vpack.c.b16 %v1115, %v1114
  %v1403 = vpack.c.b16 %v1117, %v1116
  %v1404 = vpack.c.b16 %v1119, %v1118
  %v1405 = vpack.c.b16 %v1121, %v1120
  %v1406 = vpack.c.b16 %v1123, %v1122
  %v1407 = vpack.c.b16 %v1125, %v1124
  %v1408 = vpack.c.b16 %v1127, %v1126
  %v1409 = vpack.c.b16 %v1129, %v1128
  %v1410 = vpack.c.b16 %v1131, %v1130
  %v1411 = vpack.c.b16 %v1133, %v1132
  %v1412 = vpack.c.b16 %v1135, %v1134
  %v1413 = vpack.c.b16 %v1137, %v1136
  %v1414 = vpack.c.b16 %v1139, %v1138
  %v1415 = vpack.c.b16 %v1141, %v1140
  %v1416 = vpack.c.b16 %v1143, %v1142
  %v1417 = vpack.c.b16 %v1145, %v1144
  %v1418 = vpack.c.b16 %v1147, %v1146
  %v1419 = vpack.c.b16 %v1149, %v1148
  %v1420 = vpack.c.b16 %v1151, %v1150
  %v1421 = vpack.c.b16 %v1153, %v1152
  %v1422 = vpack.c.b16 %v1155, %v1154
  %v1423 = vpack.c.b16 %v1157, %v1156
  %v1424 = vpack.c.b16 %v1159, %v1158
  %v1425 = vpack.c.b16 %v1161, %v1160
  %v1426 = vpack.c.b16 %v1163, %v1162
  %v1427 = vpack.c.b16 %v1165, %v1164
  %v1428 = vpack.c.b16 %v1167, %v1166
  %v1429 = vpack.c.b16 %v1169, %v1168
  %v1430 = vpack.c.b16 %v1171, %v1170
  %v1431 = vpack.c.b16 %v1173, %v1172
  %v1432 = vpack.c.b16 %v1175, %v1174
  %v1433 = vpack.c.b16 %v1177, %v1176
  %v1434 = vpack.c.b16 %v1179, %v1178
  %v1435 = vpack.c.b16 %v1181, %v1180
  %v1436 = vpack.c.b16 %v1183, %v1182
  %v1437 = vpack.c.b16 %v1185, %v1184
  %v1438 = vpack.c.b16 %v1187, %v1186
  %v1439 = vpack.c.b16 %v1189, %v1188
  %v1440 = vpack.c.b16 %v1191, %v1190
  %v1441 = vpack.c.b16 %v1193, %v1192
  %v1442 = vpack.c.b16 %v1195, %v1194
  %v1443 = vpack.c.b16 %v1197, %v1196
  %v1444 = vpack.c.b16 %v1199, %v1198
  %v1445 = vpack.c.b16 %v1201, %v1200
  %v1446 = vpack.c.b16 %v1203, %v1202
  %v1447 = vpack.c.b16 %v1205, %v1204
  %v1448 = vpack.c.b16 %v1207, %v1206
  %v1449 = vpack.c.b16 %v1209, %v1208
  %v1450 = vpack.c.b16 %v1211, %v1210
  %v1451 = vpack.c.b16 %v1213, %v1212
  %v1452 = vpack.c.b16 %v1215, %v1214
  %v1453 = vpack.c.b16 %v1217, %v1216
  %v1454 = vpack.c.b16 %v1219, %v1218
  %v1455 = vpack.c.b16 %v1221, %v1220
  %v1456 = vpack.c.b16 %v1223, %v1222
  %v1457 = vpack.c.b16 %v1225, %v1224
  %v1458 = vpack.c.b16 %v1227, %v1226
  %v1459 = vpack.c.b16 %v1229, %v1228
  %v1460 = vpack.c.b16 %v1231, %v1230
  %v1461 = vpack.c.b16 %v1233, %v1232
  %v1462 = vpack.c.b16 %v1235, %v1234
  %v1463 = vpack.c.b16 %v1237, %v1236
  %v1464 = vpack.c.b16 %v1239, %v1238
  %v1465 = vpack.c.b16 %v1241, %v1240
  %v1466 = vpack.c.b16 %v1243, %v1242
  %v1467 = vpack.c.b16 %v1245, %v1244
  %v1468 = vpack.c.b16 %v1247, %v1246
  %v1469 = vpack.c.b16 %v1249, %v1248
  %v1470 = vpack.c.b16 %v1251, %v1250
  %v1471 = vpack.c.b16 %v1253, %v1252
  %v1472 = vpack.c.b16 %v1255, %v1254
  %v1473 = vpack.c.b16 %v1257, %v1256
  %v1474 = vpack.c.b16 %v1259, %v1258
  %v1475 = vpack.c.b16 %v1261, %v1260
  %v1476 = vpack.c.b16 %v1263, %v1262
  %v1477 = vpack.c.b16 %v1265, %v1264
  %v1478 = vpack.c.b16 %v1267, %v1266
  %v1479 = vpack.c.b16 %v1269, %v1268
  %v1480 = vpack.c.b16 %v1271, %v1270
  %v1481 = vpack.c.b16 %v1273, %v1272
  %v1482 = vpack.c.b16 %v1275, %v1274
  %v1483 = vpack.c.b16 %v1277, %v1276
  %v1484 = vpack.c.b16 %v1279, %v1278
  %v1485 = vpack.c.b16 %v1281, %v1280
  %v1486 = vpack.c.b16 %v1283, %v1282
  %v1487 = vpack.c.b16 %v1285, %v1284
  %v1488 = vpack.c.b16 %v1287, %v1286
  %v1489 = vpack.c.b16 %v1289, %v1288
  %v1490 = vpack.c.b16 %v1291, %v1290
  %v1491 = vpack.c.b16 %v1293, %v1292
  %v1492 = vpack.c.b16 %v1295, %v1294
  %v1493 = vpack.c.b16 %v1297, %v1296
  %vm1690 = vcmask 523264
  %v1692 = vsel %vm1690, %v489, 0
  %1694 = vmatprep.subr.bf16.mxu0 0
  %1695 = vmatpush1.bf16.msra.mxu0 %v1298
  %1696 = vmatprep.subr.bf16.mxu0 0
  %1697 = vmatpush1.bf16.msra.mxu0 %v1299
  %1698 = vmatprep.subr.bf16.mxu0 0
  %1699 = vmatpush1.bf16.msra.mxu0 %v1300
  %1700 = vmatprep.subr.bf16.mxu0 0
  %1701 = vmatpush1.bf16.msra.mxu0 %v1301
  %1702 = vmatprep.subr.bf16.mxu0 0
  %1703 = vmatpush1.bf16.msra.mxu0 %v1302
  %1704 = vmatprep.subr.bf16.mxu0 0
  %1705 = vmatpush1.bf16.msra.mxu0 %v1303
  %1706 = vmatprep.subr.bf16.mxu0 0
  %1707 = vmatpush1.bf16.msra.mxu0 %v1304
  %1708 = vmatprep.subr.bf16.mxu0 0
  %1709 = vmatpush1.bf16.msra.mxu0 %v1305
  %1710 = vmatprep.subr.bf16.mxu0 0
  %1711 = vmatpush1.bf16.msra.mxu0 %v1306
  %1712 = vmatprep.subr.bf16.mxu0 0
  %1713 = vmatpush1.bf16.msra.mxu0 %v1307
  %1714 = vmatprep.subr.bf16.mxu0 0
  %1715 = vmatpush1.bf16.msra.mxu0 %v1308
  %1716 = vmatprep.subr.bf16.mxu0 0
  %1717 = vmatpush1.bf16.msra.mxu0 %v1309
  %1718 = vmatprep.subr.bf16.mxu0 0
  %1719 = vmatpush1.bf16.msra.mxu0 %v1310
  %1720 = vmatprep.subr.bf16.mxu0 0
  %1721 = vmatpush1.bf16.msra.mxu0 %v1311
  %1722 = vmatprep.subr.bf16.mxu0 0
  %1723 = vmatpush1.bf16.msra.mxu0 %v1312
  %1724 = vmatprep.subr.bf16.mxu0 0
  %1725 = vmatpush1.bf16.msra.mxu0 %v1313
  %1726 = vmatprep.mubr.bf16.mxu0 %v466
  %1727 = vmatmul.mubr.bf16.gmra.mrb[0].mxu0 %v465
  %v1728 = vpop.f32.mrb[0].mxu0
  %v1729 = vadd.f32 %v425, %v1728
  %v1730 = vpop.f32.mrb[0].mxu0
  %v1731 = vpop.f32.mrb[0].mxu0
  %v1732 = vpop.f32.mrb[0].mxu0
  %1733 = vdwg.mxu0
  %1734 = vmatprep.subr.bf16.mxu0 0
  %1735 = vmatpush1.bf16.msra.mxu0 %v1314
  %1736 = vmatprep.subr.bf16.mxu0 0
  %1737 = vmatpush1.bf16.msra.mxu0 %v1315
  %1738 = vmatprep.subr.bf16.mxu0 0
  %1739 = vmatpush1.bf16.msra.mxu0 %v1316
  %1740 = vmatprep.subr.bf16.mxu0 0
  %1741 = vmatpush1.bf16.msra.mxu0 %v1317
  %1742 = vmatprep.subr.bf16.mxu0 0
  %1743 = vmatpush1.bf16.msra.mxu0 %v1318
  %1744 = vmatprep.subr.bf16.mxu0 0
  %1745 = vmatpush1.bf16.msra.mxu0 %v1319
  %1746 = vmatprep.subr.bf16.mxu0 0
  %1747 = vmatpush1.bf16.msra.mxu0 %v1320
  %1748 = vmatprep.subr.bf16.mxu0 0
  %1749 = vmatpush1.bf16.msra.mxu0 %v1321
  %1750 = vmatprep.subr.bf16.mxu0 0
  %1751 = vmatpush1.bf16.msra.mxu0 %v1322
  %1752 = vmatprep.subr.bf16.mxu0 0
  %1753 = vmatpush1.bf16.msra.mxu0 %v1323
  %1754 = vmatprep.subr.bf16.mxu0 0
  %1755 = vmatpush1.bf16.msra.mxu0 %v1324
  %1756 = vmatprep.subr.bf16.mxu0 0
  %1757 = vmatpush1.bf16.msra.mxu0 %v1325
  %1758 = vmatprep.subr.bf16.mxu0 0
  %1759 = vmatpush1.bf16.msra.mxu0 %v1326
  %1760 = vmatprep.subr.bf16.mxu0 0
  %1761 = vmatpush1.bf16.msra.mxu0 %v1327
  %1762 = vmatprep.subr.bf16.mxu0 0
  %1763 = vmatpush1.bf16.msra.mxu0 %v1328
  %1764 = vmatprep.subr.bf16.mxu0 0
  %1765 = vmatpush1.bf16.msra.mxu0 %v1329
  %1766 = vmatprep.mubr.bf16.mxu0 %v468
  %1767 = vmatmul.mubr.bf16.gmra.mrb[0].mxu0 %v467
  %v1768 = vpop.f32.mrb[0].mxu0
  %v1769 = vadd.f32 %v1729, %v1768
  %v1770 = vpop.f32.mrb[0].mxu0
  %v1771 = vpop.f32.mrb[0].mxu0
  %v1772 = vpop.f32.mrb[0].mxu0
  %1773 = vdwg.mxu0
  %1774 = vmatprep.subr.bf16.mxu0 0
  %1775 = vmatpush1.bf16.msra.mxu0 %v1330
  %1776 = vmatprep.subr.bf16.mxu0 0
  %1777 = vmatpush1.bf16.msra.mxu0 %v1331
  %1778 = vmatprep.subr.bf16.mxu0 0
  %1779 = vmatpush1.bf16.msra.mxu0 %v1332
  %1780 = vmatprep.subr.bf16.mxu0 0
  %1781 = vmatpush1.bf16.msra.mxu0 %v1333
  %1782 = vmatprep.subr.bf16.mxu0 0
  %1783 = vmatpush1.bf16.msra.mxu0 %v1334
  %1784 = vmatprep.subr.bf16.mxu0 0
  %1785 = vmatpush1.bf16.msra.mxu0 %v1335
  %1786 = vmatprep.subr.bf16.mxu0 0
  %1787 = vmatpush1.bf16.msra.mxu0 %v1336
  %1788 = vmatprep.subr.bf16.mxu0 0
  %1789 = vmatpush1.bf16.msra.mxu0 %v1337
  %1790 = vmatprep.subr.bf16.mxu0 0
  %1791 = vmatpush1.bf16.msra.mxu0 %v1338
  %1792 = vmatprep.subr.bf16.mxu0 0
  %1793 = vmatpush1.bf16.msra.mxu0 %v1339
  %1794 = vmatprep.subr.bf16.mxu0 0
  %1795 = vmatpush1.bf16.msra.mxu0 %v1340
  %1796 = vmatprep.subr.bf16.mxu0 0
  %1797 = vmatpush1.bf16.msra.mxu0 %v1341
  %1798 = vmatprep.subr.bf16.mxu0 0
  %1799 = vmatpush1.bf16.msra.mxu0 %v1342
  %1800 = vmatprep.subr.bf16.mxu0 0
  %1801 = vmatpush1.bf16.msra.mxu0 %v1343
  %1802 = vmatprep.subr.bf16.mxu0 0
  %1803 = vmatpush1.bf16.msra.mxu0 %v1344
  %1804 = vmatprep.subr.bf16.mxu0 0
  %1805 = vmatpush1.bf16.msra.mxu0 %v1345
  %1806 = vmatprep.mubr.bf16.mxu0 %v470
  %1807 = vmatmul.mubr.bf16.gmra.mrb[0].mxu0 %v469
  %v1808 = vpop.f32.mrb[0].mxu0
  %v1809 = vadd.f32 %v1769, %v1808
  %v1810 = vpop.f32.mrb[0].mxu0
  %v1811 = vpop.f32.mrb[0].mxu0
  %v1812 = vpop.f32.mrb[0].mxu0
  %1813 = vdwg.mxu0
  %1814 = vmatprep.subr.bf16.mxu0 0
  %1815 = vmatpush1.bf16.msra.mxu0 %v1346
  %1816 = vmatprep.subr.bf16.mxu0 0
  %1817 = vmatpush1.bf16.msra.mxu0 %v1347
  %1818 = vmatprep.subr.bf16.mxu0 0
  %1819 = vmatpush1.bf16.msra.mxu0 %v1348
  %1820 = vmatprep.subr.bf16.mxu0 0
  %1821 = vmatpush1.bf16.msra.mxu0 %v1349
  %1822 = vmatprep.subr.bf16.mxu0 0
  %1823 = vmatpush1.bf16.msra.mxu0 %v1350
  %1824 = vmatprep.subr.bf16.mxu0 0
  %1825 = vmatpush1.bf16.msra.mxu0 %v1351
  %1826 = vmatprep.subr.bf16.mxu0 0
  %1827 = vmatpush1.bf16.msra.mxu0 %v1352
  %1828 = vmatprep.subr.bf16.mxu0 0
  %1829 = vmatpush1.bf16.msra.mxu0 %v1353
  %1830 = vmatprep.subr.bf16.mxu0 0
  %1831 = vmatpush1.bf16.msra.mxu0 %v1354
  %1832 = vmatprep.subr.bf16.mxu0 0
  %1833 = vmatpush1.bf16.msra.mxu0 %v1355
  %1834 = vmatprep.subr.bf16.mxu0 0
  %1835 = vmatpush1.bf16.msra.mxu0 %v1356
  %1836 = vmatprep.subr.bf16.mxu0 0
  %1837 = vmatpush1.bf16.msra.mxu0 %v1357
  %1838 = vmatprep.subr.bf16.mxu0 0
  %1839 = vmatpush1.bf16.msra.mxu0 %v1358
  %1840 = vmatprep.subr.bf16.mxu0 0
  %1841 = vmatpush1.bf16.msra.mxu0 %v1359
  %1842 = vmatprep.subr.bf16.mxu0 0
  %1843 = vmatpush1.bf16.msra.mxu0 %v1360
  %1844 = vmatprep.subr.bf16.mxu0 0
  %1845 = vmatpush1.bf16.msra.mxu0 %v1361
  %1846 = vmatprep.mubr.bf16.mxu0 %v472
  %1847 = vmatmul.mubr.bf16.gmra.mrb[0].mxu0 %v471
  %v1848 = vpop.f32.mrb[0].mxu0
  %v1849 = vadd.f32 %v1809, %v1848
  %v1850 = vpop.f32.mrb[0].mxu0
  %v1851 = vpop.f32.mrb[0].mxu0
  %v1852 = vpop.f32.mrb[0].mxu0
  %1853 = vdwg.mxu0
  %1854 = vmatprep.subr.bf16.mxu0 0
  %1855 = vmatpush1.bf16.msra.mxu0 %v1362
  %1856 = vmatprep.subr.bf16.mxu0 0
  %1857 = vmatpush1.bf16.msra.mxu0 %v1363
  %1858 = vmatprep.subr.bf16.mxu0 0
  %1859 = vmatpush1.bf16.msra.mxu0 %v1364
  %1860 = vmatprep.subr.bf16.mxu0 0
  %1861 = vmatpush1.bf16.msra.mxu0 %v1365
  %1862 = vmatprep.subr.bf16.mxu0 0
  %1863 = vmatpush1.bf16.msra.mxu0 %v1366
  %1864 = vmatprep.subr.bf16.mxu0 0
  %1865 = vmatpush1.bf16.msra.mxu0 %v1367
  %1866 = vmatprep.subr.bf16.mxu0 0
  %1867 = vmatpush1.bf16.msra.mxu0 %v1368
  %1868 = vmatprep.subr.bf16.mxu0 0
  %1869 = vmatpush1.bf16.msra.mxu0 %v1369
  %1870 = vmatprep.subr.bf16.mxu0 0
  %1871 = vmatpush1.bf16.msra.mxu0 %v1370
  %1872 = vmatprep.subr.bf16.mxu0 0
  %1873 = vmatpush1.bf16.msra.mxu0 %v1371
  %1874 = vmatprep.subr.bf16.mxu0 0
  %1875 = vmatpush1.bf16.msra.mxu0 %v1372
  %1876 = vmatprep.subr.bf16.mxu0 0
  %1877 = vmatpush1.bf16.msra.mxu0 %v1373
  %1878 = vmatprep.subr.bf16.mxu0 0
  %1879 = vmatpush1.bf16.msra.mxu0 %v1374
  %1880 = vmatprep.subr.bf16.mxu0 0
  %1881 = vmatpush1.bf16.msra.mxu0 %v1375
  %1882 = vmatprep.subr.bf16.mxu0 0
  %1883 = vmatpush1.bf16.msra.mxu0 %v1376
  %1884 = vmatprep.subr.bf16.mxu0 0
  %1885 = vmatpush1.bf16.msra.mxu0 %v1377
  %1886 = vmatprep.mubr.bf16.mxu0 %v474
  %1887 = vmatmul.mubr.bf16.gmra.mrb[0].mxu0 %v473
  %v1888 = vpop.f32.mrb[0].mxu0
  %v1889 = vadd.f32 %v1849, %v1888
  %v1890 = vpop.f32.mrb[0].mxu0
  %v1891 = vpop.f32.mrb[0].mxu0
  %v1892 = vpop.f32.mrb[0].mxu0
  %1893 = vdwg.mxu0
  %1894 = vmatprep.subr.bf16.mxu0 0
  %1895 = vmatpush1.bf16.msra.mxu0 %v1378
  %1896 = vmatprep.subr.bf16.mxu0 0
  %1897 = vmatpush1.bf16.msra.mxu0 %v1379
  %1898 = vmatprep.subr.bf16.mxu0 0
  %1899 = vmatpush1.bf16.msra.mxu0 %v1380
  %1900 = vmatprep.subr.bf16.mxu0 0
  %1901 = vmatpush1.bf16.msra.mxu0 %v1381
  %1902 = vmatprep.subr.bf16.mxu0 0
  %1903 = vmatpush1.bf16.msra.mxu0 %v1382
  %1904 = vmatprep.subr.bf16.mxu0 0
  %1905 = vmatpush1.bf16.msra.mxu0 %v1383
  %1906 = vmatprep.subr.bf16.mxu0 0
  %1907 = vmatpush1.bf16.msra.mxu0 %v1384
  %1908 = vmatprep.subr.bf16.mxu0 0
  %1909 = vmatpush1.bf16.msra.mxu0 %v1385
  %1910 = vmatprep.subr.bf16.mxu0 0
  %1911 = vmatpush1.bf16.msra.mxu0 %v1386
  %1912 = vmatprep.subr.bf16.mxu0 0
  %1913 = vmatpush1.bf16.msra.mxu0 %v1387
  %1914 = vmatprep.subr.bf16.mxu0 0
  %1915 = vmatpush1.bf16.msra.mxu0 %v1388
  %1916 = vmatprep.subr.bf16.mxu0 0
  %1917 = vmatpush1.bf16.msra.mxu0 %v1389
  %1918 = vmatprep.subr.bf16.mxu0 0
  %1919 = vmatpush1.bf16.msra.mxu0 %v1390
  %1920 = vmatprep.subr.bf16.mxu0 0
  %1921 = vmatpush1.bf16.msra.mxu0 %v1391
  %1922 = vmatprep.subr.bf16.mxu0 0
  %1923 = vmatpush1.bf16.msra.mxu0 %v1392
  %1924 = vmatprep.subr.bf16.mxu0 0
  %1925 = vmatpush1.bf16.msra.mxu0 %v1393
  %1926 = vmatprep.mubr.bf16.mxu0 %v476
  %1927 = vmatmul.mubr.bf16.gmra.mrb[0].mxu0 %v475
  %v1928 = vpop.f32.mrb[0].mxu0
  %v1929 = vadd.f32 %v1889, %v1928
  %v1930 = vpop.f32.mrb[0].mxu0
  %v1931 = vpop.f32.mrb[0].mxu0
  %v1932 = vpop.f32.mrb[0].mxu0
  %1933 = vdwg.mxu0
  %1934 = vmatprep.subr.bf16.mxu0 0
  %1935 = vmatpush1.bf16.msra.mxu0 %v1394
  %1936 = vmatprep.subr.bf16.mxu0 0
  %1937 = vmatpush1.bf16.msra.mxu0 %v1395
  %1938 = vmatprep.subr.bf16.mxu0 0
  %1939 = vmatpush1.bf16.msra.mxu0 %v1396
  %1940 = vmatprep.subr.bf16.mxu0 0
  %1941 = vmatpush1.bf16.msra.mxu0 %v1397
  %1942 = vmatprep.subr.bf16.mxu0 0
  %1943 = vmatpush1.bf16.msra.mxu0 %v1398
  %1944 = vmatprep.subr.bf16.mxu0 0
  %1945 = vmatpush1.bf16.msra.mxu0 %v1399
  %1946 = vmatprep.subr.bf16.mxu0 0
  %1947 = vmatpush1.bf16.msra.mxu0 %v1400
  %1948 = vmatprep.subr.bf16.mxu0 0
  %1949 = vmatpush1.bf16.msra.mxu0 %v1401
  %1950 = vmatprep.subr.bf16.mxu0 0
  %1951 = vmatpush1.bf16.msra.mxu0 %v1402
  %1952 = vmatprep.subr.bf16.mxu0 0
  %1953 = vmatpush1.bf16.msra.mxu0 %v1403
  %1954 = vmatprep.subr.bf16.mxu0 0
  %1955 = vmatpush1.bf16.msra.mxu0 %v1404
  %1956 = vmatprep.subr.bf16.mxu0 0
  %1957 = vmatpush1.bf16.msra.mxu0 %v1405
  %1958 = vmatprep.subr.bf16.mxu0 0
  %1959 = vmatpush1.bf16.msra.mxu0 %v1406
  %1960 = vmatprep.subr.bf16.mxu0 0
  %1961 = vmatpush1.bf16.msra.mxu0 %v1407
  %1962 = vmatprep.subr.bf16.mxu0 0
  %1963 = vmatpush1.bf16.msra.mxu0 %v1408
  %1964 = vmatprep.subr.bf16.mxu0 0
  %1965 = vmatpush1.bf16.msra.mxu0 %v1409
  %1966 = vmatprep.mubr.bf16.mxu0 %v478
  %1967 = vmatmul.mubr.bf16.gmra.mrb[0].mxu0 %v477
  %v1968 = vpop.f32.mrb[0].mxu0
  %v1969 = vadd.f32 %v1929, %v1968
  %v1970 = vpop.f32.mrb[0].mxu0
  %v1971 = vpop.f32.mrb[0].mxu0
  %v1972 = vpop.f32.mrb[0].mxu0
  %1973 = vdwg.mxu0
  %1974 = vmatprep.subr.bf16.mxu0 0
  %1975 = vmatpush1.bf16.msra.mxu0 %v1410
  %1976 = vmatprep.subr.bf16.mxu0 0
  %1977 = vmatpush1.bf16.msra.mxu0 %v1411
  %1978 = vmatprep.subr.bf16.mxu0 0
  %1979 = vmatpush1.bf16.msra.mxu0 %v1412
  %1980 = vmatprep.subr.bf16.mxu0 0
  %1981 = vmatpush1.bf16.msra.mxu0 %v1413
  %1982 = vmatprep.subr.bf16.mxu0 0
  %1983 = vmatpush1.bf16.msra.mxu0 %v1414
  %1984 = vmatprep.subr.bf16.mxu0 0
  %1985 = vmatpush1.bf16.msra.mxu0 %v1415
  %1986 = vmatprep.subr.bf16.mxu0 0
  %1987 = vmatpush1.bf16.msra.mxu0 %v1416
  %1988 = vmatprep.subr.bf16.mxu0 0
  %1989 = vmatpush1.bf16.msra.mxu0 %v1417
  %1990 = vmatprep.subr.bf16.mxu0 0
  %1991 = vmatpush1.bf16.msra.mxu0 %v1418
  %1992 = vmatprep.subr.bf16.mxu0 0
  %1993 = vmatpush1.bf16.msra.mxu0 %v1419
  %1994 = vmatprep.subr.bf16.mxu0 0
  %1995 = vmatpush1.bf16.msra.mxu0 %v1420
  %1996 = vmatprep.subr.bf16.mxu0 0
  %1997 = vmatpush1.bf16.msra.mxu0 %v1421
  %1998 = vmatprep.subr.bf16.mxu0 0
  %1999 = vmatpush1.bf16.msra.mxu0 %v1422
  %2000 = vmatprep.subr.bf16.mxu0 0
  %2001 = vmatpush1.bf16.msra.mxu0 %v1423
  %2002 = vmatprep.subr.bf16.mxu0 0
  %2003 = vmatpush1.bf16.msra.mxu0 %v1424
  %2004 = vmatprep.subr.bf16.mxu0 0
  %2005 = vmatpush1.bf16.msra.mxu0 %v1425
  %2006 = vmatprep.mubr.bf16.mxu0 %v480
  %2007 = vmatmul.mubr.bf16.gmra.mrb[0].mxu0 %v479
  %v2008 = vpop.f32.mrb[0].mxu0
  %v2009 = vadd.f32 %v1969, %v2008
  %v2010 = vpop.f32.mrb[0].mxu0
  %v2011 = vpop.f32.mrb[0].mxu0
  %v2012 = vpop.f32.mrb[0].mxu0
  %2013 = vdwg.mxu0
  %2014 = vmatprep.subr.bf16.mxu0 0
  %2015 = vmatpush1.bf16.msra.mxu0 %v1426
  %2016 = vmatprep.subr.bf16.mxu0 0
  %2017 = vmatpush1.bf16.msra.mxu0 %v1427
  %2018 = vmatprep.subr.bf16.mxu0 0
  %2019 = vmatpush1.bf16.msra.mxu0 %v1428
  %2020 = vmatprep.subr.bf16.mxu0 0
  %2021 = vmatpush1.bf16.msra.mxu0 %v1429
  %2022 = vmatprep.subr.bf16.mxu0 0
  %2023 = vmatpush1.bf16.msra.mxu0 %v1430
  %2024 = vmatprep.subr.bf16.mxu0 0
  %2025 = vmatpush1.bf16.msra.mxu0 %v1431
  %2026 = vmatprep.subr.bf16.mxu0 0
  %2027 = vmatpush1.bf16.msra.mxu0 %v1432
  %2028 = vmatprep.subr.bf16.mxu0 0
  %2029 = vmatpush1.bf16.msra.mxu0 %v1433
  %2030 = vmatprep.subr.bf16.mxu0 0
  %2031 = vmatpush1.bf16.msra.mxu0 %v1434
  %2032 = vmatprep.subr.bf16.mxu0 0
  %2033 = vmatpush1.bf16.msra.mxu0 %v1435
  %2034 = vmatprep.subr.bf16.mxu0 0
  %2035 = vmatpush1.bf16.msra.mxu0 %v1436
  %2036 = vmatprep.subr.bf16.mxu0 0
  %2037 = vmatpush1.bf16.msra.mxu0 %v1437
  %2038 = vmatprep.subr.bf16.mxu0 0
  %2039 = vmatpush1.bf16.msra.mxu0 %v1438
  %2040 = vmatprep.subr.bf16.mxu0 0
  %2041 = vmatpush1.bf16.msra.mxu0 %v1439
  %2042 = vmatprep.subr.bf16.mxu0 0
  %2043 = vmatpush1.bf16.msra.mxu0 %v1440
  %2044 = vmatprep.subr.bf16.mxu0 0
  %2045 = vmatpush1.bf16.msra.mxu0 %v1441
  %2046 = vmatprep.mubr.bf16.mxu0 %v482
  %2047 = vmatmul.mubr.bf16.gmra.mrb[0].mxu0 %v481
  %v2048 = vpop.f32.mrb[0].mxu0
  %v2049 = vadd.f32 %v2009, %v2048
  %v2050 = vpop.f32.mrb[0].mxu0
  %v2051 = vpop.f32.mrb[0].mxu0
  %v2052 = vpop.f32.mrb[0].mxu0
  %2053 = vdwg.mxu0
  %2054 = vmatprep.subr.bf16.mxu0 0
  %2055 = vmatpush1.bf16.msra.mxu0 %v1442
  %2056 = vmatprep.subr.bf16.mxu0 0
  %2057 = vmatpush1.bf16.msra.mxu0 %v1443
  %2058 = vmatprep.subr.bf16.mxu0 0
  %2059 = vmatpush1.bf16.msra.mxu0 %v1444
  %2060 = vmatprep.subr.bf16.mxu0 0
  %2061 = vmatpush1.bf16.msra.mxu0 %v1445
  %2062 = vmatprep.subr.bf16.mxu0 0
  %2063 = vmatpush1.bf16.msra.mxu0 %v1446
  %2064 = vmatprep.subr.bf16.mxu0 0
  %2065 = vmatpush1.bf16.msra.mxu0 %v1447
  %2066 = vmatprep.subr.bf16.mxu0 0
  %2067 = vmatpush1.bf16.msra.mxu0 %v1448
  %2068 = vmatprep.subr.bf16.mxu0 0
  %2069 = vmatpush1.bf16.msra.mxu0 %v1449
  %2070 = vmatprep.subr.bf16.mxu0 0
  %2071 = vmatpush1.bf16.msra.mxu0 %v1450
  %2072 = vmatprep.subr.bf16.mxu0 0
  %2073 = vmatpush1.bf16.msra.mxu0 %v1451
  %2074 = vmatprep.subr.bf16.mxu0 0
  %2075 = vmatpush1.bf16.msra.mxu0 %v1452
  %2076 = vmatprep.subr.bf16.mxu0 0
  %2077 = vmatpush1.bf16.msra.mxu0 %v1453
  %2078 = vmatprep.subr.bf16.mxu0 0
  %2079 = vmatpush1.bf16.msra.mxu0 %v1454
  %2080 = vmatprep.subr.bf16.mxu0 0
  %2081 = vmatpush1.bf16.msra.mxu0 %v1455
  %2082 = vmatprep.subr.bf16.mxu0 0
  %2083 = vmatpush1.bf16.msra.mxu0 %v1456
  %2084 = vmatprep.subr.bf16.mxu0 0
  %2085 = vmatpush1.bf16.msra.mxu0 %v1457
  %2086 = vmatprep.mubr.bf16.mxu0 %v484
  %2087 = vmatmul.mubr.bf16.gmra.mrb[0].mxu0 %v483
  %v2088 = vpop.f32.mrb[0].mxu0
  %v2089 = vadd.f32 %v2049, %v2088
  %v2090 = vpop.f32.mrb[0].mxu0
  %v2091 = vpop.f32.mrb[0].mxu0
  %v2092 = vpop.f32.mrb[0].mxu0
  %2093 = vdwg.mxu0
  %2094 = vmatprep.subr.bf16.mxu0 0
  %2095 = vmatpush1.bf16.msra.mxu0 %v1458
  %2096 = vmatprep.subr.bf16.mxu0 0
  %2097 = vmatpush1.bf16.msra.mxu0 %v1459
  %2098 = vmatprep.subr.bf16.mxu0 0
  %2099 = vmatpush1.bf16.msra.mxu0 %v1460
  %2100 = vmatprep.subr.bf16.mxu0 0
  %2101 = vmatpush1.bf16.msra.mxu0 %v1461
  %2102 = vmatprep.subr.bf16.mxu0 0
  %2103 = vmatpush1.bf16.msra.mxu0 %v1462
  %2104 = vmatprep.subr.bf16.mxu0 0
  %2105 = vmatpush1.bf16.msra.mxu0 %v1463
  %2106 = vmatprep.subr.bf16.mxu0 0
  %2107 = vmatpush1.bf16.msra.mxu0 %v1464
  %2108 = vmatprep.subr.bf16.mxu0 0
  %2109 = vmatpush1.bf16.msra.mxu0 %v1465
  %2110 = vmatprep.subr.bf16.mxu0 0
  %2111 = vmatpush1.bf16.msra.mxu0 %v1466
  %2112 = vmatprep.subr.bf16.mxu0 0
  %2113 = vmatpush1.bf16.msra.mxu0 %v1467
  %2114 = vmatprep.subr.bf16.mxu0 0
  %2115 = vmatpush1.bf16.msra.mxu0 %v1468
  %2116 = vmatprep.subr.bf16.mxu0 0
  %2117 = vmatpush1.bf16.msra.mxu0 %v1469
  %2118 = vmatprep.subr.bf16.mxu0 0
  %2119 = vmatpush1.bf16.msra.mxu0 %v1470
  %2120 = vmatprep.subr.bf16.mxu0 0
  %2121 = vmatpush1.bf16.msra.mxu0 %v1471
  %2122 = vmatprep.subr.bf16.mxu0 0
  %2123 = vmatpush1.bf16.msra.mxu0 %v1472
  %2124 = vmatprep.subr.bf16.mxu0 0
  %2125 = vmatpush1.bf16.msra.mxu0 %v1473
  %2126 = vmatprep.mubr.bf16.mxu0 %v486
  %2127 = vmatmul.mubr.bf16.gmra.mrb[0].mxu0 %v485
  %v2128 = vpop.f32.mrb[0].mxu0
  %v2129 = vadd.f32 %v2089, %v2128
  %v2130 = vpop.f32.mrb[0].mxu0
  %v2131 = vpop.f32.mrb[0].mxu0
  %v2132 = vpop.f32.mrb[0].mxu0
  %2133 = vdwg.mxu0
  %2134 = vmatprep.subr.bf16.mxu0 0
  %2135 = vmatpush1.bf16.msra.mxu0 %v1474
  %2136 = vmatprep.subr.bf16.mxu0 0
  %2137 = vmatpush1.bf16.msra.mxu0 %v1475
  %2138 = vmatprep.subr.bf16.mxu0 0
  %2139 = vmatpush1.bf16.msra.mxu0 %v1476
  %2140 = vmatprep.subr.bf16.mxu0 0
  %2141 = vmatpush1.bf16.msra.mxu0 %v1477
  %2142 = vmatprep.subr.bf16.mxu0 0
  %2143 = vmatpush1.bf16.msra.mxu0 %v1478
  %2144 = vmatprep.subr.bf16.mxu0 0
  %2145 = vmatpush1.bf16.msra.mxu0 %v1479
  %2146 = vmatprep.subr.bf16.mxu0 0
  %2147 = vmatpush1.bf16.msra.mxu0 %v1480
  %2148 = vmatprep.subr.bf16.mxu0 0
  %2149 = vmatpush1.bf16.msra.mxu0 %v1481
  %2150 = vmatprep.subr.bf16.mxu0 0
  %2151 = vmatpush1.bf16.msra.mxu0 %v1482
  %2152 = vmatprep.subr.bf16.mxu0 0
  %2153 = vmatpush1.bf16.msra.mxu0 %v1483
  %2154 = vmatprep.subr.bf16.mxu0 0
  %2155 = vmatpush1.bf16.msra.mxu0 %v1484
  %2156 = vmatprep.subr.bf16.mxu0 0
  %2157 = vmatpush1.bf16.msra.mxu0 %v1485
  %2158 = vmatprep.subr.bf16.mxu0 0
  %2159 = vmatpush1.bf16.msra.mxu0 %v1486
  %2160 = vmatprep.subr.bf16.mxu0 0
  %2161 = vmatpush1.bf16.msra.mxu0 %v1487
  %2162 = vmatprep.subr.bf16.mxu0 0
  %2163 = vmatpush1.bf16.msra.mxu0 %v1488
  %2164 = vmatprep.subr.bf16.mxu0 0
  %2165 = vmatpush1.bf16.msra.mxu0 %v1489
  %2166 = vmatprep.mubr.bf16.mxu0 %v488
  %2167 = vmatmul.mubr.bf16.gmra.mrb[0].mxu0 %v487
  %v2168 = vpop.f32.mrb[0].mxu0
  %v2169 = vadd.f32 %v2129, %v2168
  %v2170 = vpop.f32.mrb[0].mxu0
  %v2171 = vpop.f32.mrb[0].mxu0
  %v2172 = vpop.f32.mrb[0].mxu0
  %2173 = vdwg.mxu0
  %2174 = vmatprep.subr.bf16.mxu0 0
  %2175 = vmatpush1.bf16.msra.mxu0 %v1490
  %2176 = vmatprep.subr.bf16.mxu0 0
  %2177 = vmatpush1.bf16.msra.mxu0 %v1491
  %2178 = vmatprep.subr.bf16.mxu0 0
  %2179 = vmatpush1.bf16.msra.mxu0 %v1492
  %2180 = vmatprep.subr.bf16.mxu0 0
  %2181 = vmatpush1.bf16.msra.mxu0 %v1493
  %2182 = vmatprep.subr.bf16.mxu0 0
  %2183 = vmatpush1.bf16.msra.mxu0 0
  %2184 = vmatprep.subr.bf16.mxu0 0
  %2185 = vmatpush1.bf16.msra.mxu0 0
  %2186 = vmatprep.subr.bf16.mxu0 0
  %2187 = vmatpush1.bf16.msra.mxu0 0
  %2188 = vmatprep.subr.bf16.mxu0 0
  %2189 = vmatpush1.bf16.msra.mxu0 0
  %2190 = vmatprep.subr.bf16.mxu0 0
  %2191 = vmatpush1.bf16.msra.mxu0 0
  %2192 = vmatprep.subr.bf16.mxu0 0
  %2193 = vmatpush1.bf16.msra.mxu0 0
  %2194 = vmatprep.subr.bf16.mxu0 0
  %2195 = vmatpush1.bf16.msra.mxu0 0
  %2196 = vmatprep.subr.bf16.mxu0 0
  %2197 = vmatpush1.bf16.msra.mxu0 0
  %2198 = vmatprep.subr.bf16.mxu0 0
  %2199 = vmatpush1.bf16.msra.mxu0 0
  %2200 = vmatprep.subr.bf16.mxu0 0
  %2201 = vmatpush1.bf16.msra.mxu0 0
  %2202 = vmatprep.subr.bf16.mxu0 0
  %2203 = vmatpush1.bf16.msra.mxu0 0
  %2204 = vmatprep.subr.bf16.mxu0 0
  %2205 = vmatpush1.bf16.msra.mxu0 0
  %2206 = vmatprep.mubr.bf16.mxu0 0
  %2207 = vmatmul.mubr.bf16.gmra.mrb[0].mxu0 %v1692
  %v2208 = vpop.f32.mrb[0].mxu0
  %v2209 = vadd.f32 %v2169, %v2208
  %v2210 = vpop.f32.mrb[0].mxu0
  %v2211 = vpop.f32.mrb[0].mxu0
  %v2212 = vpop.f32.mrb[0].mxu0
  %2213 = vdwg.mxu0
  %2214 = vst [vmem:[%s3] sm:$0xff] %v2209
  // Predicated region
  $region14: #{native_cnn_forward.5} parent=0 // pred_check
    _
  $region15: #{native_cnn_forward.5} parent=0 // pred_check_branch
    %2216 = sbr.rel (0) target = $region17
  $region16: #{native_cnn_forward.5} parent=0 // pred_region
    _
  $region17: #{native_cnn_forward.5} parent=0 // pred_fallthru
    _
  // Predicated region
  $region18: #{native_cnn_forward.5} parent=0 // pred_check
    _
  $region19: #{native_cnn_forward.5} parent=0 // pred_check_branch
    %2218 = sbr.rel (0) target = $region21
  $region20: #{native_cnn_forward.5} parent=0 // pred_region
    _
  $region21: #{native_cnn_forward.5} parent=0 // pred_fallthru
    _

</llo_original>
